<compile_context>
chip_gen: v7x
topology: tpu7x:2x2x1
jax: 0.10.0
libtpu: 0.0.40
codegen_flags: <defaults>
</compile_context>

<pallas_src>
import math
import numpy as np
import jax
import jax.numpy as jnp
from jax import lax
from jax.experimental import pallas as pl
from jax.experimental.pallas import tpu as pltpu


# ------------------------------ configuration ------------------------------ #

def _build_layer_cfg(channels, upsample_factors):
    cfg = []
    C, L = channels, 4
    for f in upsample_factors:
        assert f % 2 == 0, "even upsample factors only (matches default config)"
        cfg.append(dict(C_in=C, C_out=C // 2, s=f, pad=f // 2, L_in=L, L_out=L * f))
        C //= 2
        L *= f
    return cfg, C, L          # (per-layer cfg, last channel count, conv-chain length)


# ------------------------ general-ratio interpolation ----------------------- #

def _interp_general(wave2d, L_out, tile=256):
    """F.interpolate(mode='linear', align_corners=False) from (B, L_in) to
    (B, L_out) for arbitrary ratios.  Tiled over L_out; the (L_in, tile)
    triangular weight block is generated in-kernel from iotas, so no dense
    interpolation matrix ever exists in HBM or VMEM."""
    B, L_in = wave2d.shape
    scale = L_in / L_out
    nb = -(-L_out // tile)

    def kern(x_ref, o_ref):
        j0 = pl.program_id(0) * tile
        col = lax.broadcasted_iota(jnp.int32, (L_in, tile), 1) + j0
        src = (col.astype(jnp.float32) + 0.5) * scale - 0.5
        src = jnp.clip(src, 0.0, float(L_in - 1))
        row = lax.broadcasted_iota(jnp.int32, (L_in, tile), 0).astype(jnp.float32)
        w = jnp.maximum(0.0, 1.0 - jnp.abs(row - src))        # 2-tap lerp weights
        o_ref[...] = jnp.dot(x_ref[...], w, preferred_element_type=jnp.float32)

    y = pl.pallas_call(
        kern,
        out_shape=jax.ShapeDtypeStruct((B, nb * tile), jnp.float32),
        grid=(nb,),
        in_specs=[pl.BlockSpec((B, L_in), lambda j: (0, 0))],
        out_specs=pl.BlockSpec((B, tile), lambda j: (0, j)),
        compiler_params=pltpu.CompilerParams(dimension_semantics=("parallel",)),
    )(wave2d)
    return y[:, :L_out]


# ------------------------------ fused decoder ------------------------------- #

def waveform_decoder_forward(params, z, channels, upsample_factors, output_samples):
    """Fused Pallas forward. z: (B, latent_dim). Returns (B, 1, output_samples)."""
    B, D = z.shape
    cfg, C_last, L_conv = _build_layer_cfg(channels, upsample_factors)
    n_layers = len(cfg)

    # static interpolation mode
    if output_samples == L_conv:
        mode, R = "none", 1
        out_sds = jax.ShapeDtypeStruct((B, L_conv), jnp.float32)
    elif output_samples % L_conv == 0:
        mode, R = "phase", output_samples // L_conv
        out_sds = jax.ShapeDtypeStruct((B, R, L_conv), jnp.float32)
    else:
        mode, R = "general", 1
        out_sds = jax.ShapeDtypeStruct((B, L_conv), jnp.float32)

    # ---- host-side (one-time, tiny) weight re-layouts ---------------------- #
    C = channels
    # permute Linear columns so the kernel output is already time-major (B, 4, C)
    lw = params["lin_w"].reshape(D, C, 4).transpose(0, 2, 1).reshape(D, 4 * C)
    lb = params["lin_b"].reshape(C, 4).transpose(1, 0).reshape(1, 4 * C)
    args = [z, lw, lb]
    for li, lc in enumerate(cfg):
        w = params[f"ct{li}_w"]                       # (C_in, C_out, 2s) PyTorch
        s, C_in, C_out = lc["s"], lc["C_in"], lc["C_out"]
        # tap-phase-major flattening: column index = ph*C_out + c_out
        wlo = w[:, :, :s].transpose(0, 2, 1).reshape(C_in, s * C_out)   # taps [0,s)
        whi = w[:, :, s:].transpose(0, 2, 1).reshape(C_in, s * C_out)   # taps [s,2s)
        bt = jnp.tile(params[f"ct{li}_b"], (s,)).reshape(1, s * C_out)  # bias per phase
        args += [wlo, whi, bt,
                 params[f"bn{li}_g"].reshape(1, C_out),
                 params[f"bn{li}_b"].reshape(1, C_out)]
    fcw = params["fc_w"].transpose(2, 0, 1)           # (7, 1, C_last)
    fcb = params["fc_b"].reshape(1, 1)
    args += [fcw, fcb]

    # ---- VMEM scratch: one un-cropped interleave buffer per convT layer ---- #
    scratch = [pltpu.VMEM((B, lc["L_in"] + 1, lc["s"], lc["C_out"]), jnp.float32)
               for lc in cfg]

    def kernel(*refs):
        it = iter(refs)
        z_ref, lw_ref, lb_ref = next(it), next(it), next(it)
        layer_refs = [tuple(next(it) for _ in range(5)) for _ in range(n_layers)]
        fcw_ref, fcb_ref = next(it), next(it)
        out_ref = next(it)
        y_scr = [next(it) for _ in range(n_layers)]

        # initial projection -> time-major (B, 4, channels)
        x_lin = (jnp.dot(z_ref[...], lw_ref[...],
                         preferred_element_type=jnp.float32) + lb_ref[...])
        x_tm = jnp.concatenate(
            [x_lin[:, t * channels:(t + 1) * channels].reshape(B, 1, channels)
             for t in range(4)], axis=1)                       # (B, 4, channels)

        for li, lc in enumerate(cfg):
            C_in, C_out = lc["C_in"], lc["C_out"]
            s, pad = lc["s"], lc["pad"]
            L_in, L_out = lc["L_in"], lc["L_out"]
            wlo_ref, whi_ref, bt_ref, gam_ref, bet_ref = layer_refs[li]
            scr = y_scr[li]                                    # (B, L_in+1, s, C_out)

            # ConvTranspose1d: un-cropped output block j (times j*s .. j*s+s)
            #   = x[j] @ taps[0:s]  +  x[j-1] @ taps[s:2s]   (x[-1] = x[L_in] = 0).
            # Zero-pad the time axis by one row on each side and run two dense
            # MXU matmuls over B*(L_in+1) rows -> no shifted read-modify-write.
            zrow = jnp.zeros((B, 1, C_in), jnp.float32)
            x_cur = jnp.concatenate([x_tm, zrow], axis=1).reshape(B * (L_in + 1), C_in)
            x_prv = jnp.concatenate([zrow, x_tm], axis=1).reshape(B * (L_in + 1), C_in)
            m = (jnp.dot(x_cur, wlo_ref[...], preferred_element_type=jnp.float32)
                 + jnp.dot(x_prv, whi_ref[...], preferred_element_type=jnp.float32)
                 + bt_ref[...])                                # (B*(L_in+1), s*C_out)
            # bias + LeakyReLU(0.2) in the wide lane-dense layout
            m = jnp.where(m >= 0.0, m, 0.2 * m)

            # lane -> time interleave: one bulk store per tap phase
            for ph in range(s):
                scr[:, :, ph:ph + 1, :] = m[:, ph * C_out:(ph + 1) * C_out
                                            ].reshape(B, L_in + 1, 1, C_out)

            # crop the conv-transpose padding
            y = scr[...].reshape(B, (L_in + 1) * s, C_out)[:, pad:pad + L_out, :]

            # training-mode BatchNorm1d (single pass, biased variance, eps=1e-5)
            n = float(B * L_out)
            s1 = jnp.sum(jnp.sum(y, axis=1, keepdims=True), axis=0, keepdims=True)
            s2 = jnp.sum(jnp.sum(y * y, axis=1, keepdims=True), axis=0,
                         keepdims=True)
            mean = s1 * (1.0 / n)
            var = s2 * (1.0 / n) - mean * mean
            inv = lax.rsqrt(var + 1e-5)
            x_tm = (y - mean) * (inv * gam_ref[...]) + bet_ref[...]

        # final Conv1d(C_last, 1, k=7, pad=3) + tanh, lane-dense (B, L) output
        zpad = jnp.zeros((B, 3, C_last), jnp.float32)
        xp = jnp.concatenate([zpad, x_tm, zpad], axis=1)       # (B, L_conv+6, C_last)
        acc = jnp.zeros((B, L_conv), jnp.float32) + fcb_ref[...]
        for k in range(7):
            acc = acc + jnp.sum(xp[:, k:k + L_conv, :] * fcw_ref[k], axis=-1)
        wave = jnp.tanh(acc)                                   # (B, L_conv)

        if mode == "phase":
            # fused F.interpolate (linear, align_corners=False) for integer
            # ratios: per output phase it is a 2-tap lerp between wave and its
            # edge-clamped +/-1 neighbour.
            xprev = jnp.concatenate([wave[:, :1], wave[:, :L_conv - 1]], axis=1)
            xnext = jnp.concatenate([wave[:, 1:], wave[:, L_conv - 1:]], axis=1)
            for q in range(R):
                d = (q + 0.5) / R - 0.5
                if d >= 0.0:
                    col = (1.0 - d) * wave + d * xnext
                else:
                    col = (-d) * xprev + (1.0 + d) * wave
                out_ref[:, q:q + 1, :] = col.reshape(B, 1, L_conv)
        else:
            out_ref[...] = wave

    # TODO(synk): single-core kernel (no grid); sharding over v7x's two
    # TensorCores would need a cross-core reduction for the batch-stats BN.
    out = pl.pallas_call(
        kernel,
        out_shape=out_sds,
        scratch_shapes=scratch,
    )(*args)

    if mode == "none":
        return out.reshape(B, 1, L_conv)
    if mode == "phase":
        # (B, R, L) -> (B, 1, L*R): tiny final-output relayout done in XLA.
        return jnp.transpose(out, (0, 2, 1)).reshape(B, 1, output_samples)
    return _interp_general(out, output_samples).reshape(B, 1, output_samples)


# --------------------------------- params ----------------------------------- #

def init_params(key, latent_dim, channels, upsample_factors):
    keys = iter(jax.random.split(key, 8 + 4 * len(upsample_factors)))
    params = {}
    params["lin_w"] = 0.1 * jax.random.normal(next(keys), (latent_dim, 4 * channels),
                                              jnp.float32)
    params["lin_b"] = 0.1 * jax.random.normal(next(keys), (4 * channels,), jnp.float32)
    c = channels
    for li, f in enumerate(upsample_factors):
        c_out = c // 2
        params[f"ct{li}_w"] = 0.1 * jax.random.normal(next(keys), (c, c_out, 2 * f),
                                                      jnp.float32)
        params[f"ct{li}_b"] = 0.1 * jax.random.normal(next(keys), (c_out,), jnp.float32)
        params[f"bn{li}_g"] = 1.0 + 0.1 * jax.random.normal(next(keys), (c_out,),
                                                            jnp.float32)
        params[f"bn{li}_b"] = 0.1 * jax.random.normal(next(keys), (c_out,), jnp.float32)
        c = c_out
    params["fc_w"] = 0.1 * jax.random.normal(next(keys), (1, c, 7), jnp.float32)
    params["fc_b"] = 0.1 * jax.random.normal(next(keys), (1,), jnp.float32)
    return params


# -------------------------------- reference --------------------------------- #

def reference_forward(params, z, channels, upsample_factors, output_samples):
    p = {k: np.asarray(v, np.float32) for k, v in params.items()}
    z = np.asarray(z, np.float32)
    B = z.shape[0]
    x = z @ p["lin_w"] + p["lin_b"]
    x = x.reshape(B, channels, 4)
    for li, f in enumerate(upsample_factors):
        w, b = p[f"ct{li}_w"], p[f"ct{li}_b"]
        gamma, beta = p[f"bn{li}_g"], p[f"bn{li}_b"]
        C_in, C_out, K = w.shape
        s, pad = f, f // 2
        L = x.shape[2]
        L_out = L * s
        y = np.zeros((B, C_out, L_out), np.float32)
        for bi in range(B):
            for i in range(L):
                for t in range(K):
                    o = i * s + t - pad
                    if 0 <= o < L_out:
                        y[bi, :, o] += x[bi, :, i] @ w[:, :, t]
        y = y + b[None, :, None]
        y = np.where(y >= 0, y, 0.2 * y)
        mean = y.mean(axis=(0, 2), keepdims=True)
        var = ((y - mean) ** 2).mean(axis=(0, 2), keepdims=True)
        x = (y - mean) / np.sqrt(var + 1e-5) * gamma[None, :, None] + beta[None, :, None]
    w, b = p["fc_w"], p["fc_b"]
    L = x.shape[2]
    xp = np.pad(x, ((0, 0), (0, 0), (3, 3)))
    out = np.zeros((B, 1, L), np.float32)
    for o in range(L):
        out[:, 0, o] = np.einsum("bck,ck->b", xp[:, :, o:o + 7], w[0]) + b[0]
    out = np.tanh(out)
    if L != output_samples:
        scale = L / output_samples
        res = np.zeros((B, 1, output_samples), np.float32)
        for j in range(output_samples):
            src = scale * (j + 0.5) - 0.5
            if src < 0:
                src = 0.0
            i0 = int(math.floor(src))
            lam = src - i0
            i1 = i0 + 1 if i0 < L - 1 else i0
            res[:, :, j] = (1 - lam) * out[:, :, i0] + lam * out[:, :, i1]
        out = res
    return out


# ---------------------------------- main ------------------------------------ #

if __name__ == "__main__":
    key = jax.random.PRNGKey(0)
    B = 2
    latent_dim = 16
    channels = 16                 # scaled-down from 128
    upsample_factors = (4, 2)     # scaled-down from [8, 8, 4, 2]
    output_samples = 64           # conv chain yields 4*4*2 = 32 -> fused lerp (R=2)

    params = init_params(key, latent_dim, channels, upsample_factors)
    z = jax.random.normal(jax.random.fold_in(key, 123), (B, latent_dim), jnp.float32)

    out = waveform_decoder_forward(params, z, channels, upsample_factors,
                                   output_samples)
    out = jax.block_until_ready(out)
    assert out.shape == (B, 1, output_samples), out.shape
    ref = reference_forward(params, z, channels, upsample_factors, output_samples)
    np.testing.assert_allclose(np.asarray(out), ref, atol=2e-2, rtol=2e-2)

    # also exercise the general (non-integer ratio) interpolation kernel
    out2 = waveform_decoder_forward(params, z, channels, upsample_factors, 52)
    out2 = jax.block_until_ready(out2)
    assert out2.shape == (B, 1, 52), out2.shape
    ref2 = reference_forward(params, z, channels, upsample_factors, 52)
    np.testing.assert_allclose(np.asarray(out2), ref2, atol=2e-2, rtol=2e-2)

    print("KERNEL_OK")
</pallas_src>

<mosaic_0001>
module attributes {stable_mosaic.version = 11 : i64} {
  func.func @kernel(%arg0: memref<2x16xf32, #tpu.memory_space<vmem>>, %arg1: memref<16x64xf32, #tpu.memory_space<vmem>>, %arg2: memref<1x64xf32, #tpu.memory_space<vmem>>, %arg3: memref<16x32xf32, #tpu.memory_space<vmem>>, %arg4: memref<16x32xf32, #tpu.memory_space<vmem>>, %arg5: memref<1x32xf32, #tpu.memory_space<vmem>>, %arg6: memref<1x8xf32, #tpu.memory_space<vmem>>, %arg7: memref<1x8xf32, #tpu.memory_space<vmem>>, %arg8: memref<8x8xf32, #tpu.memory_space<vmem>>, %arg9: memref<8x8xf32, #tpu.memory_space<vmem>>, %arg10: memref<1x8xf32, #tpu.memory_space<vmem>>, %arg11: memref<1x4xf32, #tpu.memory_space<vmem>>, %arg12: memref<1x4xf32, #tpu.memory_space<vmem>>, %arg13: memref<7x1x4xf32, #tpu.memory_space<vmem>>, %arg14: memref<1x1xf32, #tpu.memory_space<vmem>>, %arg15: memref<2x2x32xf32, #tpu.memory_space<vmem>>, %arg16: memref<2x5x4x8xf32, #tpu.memory_space<vmem>>, %arg17: memref<2x17x2x4xf32, #tpu.memory_space<vmem>>) attributes {dimension_semantics = [], scalar_prefetch = 0 : i64, scratch_operands = 2 : i64, tpu.core_type = #tpu.core_type<tc>} {
    %c0 = arith.constant 0 : index
    %c0_0 = arith.constant 0 : index
    %0 = vector.load %arg0[%c0, %c0_0] : memref<2x16xf32, #tpu.memory_space<vmem>>, vector<2x16xf32>
    %c0_1 = arith.constant 0 : index
    %c0_2 = arith.constant 0 : index
    %1 = vector.load %arg1[%c0_1, %c0_2] : memref<16x64xf32, #tpu.memory_space<vmem>>, vector<16x64xf32>
    %cst = arith.constant dense<0.000000e+00> : vector<2x64xf32>
    %2 = tpu.matmul %0, %1, %cst {dimension_numbers = #tpu.dot_dimension_numbers<[1], [0], [0], [1], [0, 0, 1, 1], [], []>} : vector<2x16xf32>, vector<16x64xf32>, vector<2x64xf32> -> vector<2x64xf32>
    %c0_3 = arith.constant 0 : index
    %c0_4 = arith.constant 0 : index
    %3 = vector.load %arg2[%c0_3, %c0_4] : memref<1x64xf32, #tpu.memory_space<vmem>>, vector<1x64xf32>
    %4 = vector.broadcast %3 : vector<1x64xf32> to vector<2x64xf32>
    %5 = arith.addf %2, %4 : vector<2x64xf32>
    %6 = vector.extract_strided_slice %5 {offsets = [0, 0], sizes = [2, 16], strides = [1, 1]} : vector<2x64xf32> to vector<2x16xf32>
    %7 = vector.shape_cast %6 : vector<2x16xf32> to vector<2x1x16xf32>
    %8 = vector.extract_strided_slice %5 {offsets = [0, 16], sizes = [2, 16], strides = [1, 1]} : vector<2x64xf32> to vector<2x16xf32>
    %9 = vector.shape_cast %8 : vector<2x16xf32> to vector<2x1x16xf32>
    %10 = vector.extract_strided_slice %5 {offsets = [0, 32], sizes = [2, 16], strides = [1, 1]} : vector<2x64xf32> to vector<2x16xf32>
    %11 = vector.shape_cast %10 : vector<2x16xf32> to vector<2x1x16xf32>
    %12 = vector.extract_strided_slice %5 {offsets = [0, 48], sizes = [2, 16], strides = [1, 1]} : vector<2x64xf32> to vector<2x16xf32>
    %13 = vector.shape_cast %12 : vector<2x16xf32> to vector<2x1x16xf32>
    %14 = tpu.concatenate %7, %9, %11, %13 in 1 : vector<2x1x16xf32>, vector<2x1x16xf32>, vector<2x1x16xf32>, vector<2x1x16xf32> -> vector<2x4x16xf32>
    %cst_5 = arith.constant 0.000000e+00 : f32
    %15 = vector.broadcast %cst_5 : f32 to vector<2x1x16xf32>
    %16 = tpu.concatenate %14, %15 in 1 : vector<2x4x16xf32>, vector<2x1x16xf32> -> vector<2x5x16xf32>
    %17 = vector.shape_cast %16 : vector<2x5x16xf32> to vector<10x16xf32>
    %18 = tpu.concatenate %15, %14 in 1 : vector<2x1x16xf32>, vector<2x4x16xf32> -> vector<2x5x16xf32>
    %19 = vector.shape_cast %18 : vector<2x5x16xf32> to vector<10x16xf32>
    %c0_6 = arith.constant 0 : index
    %c0_7 = arith.constant 0 : index
    %20 = vector.load %arg3[%c0_6, %c0_7] : memref<16x32xf32, #tpu.memory_space<vmem>>, vector<16x32xf32>
    %cst_8 = arith.constant dense<0.000000e+00> : vector<10x32xf32>
    %21 = tpu.matmul %17, %20, %cst_8 {dimension_numbers = #tpu.dot_dimension_numbers<[1], [0], [0], [1], [0, 0, 1, 1], [], []>} : vector<10x16xf32>, vector<16x32xf32>, vector<10x32xf32> -> vector<10x32xf32>
    %c0_9 = arith.constant 0 : index
    %c0_10 = arith.constant 0 : index
    %22 = vector.load %arg4[%c0_9, %c0_10] : memref<16x32xf32, #tpu.memory_space<vmem>>, vector<16x32xf32>
    %cst_11 = arith.constant dense<0.000000e+00> : vector<10x32xf32>
    %23 = tpu.matmul %19, %22, %cst_11 {dimension_numbers = #tpu.dot_dimension_numbers<[1], [0], [0], [1], [0, 0, 1, 1], [], []>} : vector<10x16xf32>, vector<16x32xf32>, vector<10x32xf32> -> vector<10x32xf32>
    %24 = arith.addf %21, %23 : vector<10x32xf32>
    %c0_12 = arith.constant 0 : index
    %c0_13 = arith.constant 0 : index
    %25 = vector.load %arg5[%c0_12, %c0_13] : memref<1x32xf32, #tpu.memory_space<vmem>>, vector<1x32xf32>
    %26 = vector.broadcast %25 : vector<1x32xf32> to vector<10x32xf32>
    %27 = arith.addf %24, %26 : vector<10x32xf32>
    %cst_14 = arith.constant 0.000000e+00 : f32
    %28 = vector.broadcast %cst_14 : f32 to vector<10x32xf32>
    %29 = arith.cmpf oge, %27, %28 : vector<10x32xf32>
    %cst_15 = arith.constant 2.000000e-01 : f32
    %30 = vector.broadcast %cst_15 : f32 to vector<10x32xf32>
    %31 = arith.mulf %30, %27 : vector<10x32xf32>
    %32 = arith.select %29, %27, %31 : vector<10x32xi1>, vector<10x32xf32>
    %33 = vector.extract_strided_slice %32 {offsets = [0, 0], sizes = [10, 8], strides = [1, 1]} : vector<10x32xf32> to vector<10x8xf32>
    %34 = vector.shape_cast %33 : vector<10x8xf32> to vector<2x5x1x8xf32>
    %c0_16 = arith.constant 0 : index
    %c0_17 = arith.constant 0 : index
    %c0_18 = arith.constant 0 : index
    %c0_19 = arith.constant 0 : index
    %35 = vector.load %arg16[%c0_16, %c0_17, %c0_18, %c0_19] : memref<2x5x4x8xf32, #tpu.memory_space<vmem>>, vector<2x5x1x8xf32>
    tpu.vector_store %arg16[%c0_16, %c0_17, %c0_18, %c0_19], %34 {strides = array<i32>} : memref<2x5x4x8xf32, #tpu.memory_space<vmem>>, vector<2x5x1x8xf32>,
    %36 = vector.extract_strided_slice %32 {offsets = [0, 8], sizes = [10, 8], strides = [1, 1]} : vector<10x32xf32> to vector<10x8xf32>
    %37 = vector.shape_cast %36 : vector<10x8xf32> to vector<2x5x1x8xf32>
    %c0_20 = arith.constant 0 : index
    %c0_21 = arith.constant 0 : index
    %c1 = arith.constant 1 : index
    %c0_22 = arith.constant 0 : index
    %38 = vector.load %arg16[%c0_20, %c0_21, %c1, %c0_22] : memref<2x5x4x8xf32, #tpu.memory_space<vmem>>, vector<2x5x1x8xf32>
    tpu.vector_store %arg16[%c0_20, %c0_21, %c1, %c0_22], %37 {strides = array<i32>} : memref<2x5x4x8xf32, #tpu.memory_space<vmem>>, vector<2x5x1x8xf32>,
    %39 = vector.extract_strided_slice %32 {offsets = [0, 16], sizes = [10, 8], strides = [1, 1]} : vector<10x32xf32> to vector<10x8xf32>
    %40 = vector.shape_cast %39 : vector<10x8xf32> to vector<2x5x1x8xf32>
    %c0_23 = arith.constant 0 : index
    %c0_24 = arith.constant 0 : index
    %c2 = arith.constant 2 : index
    %c0_25 = arith.constant 0 : index
    %41 = vector.load %arg16[%c0_23, %c0_24, %c2, %c0_25] : memref<2x5x4x8xf32, #tpu.memory_space<vmem>>, vector<2x5x1x8xf32>
    tpu.vector_store %arg16[%c0_23, %c0_24, %c2, %c0_25], %40 {strides = array<i32>} : memref<2x5x4x8xf32, #tpu.memory_space<vmem>>, vector<2x5x1x8xf32>,
    %42 = vector.extract_strided_slice %32 {offsets = [0, 24], sizes = [10, 8], strides = [1, 1]} : vector<10x32xf32> to vector<10x8xf32>
    %43 = vector.shape_cast %42 : vector<10x8xf32> to vector<2x5x1x8xf32>
    %c0_26 = arith.constant 0 : index
    %c0_27 = arith.constant 0 : index
    %c3 = arith.constant 3 : index
    %c0_28 = arith.constant 0 : index
    %44 = vector.load %arg16[%c0_26, %c0_27, %c3, %c0_28] : memref<2x5x4x8xf32, #tpu.memory_space<vmem>>, vector<2x5x1x8xf32>
    tpu.vector_store %arg16[%c0_26, %c0_27, %c3, %c0_28], %43 {strides = array<i32>} : memref<2x5x4x8xf32, #tpu.memory_space<vmem>>, vector<2x5x1x8xf32>,
    %c0_29 = arith.constant 0 : index
    %c0_30 = arith.constant 0 : index
    %c0_31 = arith.constant 0 : index
    %c0_32 = arith.constant 0 : index
    %45 = vector.load %arg16[%c0_29, %c0_30, %c0_31, %c0_32] : memref<2x5x4x8xf32, #tpu.memory_space<vmem>>, vector<2x5x4x8xf32>
    %46 = vector.shape_cast %45 : vector<2x5x4x8xf32> to vector<2x20x8xf32>
    %47 = vector.extract_strided_slice %46 {offsets = [0, 2, 0], sizes = [2, 16, 8], strides = [1, 1, 1]} : vector<2x20x8xf32> to vector<2x16x8xf32>
    %cst_33 = arith.constant dense<0.000000e+00> : vector<2x8xf32>
    %48 = vector.multi_reduction <add>, %47, %cst_33 [1] : vector<2x16x8xf32> to vector<2x8xf32>
    %49 = vector.shape_cast %48 : vector<2x8xf32> to vector<2x1x8xf32>
    %cst_34 = arith.constant dense<0.000000e+00> : vector<1x8xf32>
    %50 = vector.multi_reduction <add>, %49, %cst_34 [0] : vector<2x1x8xf32> to vector<1x8xf32>
    %51 = vector.shape_cast %50 : vector<1x8xf32> to vector<1x1x8xf32>
    %52 = arith.mulf %47, %47 : vector<2x16x8xf32>
    %cst_35 = arith.constant dense<0.000000e+00> : vector<2x8xf32>
    %53 = vector.multi_reduction <add>, %52, %cst_35 [1] : vector<2x16x8xf32> to vector<2x8xf32>
    %54 = vector.shape_cast %53 : vector<2x8xf32> to vector<2x1x8xf32>
    %cst_36 = arith.constant dense<0.000000e+00> : vector<1x8xf32>
    %55 = vector.multi_reduction <add>, %54, %cst_36 [0] : vector<2x1x8xf32> to vector<1x8xf32>
    %56 = vector.shape_cast %55 : vector<1x8xf32> to vector<1x1x8xf32>
    %cst_37 = arith.constant 3.125000e-02 : f32
    %57 = vector.broadcast %cst_37 : f32 to vector<1x1x8xf32>
    %58 = arith.mulf %51, %57 : vector<1x1x8xf32>
    %cst_38 = arith.constant 3.125000e-02 : f32
    %59 = vector.broadcast %cst_38 : f32 to vector<1x1x8xf32>
    %60 = arith.mulf %56, %59 : vector<1x1x8xf32>
    %61 = arith.mulf %58, %58 : vector<1x1x8xf32>
    %62 = arith.subf %60, %61 : vector<1x1x8xf32>
    %cst_39 = arith.constant 9.99999974E-6 : f32
    %63 = vector.broadcast %cst_39 : f32 to vector<1x1x8xf32>
    %64 = arith.addf %62, %63 : vector<1x1x8xf32>
    %65 = math.rsqrt %64 : vector<1x1x8xf32>
    %66 = vector.broadcast %58 : vector<1x1x8xf32> to vector<2x16x8xf32>
    %67 = arith.subf %47, %66 : vector<2x16x8xf32>
    %c0_40 = arith.constant 0 : index
    %c0_41 = arith.constant 0 : index
    %68 = vector.load %arg6[%c0_40, %c0_41] : memref<1x8xf32, #tpu.memory_space<vmem>>, vector<1x8xf32>
    %69 = vector.shape_cast %68 : vector<1x8xf32> to vector<1x1x8xf32>
    %70 = arith.mulf %65, %69 : vector<1x1x8xf32>
    %71 = vector.broadcast %70 : vector<1x1x8xf32> to vector<2x16x8xf32>
    %72 = arith.mulf %67, %71 : vector<2x16x8xf32>
    %c0_42 = arith.constant 0 : index
    %c0_43 = arith.constant 0 : index
    %73 = vector.load %arg7[%c0_42, %c0_43] : memref<1x8xf32, #tpu.memory_space<vmem>>, vector<1x8xf32>
    %74 = vector.shape_cast %73 : vector<1x8xf32> to vector<1x1x8xf32>
    %75 = vector.broadcast %74 : vector<1x1x8xf32> to vector<2x16x8xf32>
    %76 = arith.addf %72, %75 : vector<2x16x8xf32>
    %cst_44 = arith.constant 0.000000e+00 : f32
    %77 = vector.broadcast %cst_44 : f32 to vector<2x1x8xf32>
    %78 = tpu.concatenate %76, %77 in 1 : vector<2x16x8xf32>, vector<2x1x8xf32> -> vector<2x17x8xf32>
    %79 = vector.shape_cast %78 : vector<2x17x8xf32> to vector<34x8xf32>
    %80 = tpu.concatenate %77, %76 in 1 : vector<2x1x8xf32>, vector<2x16x8xf32> -> vector<2x17x8xf32>
    %81 = vector.shape_cast %80 : vector<2x17x8xf32> to vector<34x8xf32>
    %c0_45 = arith.constant 0 : index
    %c0_46 = arith.constant 0 : index
    %82 = vector.load %arg8[%c0_45, %c0_46] : memref<8x8xf32, #tpu.memory_space<vmem>>, vector<8x8xf32>
    %cst_47 = arith.constant dense<0.000000e+00> : vector<34x8xf32>
    %83 = tpu.matmul %79, %82, %cst_47 {dimension_numbers = #tpu.dot_dimension_numbers<[1], [0], [0], [1], [0, 0, 1, 1], [], []>} : vector<34x8xf32>, vector<8x8xf32>, vector<34x8xf32> -> vector<34x8xf32>
    %c0_48 = arith.constant 0 : index
    %c0_49 = arith.constant 0 : index
    %84 = vector.load %arg9[%c0_48, %c0_49] : memref<8x8xf32, #tpu.memory_space<vmem>>, vector<8x8xf32>
    %cst_50 = arith.constant dense<0.000000e+00> : vector<34x8xf32>
    %85 = tpu.matmul %81, %84, %cst_50 {dimension_numbers = #tpu.dot_dimension_numbers<[1], [0], [0], [1], [0, 0, 1, 1], [], []>} : vector<34x8xf32>, vector<8x8xf32>, vector<34x8xf32> -> vector<34x8xf32>
    %86 = arith.addf %83, %85 : vector<34x8xf32>
    %c0_51 = arith.constant 0 : index
    %c0_52 = arith.constant 0 : index
    %87 = vector.load %arg10[%c0_51, %c0_52] : memref<1x8xf32, #tpu.memory_space<vmem>>, vector<1x8xf32>
    %88 = vector.broadcast %87 : vector<1x8xf32> to vector<34x8xf32>
    %89 = arith.addf %86, %88 : vector<34x8xf32>
    %cst_53 = arith.constant 0.000000e+00 : f32
    %90 = vector.broadcast %cst_53 : f32 to vector<34x8xf32>
    %91 = arith.cmpf oge, %89, %90 : vector<34x8xf32>
    %cst_54 = arith.constant 2.000000e-01 : f32
    %92 = vector.broadcast %cst_54 : f32 to vector<34x8xf32>
    %93 = arith.mulf %92, %89 : vector<34x8xf32>
    %94 = arith.select %91, %89, %93 : vector<34x8xi1>, vector<34x8xf32>
    %95 = vector.extract_strided_slice %94 {offsets = [0, 0], sizes = [34, 4], strides = [1, 1]} : vector<34x8xf32> to vector<34x4xf32>
    %96 = vector.shape_cast %95 : vector<34x4xf32> to vector<2x17x1x4xf32>
    %c0_55 = arith.constant 0 : index
    %c0_56 = arith.constant 0 : index
    %c0_57 = arith.constant 0 : index
    %c0_58 = arith.constant 0 : index
    %97 = vector.load %arg17[%c0_55, %c0_56, %c0_57, %c0_58] : memref<2x17x2x4xf32, #tpu.memory_space<vmem>>, vector<2x17x1x4xf32>
    tpu.vector_store %arg17[%c0_55, %c0_56, %c0_57, %c0_58], %96 {strides = array<i32>} : memref<2x17x2x4xf32, #tpu.memory_space<vmem>>, vector<2x17x1x4xf32>,
    %98 = vector.extract_strided_slice %94 {offsets = [0, 4], sizes = [34, 4], strides = [1, 1]} : vector<34x8xf32> to vector<34x4xf32>
    %99 = vector.shape_cast %98 : vector<34x4xf32> to vector<2x17x1x4xf32>
    %c0_59 = arith.constant 0 : index
    %c0_60 = arith.constant 0 : index
    %c1_61 = arith.constant 1 : index
    %c0_62 = arith.constant 0 : index
    %100 = vector.load %arg17[%c0_59, %c0_60, %c1_61, %c0_62] : memref<2x17x2x4xf32, #tpu.memory_space<vmem>>, vector<2x17x1x4xf32>
    tpu.vector_store %arg17[%c0_59, %c0_60, %c1_61, %c0_62], %99 {strides = array<i32>} : memref<2x17x2x4xf32, #tpu.memory_space<vmem>>, vector<2x17x1x4xf32>,
    %c0_63 = arith.constant 0 : index
    %c0_64 = arith.constant 0 : index
    %c0_65 = arith.constant 0 : index
    %c0_66 = arith.constant 0 : index
    %101 = vector.load %arg17[%c0_63, %c0_64, %c0_65, %c0_66] : memref<2x17x2x4xf32, #tpu.memory_space<vmem>>, vector<2x17x2x4xf32>
    %102 = vector.shape_cast %101 : vector<2x17x2x4xf32> to vector<2x34x4xf32>
    %103 = vector.extract_strided_slice %102 {offsets = [0, 1, 0], sizes = [2, 32, 4], strides = [1, 1, 1]} : vector<2x34x4xf32> to vector<2x32x4xf32>
    %cst_67 = arith.constant dense<0.000000e+00> : vector<2x4xf32>
    %104 = vector.multi_reduction <add>, %103, %cst_67 [1] : vector<2x32x4xf32> to vector<2x4xf32>
    %105 = vector.shape_cast %104 : vector<2x4xf32> to vector<2x1x4xf32>
    %cst_68 = arith.constant dense<0.000000e+00> : vector<1x4xf32>
    %106 = vector.multi_reduction <add>, %105, %cst_68 [0] : vector<2x1x4xf32> to vector<1x4xf32>
    %107 = vector.shape_cast %106 : vector<1x4xf32> to vector<1x1x4xf32>
    %108 = arith.mulf %103, %103 : vector<2x32x4xf32>
    %cst_69 = arith.constant dense<0.000000e+00> : vector<2x4xf32>
    %109 = vector.multi_reduction <add>, %108, %cst_69 [1] : vector<2x32x4xf32> to vector<2x4xf32>
    %110 = vector.shape_cast %109 : vector<2x4xf32> to vector<2x1x4xf32>
    %cst_70 = arith.constant dense<0.000000e+00> : vector<1x4xf32>
    %111 = vector.multi_reduction <add>, %110, %cst_70 [0] : vector<2x1x4xf32> to vector<1x4xf32>
    %112 = vector.shape_cast %111 : vector<1x4xf32> to vector<1x1x4xf32>
    %cst_71 = arith.constant 1.562500e-02 : f32
    %113 = vector.broadcast %cst_71 : f32 to vector<1x1x4xf32>
    %114 = arith.mulf %107, %113 : vector<1x1x4xf32>
    %cst_72 = arith.constant 1.562500e-02 : f32
    %115 = vector.broadcast %cst_72 : f32 to vector<1x1x4xf32>
    %116 = arith.mulf %112, %115 : vector<1x1x4xf32>
    %117 = arith.mulf %114, %114 : vector<1x1x4xf32>
    %118 = arith.subf %116, %117 : vector<1x1x4xf32>
    %cst_73 = arith.constant 9.99999974E-6 : f32
    %119 = vector.broadcast %cst_73 : f32 to vector<1x1x4xf32>
    %120 = arith.addf %118, %119 : vector<1x1x4xf32>
    %121 = math.rsqrt %120 : vector<1x1x4xf32>
    %122 = vector.broadcast %114 : vector<1x1x4xf32> to vector<2x32x4xf32>
    %123 = arith.subf %103, %122 : vector<2x32x4xf32>
    %c0_74 = arith.constant 0 : index
    %c0_75 = arith.constant 0 : index
    %124 = vector.load %arg11[%c0_74, %c0_75] : memref<1x4xf32, #tpu.memory_space<vmem>>, vector<1x4xf32>
    %125 = vector.shape_cast %124 : vector<1x4xf32> to vector<1x1x4xf32>
    %126 = arith.mulf %121, %125 : vector<1x1x4xf32>
    %127 = vector.broadcast %126 : vector<1x1x4xf32> to vector<2x32x4xf32>
    %128 = arith.mulf %123, %127 : vector<2x32x4xf32>
    %c0_76 = arith.constant 0 : index
    %c0_77 = arith.constant 0 : index
    %129 = vector.load %arg12[%c0_76, %c0_77] : memref<1x4xf32, #tpu.memory_space<vmem>>, vector<1x4xf32>
    %130 = vector.shape_cast %129 : vector<1x4xf32> to vector<1x1x4xf32>
    %131 = vector.broadcast %130 : vector<1x1x4xf32> to vector<2x32x4xf32>
    %132 = arith.addf %128, %131 : vector<2x32x4xf32>
    %cst_78 = arith.constant 0.000000e+00 : f32
    %133 = vector.broadcast %cst_78 : f32 to vector<2x3x4xf32>
    %134 = tpu.concatenate %133, %132, %133 in 1 : vector<2x3x4xf32>, vector<2x32x4xf32>, vector<2x3x4xf32> -> vector<2x38x4xf32>
    %cst_79 = arith.constant 0.000000e+00 : f32
    %135 = vector.broadcast %cst_79 : f32 to vector<2x32xf32>
    %c0_80 = arith.constant 0 : index
    %c0_81 = arith.constant 0 : index
    %136 = vector.load %arg14[%c0_80, %c0_81] : memref<1x1xf32, #tpu.memory_space<vmem>>, vector<1x1xf32>
    %137 = vector.broadcast %136 : vector<1x1xf32> to vector<2x32xf32>
    %138 = arith.addf %135, %137 : vector<2x32xf32>
    %139 = vector.extract_strided_slice %134 {offsets = [0, 0, 0], sizes = [2, 32, 4], strides = [1, 1, 1]} : vector<2x38x4xf32> to vector<2x32x4xf32>
    %c0_82 = arith.constant 0 : index
    %c0_83 = arith.constant 0 : index
    %c0_84 = arith.constant 0 : index
    %140 = vector.load %arg13[%c0_82, %c0_83, %c0_84] : memref<7x1x4xf32, #tpu.memory_space<vmem>>, vector<1x1x4xf32>
    %141 = vector.shape_cast %140 : vector<1x1x4xf32> to vector<1x4xf32>
    %142 = vector.shape_cast %141 : vector<1x4xf32> to vector<1x1x4xf32>
    %143 = vector.broadcast %142 : vector<1x1x4xf32> to vector<2x32x4xf32>
    %144 = arith.mulf %139, %143 : vector<2x32x4xf32>
    %cst_85 = arith.constant dense<0.000000e+00> : vector<2x32xf32>
    %145 = vector.multi_reduction <add>, %144, %cst_85 [2] : vector<2x32x4xf32> to vector<2x32xf32>
    %146 = arith.addf %138, %145 : vector<2x32xf32>
    %147 = vector.extract_strided_slice %134 {offsets = [0, 1, 0], sizes = [2, 32, 4], strides = [1, 1, 1]} : vector<2x38x4xf32> to vector<2x32x4xf32>
    %c1_86 = arith.constant 1 : index
    %c0_87 = arith.constant 0 : index
    %c0_88 = arith.constant 0 : index
    %148 = vector.load %arg13[%c1_86, %c0_87, %c0_88] : memref<7x1x4xf32, #tpu.memory_space<vmem>>, vector<1x1x4xf32>
    %149 = vector.shape_cast %148 : vector<1x1x4xf32> to vector<1x4xf32>
    %150 = vector.shape_cast %149 : vector<1x4xf32> to vector<1x1x4xf32>
    %151 = vector.broadcast %150 : vector<1x1x4xf32> to vector<2x32x4xf32>
    %152 = arith.mulf %147, %151 : vector<2x32x4xf32>
    %cst_89 = arith.constant dense<0.000000e+00> : vector<2x32xf32>
    %153 = vector.multi_reduction <add>, %152, %cst_89 [2] : vector<2x32x4xf32> to vector<2x32xf32>
    %154 = arith.addf %146, %153 : vector<2x32xf32>
    %155 = vector.extract_strided_slice %134 {offsets = [0, 2, 0], sizes = [2, 32, 4], strides = [1, 1, 1]} : vector<2x38x4xf32> to vector<2x32x4xf32>
    %c2_90 = arith.constant 2 : index
    %c0_91 = arith.constant 0 : index
    %c0_92 = arith.constant 0 : index
    %156 = vector.load %arg13[%c2_90, %c0_91, %c0_92] : memref<7x1x4xf32, #tpu.memory_space<vmem>>, vector<1x1x4xf32>
    %157 = vector.shape_cast %156 : vector<1x1x4xf32> to vector<1x4xf32>
    %158 = vector.shape_cast %157 : vector<1x4xf32> to vector<1x1x4xf32>
    %159 = vector.broadcast %158 : vector<1x1x4xf32> to vector<2x32x4xf32>
    %160 = arith.mulf %155, %159 : vector<2x32x4xf32>
    %cst_93 = arith.constant dense<0.000000e+00> : vector<2x32xf32>
    %161 = vector.multi_reduction <add>, %160, %cst_93 [2] : vector<2x32x4xf32> to vector<2x32xf32>
    %162 = arith.addf %154, %161 : vector<2x32xf32>
    %163 = vector.extract_strided_slice %134 {offsets = [0, 3, 0], sizes = [2, 32, 4], strides = [1, 1, 1]} : vector<2x38x4xf32> to vector<2x32x4xf32>
    %c3_94 = arith.constant 3 : index
    %c0_95 = arith.constant 0 : index
    %c0_96 = arith.constant 0 : index
    %164 = vector.load %arg13[%c3_94, %c0_95, %c0_96] : memref<7x1x4xf32, #tpu.memory_space<vmem>>, vector<1x1x4xf32>
    %165 = vector.shape_cast %164 : vector<1x1x4xf32> to vector<1x4xf32>
    %166 = vector.shape_cast %165 : vector<1x4xf32> to vector<1x1x4xf32>
    %167 = vector.broadcast %166 : vector<1x1x4xf32> to vector<2x32x4xf32>
    %168 = arith.mulf %163, %167 : vector<2x32x4xf32>
    %cst_97 = arith.constant dense<0.000000e+00> : vector<2x32xf32>
    %169 = vector.multi_reduction <add>, %168, %cst_97 [2] : vector<2x32x4xf32> to vector<2x32xf32>
    %170 = arith.addf %162, %169 : vector<2x32xf32>
    %171 = vector.extract_strided_slice %134 {offsets = [0, 4, 0], sizes = [2, 32, 4], strides = [1, 1, 1]} : vector<2x38x4xf32> to vector<2x32x4xf32>
    %c4 = arith.constant 4 : index
    %c0_98 = arith.constant 0 : index
    %c0_99 = arith.constant 0 : index
    %172 = vector.load %arg13[%c4, %c0_98, %c0_99] : memref<7x1x4xf32, #tpu.memory_space<vmem>>, vector<1x1x4xf32>
    %173 = vector.shape_cast %172 : vector<1x1x4xf32> to vector<1x4xf32>
    %174 = vector.shape_cast %173 : vector<1x4xf32> to vector<1x1x4xf32>
    %175 = vector.broadcast %174 : vector<1x1x4xf32> to vector<2x32x4xf32>
    %176 = arith.mulf %171, %175 : vector<2x32x4xf32>
    %cst_100 = arith.constant dense<0.000000e+00> : vector<2x32xf32>
    %177 = vector.multi_reduction <add>, %176, %cst_100 [2] : vector<2x32x4xf32> to vector<2x32xf32>
    %178 = arith.addf %170, %177 : vector<2x32xf32>
    %179 = vector.extract_strided_slice %134 {offsets = [0, 5, 0], sizes = [2, 32, 4], strides = [1, 1, 1]} : vector<2x38x4xf32> to vector<2x32x4xf32>
    %c5 = arith.constant 5 : index
    %c0_101 = arith.constant 0 : index
    %c0_102 = arith.constant 0 : index
    %180 = vector.load %arg13[%c5, %c0_101, %c0_102] : memref<7x1x4xf32, #tpu.memory_space<vmem>>, vector<1x1x4xf32>
    %181 = vector.shape_cast %180 : vector<1x1x4xf32> to vector<1x4xf32>
    %182 = vector.shape_cast %181 : vector<1x4xf32> to vector<1x1x4xf32>
    %183 = vector.broadcast %182 : vector<1x1x4xf32> to vector<2x32x4xf32>
    %184 = arith.mulf %179, %183 : vector<2x32x4xf32>
    %cst_103 = arith.constant dense<0.000000e+00> : vector<2x32xf32>
    %185 = vector.multi_reduction <add>, %184, %cst_103 [2] : vector<2x32x4xf32> to vector<2x32xf32>
    %186 = arith.addf %178, %185 : vector<2x32xf32>
    %187 = vector.extract_strided_slice %134 {offsets = [0, 6, 0], sizes = [2, 32, 4], strides = [1, 1, 1]} : vector<2x38x4xf32> to vector<2x32x4xf32>
    %c6 = arith.constant 6 : index
    %c0_104 = arith.constant 0 : index
    %c0_105 = arith.constant 0 : index
    %188 = vector.load %arg13[%c6, %c0_104, %c0_105] : memref<7x1x4xf32, #tpu.memory_space<vmem>>, vector<1x1x4xf32>
    %189 = vector.shape_cast %188 : vector<1x1x4xf32> to vector<1x4xf32>
    %190 = vector.shape_cast %189 : vector<1x4xf32> to vector<1x1x4xf32>
    %191 = vector.broadcast %190 : vector<1x1x4xf32> to vector<2x32x4xf32>
    %192 = arith.mulf %187, %191 : vector<2x32x4xf32>
    %cst_106 = arith.constant dense<0.000000e+00> : vector<2x32xf32>
    %193 = vector.multi_reduction <add>, %192, %cst_106 [2] : vector<2x32x4xf32> to vector<2x32xf32>
    %194 = arith.addf %186, %193 : vector<2x32xf32>
    %195 = math.tanh %194 : vector<2x32xf32>
    %196 = vector.extract_strided_slice %195 {offsets = [0, 0], sizes = [2, 1], strides = [1, 1]} : vector<2x32xf32> to vector<2x1xf32>
    %197 = vector.extract_strided_slice %195 {offsets = [0, 0], sizes = [2, 31], strides = [1, 1]} : vector<2x32xf32> to vector<2x31xf32>
    %198 = tpu.concatenate %196, %197 in 1 : vector<2x1xf32>, vector<2x31xf32> -> vector<2x32xf32>
    %199 = vector.extract_strided_slice %195 {offsets = [0, 1], sizes = [2, 31], strides = [1, 1]} : vector<2x32xf32> to vector<2x31xf32>
    %200 = vector.extract_strided_slice %195 {offsets = [0, 31], sizes = [2, 1], strides = [1, 1]} : vector<2x32xf32> to vector<2x1xf32>
    %201 = tpu.concatenate %199, %200 in 1 : vector<2x31xf32>, vector<2x1xf32> -> vector<2x32xf32>
    %cst_107 = arith.constant 2.500000e-01 : f32
    %202 = vector.broadcast %cst_107 : f32 to vector<2x32xf32>
    %203 = arith.mulf %202, %198 : vector<2x32xf32>
    %cst_108 = arith.constant 7.500000e-01 : f32
    %204 = vector.broadcast %cst_108 : f32 to vector<2x32xf32>
    %205 = arith.mulf %204, %195 : vector<2x32xf32>
    %206 = arith.addf %203, %205 : vector<2x32xf32>
    %207 = vector.shape_cast %206 : vector<2x32xf32> to vector<2x1x32xf32>
    %c0_109 = arith.constant 0 : index
    %c0_110 = arith.constant 0 : index
    %c0_111 = arith.constant 0 : index
    %208 = vector.load %arg15[%c0_109, %c0_110, %c0_111] : memref<2x2x32xf32, #tpu.memory_space<vmem>>, vector<2x1x32xf32>
    tpu.vector_store %arg15[%c0_109, %c0_110, %c0_111], %207 {strides = array<i32>} : memref<2x2x32xf32, #tpu.memory_space<vmem>>, vector<2x1x32xf32>,
    %cst_112 = arith.constant 7.500000e-01 : f32
    %209 = vector.broadcast %cst_112 : f32 to vector<2x32xf32>
    %210 = arith.mulf %209, %195 : vector<2x32xf32>
    %cst_113 = arith.constant 2.500000e-01 : f32
    %211 = vector.broadcast %cst_113 : f32 to vector<2x32xf32>
    %212 = arith.mulf %211, %201 : vector<2x32xf32>
    %213 = arith.addf %210, %212 : vector<2x32xf32>
    %214 = vector.shape_cast %213 : vector<2x32xf32> to vector<2x1x32xf32>
    %c0_114 = arith.constant 0 : index
    %c1_115 = arith.constant 1 : index
    %c0_116 = arith.constant 0 : index
    %215 = vector.load %arg15[%c0_114, %c1_115, %c0_116] : memref<2x2x32xf32, #tpu.memory_space<vmem>>, vector<2x1x32xf32>
    tpu.vector_store %arg15[%c0_114, %c1_115, %c0_116], %214 {strides = array<i32>} : memref<2x2x32xf32, #tpu.memory_space<vmem>>, vector<2x1x32xf32>,
    return
  }
}

</mosaic_0001>

<llo_original>
// kernel: tpu_custom_call.1
$region0: #{tpu_custom_call.1}
  #allocation0 [shape = 'u32[]', space=smem, size = 0x4, offset = 0x4, fixed_abs, tag = 'smem constant byte address 0x4 - core index']
  #allocation1 [shape = 'u32[144,128]{1,0:T(1,128)}', space=vmem, size = 0x12000, scoped, tag = 'internal scratch']
  #allocation2 [shape = 'f32[2,5,4,8]{3,2,1,0:T(4,128)}', space=vmem, size = 0x5000, scoped, tag = 'scratch operand']
  #allocation3 [shape = 'f32[2,17,2,4]{3,2,1,0:T(2,128)}', space=vmem, size = 0x8800, scoped, tag = 'scratch operand']
  #allocation4 [shape = 'f32[1,1]{1,0:T(1,128)S(1)}', space=vmem, size = 0x200, scoped, tag = 'scoped memory for tpu_custom_call.1']
  %s0 = inlined_call_operand.hbm [shape: f32[2,16], index: 0, kind: input, shape index: {}]
  %s1 = inlined_call_operand.vmem [shape: f32[16,64], index: 1, kind: input, shape index: {}]
  %s2 = inlined_call_operand.vmem [shape: f32[1,64], index: 2, kind: input, shape index: {}]
  %s3 = inlined_call_operand.hbm [shape: f32[16,32], index: 3, kind: input, shape index: {}]
  %s4 = inlined_call_operand.hbm [shape: f32[16,32], index: 4, kind: input, shape index: {}]
  %s5 = inlined_call_operand.hbm [shape: f32[1,32], index: 5, kind: input, shape index: {}]
  %s6 = inlined_call_operand.hbm [shape: f32[1,8], index: 6, kind: input, shape index: {}]
  %s7 = inlined_call_operand.vmem [shape: f32[1,8], index: 7, kind: input, shape index: {}]
  %s8 = inlined_call_operand.vmem [shape: f32[8,8], index: 8, kind: input, shape index: {}]
  %s9 = inlined_call_operand.vmem [shape: f32[8,8], index: 9, kind: input, shape index: {}]
  %s10 = inlined_call_operand.vmem [shape: f32[1,8], index: 10, kind: input, shape index: {}]
  %s11 = inlined_call_operand.vmem [shape: f32[1,4], index: 11, kind: input, shape index: {}]
  %s12 = inlined_call_operand.vmem [shape: f32[1,4], index: 12, kind: input, shape index: {}]
  %s13 = inlined_call_operand.vmem [shape: f32[7,1,4], index: 13, kind: input, shape index: {}]
  %s14 = inlined_call_operand.<no memory space> [shape: f32[1,1], index: 14, kind: input, shape index: {}]
  %s15 = inlined_call_operand.hbm [shape: f32[2,2,32], index: 15, kind: output, shape index: {}]
  %s16 = sld [smem:[#allocation0]]
  $region90: #{tpu_custom_call.1} parent=0
    _
  %s18 = ssub.s32 1, %s16
  %s19 = scalar_select 0, %s18, %s16
  %v20 = vstv %s14
  %21 = vst [vmem:[#allocation4] sm:$0x1] %v20
  $region1: #{tpu_custom_call.1} parent=0
    #allocation5 [shape = 'u8[1024]{0}', space=vmem, size = 0x400, scoped, tag = 'input window, operand 0, single buffered']
    #allocation6 [shape = 's32[1]{0}', space=sflag, size = 0x4, scoped, tag = 'scoped memory for tpu_custom_call.1']
    #allocation7 [shape = 's32[1]{0}', space=sflag, size = 0x4, scoped, tag = 'scoped memory for tpu_custom_call.1']
    #allocation8 [shape = 'u8[8192]{0}', space=vmem, size = 0x2000, scoped, tag = 'input window, operand 3, single buffered']
    #allocation9 [shape = 's32[1]{0}', space=sflag, size = 0x4, scoped, tag = 'scoped memory for tpu_custom_call.1']
    #allocation10 [shape = 'u8[8192]{0}', space=vmem, size = 0x2000, scoped, tag = 'input window, operand 4, single buffered']
    #allocation11 [shape = 'u8[512]{0}', space=vmem, size = 0x400, scoped, tag = 'input window, operand 5, single buffered']
    #allocation12 [shape = 's32[1]{0}', space=sflag, size = 0x4, scoped, tag = 'scoped memory for tpu_custom_call.1']
    #allocation13 [shape = 'u8[512]{0}', space=vmem, size = 0x400, scoped, tag = 'input window, operand 6, single buffered']
    #allocation14 [shape = 'u8[2048]{0}', space=vmem, size = 0x800, scoped, tag = 'output window, operand 0, single buffered']
    %22 = vsyncpa [#allocation6], 0
    %23 = vsyncpa [#allocation9], 0
    %24 = vsyncpa [#allocation12], 0
    %25 = vsyncpa [#allocation7], 0
    // Predicated region
    $region2: #{tpu_custom_call.1} parent=1 // pred_check
      _
    $region3: #{tpu_custom_call.1} parent=1 // pred_check_branch
      %27 = sbr.rel (0) target = $region5
    $region4: #{tpu_custom_call.1} parent=1 // pred_region
      %s29 = ssub.s32 32, 32
      %30 = vsyncadd [#allocation6], %s29
      %s32 = sshll.u32 [#allocation5], 4
      %s33 = int_to_ptr.vmem [resolvable:$true] %s32
      %35 = dma.hbm_to_vmem [thread:$0]  %s0, 32, %s33, [#allocation6]
    $region5: #{tpu_custom_call.1} parent=1 // pred_fallthru
      _
    // Predicated region
    $region6: #{tpu_custom_call.1} parent=1 // pred_check
      _
    $region7: #{tpu_custom_call.1} parent=1 // pred_check_branch
      %37 = sbr.rel (0) target = $region9
    $region8: #{tpu_custom_call.1} parent=1 // pred_region
      _
    $region9: #{tpu_custom_call.1} parent=1 // pred_fallthru
      _
    // Predicated region
    $region10: #{tpu_custom_call.1} parent=1 // pred_check
      _
    $region11: #{tpu_custom_call.1} parent=1 // pred_check_branch
      %39 = sbr.rel (0) target = $region13
    $region12: #{tpu_custom_call.1} parent=1 // pred_region
      _
    $region13: #{tpu_custom_call.1} parent=1 // pred_fallthru
      _
    // Predicated region
    $region14: #{tpu_custom_call.1} parent=1 // pred_check
      _
    $region15: #{tpu_custom_call.1} parent=1 // pred_check_branch
      %41 = sbr.rel (0) target = $region17
    $region16: #{tpu_custom_call.1} parent=1 // pred_region
      %s43 = ssub.s32 256, 256
      %44 = vsyncadd [#allocation9], %s43
      %s45 = sshll.u32 [#allocation8], 4
      %s46 = int_to_ptr.vmem [resolvable:$true] %s45
      %51 = dma.hbm_to_vmem [thread:$0]  %s3, 256, %s46, [#allocation9], 128, 128, 8
    $region17: #{tpu_custom_call.1} parent=1 // pred_fallthru
      _
    // Predicated region
    $region18: #{tpu_custom_call.1} parent=1 // pred_check
      _
    $region19: #{tpu_custom_call.1} parent=1 // pred_check_branch
      %53 = sbr.rel (0) target = $region21
    $region20: #{tpu_custom_call.1} parent=1 // pred_region
      %s55 = ssub.s32 256, 256
      %56 = vsyncadd [#allocation9], %s55
      %s57 = sshll.u32 [#allocation10], 4
      %s58 = int_to_ptr.vmem [resolvable:$true] %s57
      %63 = dma.hbm_to_vmem [thread:$0]  %s4, 256, %s58, [#allocation9], 128, 128, 8
    $region21: #{tpu_custom_call.1} parent=1 // pred_fallthru
      _
    // Predicated region
    $region22: #{tpu_custom_call.1} parent=1 // pred_check
      _
    $region23: #{tpu_custom_call.1} parent=1 // pred_check_branch
      %65 = sbr.rel (0) target = $region25
    $region24: #{tpu_custom_call.1} parent=1 // pred_region
      %s67 = ssub.s32 16, 16
      %68 = vsyncadd [#allocation12], %s67
      %s70 = sshll.u32 [#allocation11], 4
      %s71 = int_to_ptr.vmem [resolvable:$true] %s70
      %73 = dma.hbm_to_vmem [thread:$0]  %s5, 16, %s71, [#allocation12]
    $region25: #{tpu_custom_call.1} parent=1 // pred_fallthru
      _
    // Predicated region
    $region26: #{tpu_custom_call.1} parent=1 // pred_check
      _
    $region27: #{tpu_custom_call.1} parent=1 // pred_check_branch
      %75 = sbr.rel (0) target = $region29
    $region28: #{tpu_custom_call.1} parent=1 // pred_region
      %s77 = ssub.s32 16, 16
      %78 = vsyncadd [#allocation12], %s77
      %s80 = sshll.u32 [#allocation13], 4
      %s81 = int_to_ptr.vmem [resolvable:$true] %s80
      %83 = dma.hbm_to_vmem [thread:$0]  %s6, 16, %s81, [#allocation12]
    $region29: #{tpu_custom_call.1} parent=1 // pred_fallthru
      _
    // Predicated region
    $region30: #{tpu_custom_call.1} parent=1 // pred_check
      _
    $region31: #{tpu_custom_call.1} parent=1 // pred_check_branch
      %85 = sbr.rel (0) target = $region33
    $region32: #{tpu_custom_call.1} parent=1 // pred_region
      _
    $region33: #{tpu_custom_call.1} parent=1 // pred_fallthru
      _
    // Predicated region
    $region34: #{tpu_custom_call.1} parent=1 // pred_check
      _
    $region35: #{tpu_custom_call.1} parent=1 // pred_check_branch
      %87 = sbr.rel (0) target = $region37
    $region36: #{tpu_custom_call.1} parent=1 // pred_region
      _
    $region37: #{tpu_custom_call.1} parent=1 // pred_fallthru
      _
    // Predicated region
    $region38: #{tpu_custom_call.1} parent=1 // pred_check
      _
    $region39: #{tpu_custom_call.1} parent=1 // pred_check_branch
      %89 = sbr.rel (0) target = $region41
    $region40: #{tpu_custom_call.1} parent=1 // pred_region
      _
    $region41: #{tpu_custom_call.1} parent=1 // pred_fallthru
      _
    // Predicated region
    $region42: #{tpu_custom_call.1} parent=1 // pred_check
      _
    $region43: #{tpu_custom_call.1} parent=1 // pred_check_branch
      %91 = sbr.rel (0) target = $region45
    $region44: #{tpu_custom_call.1} parent=1 // pred_region
      _
    $region45: #{tpu_custom_call.1} parent=1 // pred_fallthru
      _
    // Predicated region
    $region46: #{tpu_custom_call.1} parent=1 // pred_check
      _
    $region47: #{tpu_custom_call.1} parent=1 // pred_check_branch
      %93 = sbr.rel (0) target = $region49
    $region48: #{tpu_custom_call.1} parent=1 // pred_region
      _
    $region49: #{tpu_custom_call.1} parent=1 // pred_fallthru
      _
    // Predicated region
    $region50: #{tpu_custom_call.1} parent=1 // pred_check
      _
    $region51: #{tpu_custom_call.1} parent=1 // pred_check_branch
      %95 = sbr.rel (0) target = $region53
    $region52: #{tpu_custom_call.1} parent=1 // pred_region
      _
    $region53: #{tpu_custom_call.1} parent=1 // pred_fallthru
      _
    // Predicated region
    $region54: #{tpu_custom_call.1} parent=1 // pred_check
      _
    $region55: #{tpu_custom_call.1} parent=1 // pred_check_branch
      %97 = sbr.rel (0) target = $region57
    $region56: #{tpu_custom_call.1} parent=1 // pred_region
      _
    $region57: #{tpu_custom_call.1} parent=1 // pred_fallthru
      _
    // Predicated region
    $region58: #{tpu_custom_call.1} parent=1 // pred_check
      _
    $region59: #{tpu_custom_call.1} parent=1 // pred_check_branch
      %99 = sbr.rel (0) target = $region61
    $region60: #{tpu_custom_call.1} parent=1 // pred_region
      _
    $region61: #{tpu_custom_call.1} parent=1 // pred_fallthru
      _
    // Predicated region
    $region62: #{tpu_custom_call.1} parent=1 // pred_check
      _
    $region63: #{tpu_custom_call.1} parent=1 // pred_check_branch
      %101 = sbr.rel (0) target = $region65
    $region64: #{tpu_custom_call.1} parent=1 // pred_region
      %102 = dma.done [#allocation6], 32
    $region65: #{tpu_custom_call.1} parent=1 // pred_fallthru
      _
    // Predicated region
    $region66: #{tpu_custom_call.1} parent=1 // pred_check
      _
    $region67: #{tpu_custom_call.1} parent=1 // pred_check_branch
      %104 = sbr.rel (0) target = $region69
    $region68: #{tpu_custom_call.1} parent=1 // pred_region
      %105 = dma.done [#allocation9], 256
    $region69: #{tpu_custom_call.1} parent=1 // pred_fallthru
      _
    // Predicated region
    $region70: #{tpu_custom_call.1} parent=1 // pred_check
      _
    $region71: #{tpu_custom_call.1} parent=1 // pred_check_branch
      %107 = sbr.rel (0) target = $region73
    $region72: #{tpu_custom_call.1} parent=1 // pred_region
      %108 = dma.done [#allocation9], 256
    $region73: #{tpu_custom_call.1} parent=1 // pred_fallthru
      _
    // Predicated region
    $region74: #{tpu_custom_call.1} parent=1 // pred_check
      _
    $region75: #{tpu_custom_call.1} parent=1 // pred_check_branch
      %110 = sbr.rel (0) target = $region77
    $region76: #{tpu_custom_call.1} parent=1 // pred_region
      %111 = dma.done [#allocation12], 16
    $region77: #{tpu_custom_call.1} parent=1 // pred_fallthru
      _
    // Predicated region
    $region78: #{tpu_custom_call.1} parent=1 // pred_check
      _
    $region79: #{tpu_custom_call.1} parent=1 // pred_check_branch
      %113 = sbr.rel (0) target = $region81
    $region80: #{tpu_custom_call.1} parent=1 // pred_region
      %114 = dma.done [#allocation12], 16
    $region81: #{tpu_custom_call.1} parent=1 // pred_fallthru
      _
    %v115 = vld [vmem:[#allocation5] sm:$0x3]
    %v116 = vld [vmem:[%s1] sm:$0xff]
    %v117 = vld [vmem:[%s1 + $0x8] sm:$0xff]
    %v118 = vld [vmem:[%s2] sm:$0x1]
    %v120 = vlaneseq
    %v121 = vshrl.u32 %v120, 7
    %v122 = vsub.s32 0, %v121
    %v123 = vrot.slane %v118, %v122
    %vm125 = vcmask 130048
    %v127 = vsel %vm125, %v115, 0
    %129 = vmatprep.subr.mxu0 0.0
    %130 = vmatpush1.msra.mxu0 %v116
    %131 = vmatprep.subr.mxu0 0.0
    %132 = vmatpush1.msra.mxu0 %v117
    %133 = vmatprep.subr.mxu0 0.0
    %134 = vmatpush1.msra.mxu0 0.0
    %135 = vmatprep.subr.mxu0 0.0
    %136 = vmatpush1.msra.mxu0 0.0
    %137 = vmatprep.subr.mxu0 0.0
    %138 = vmatpush1.msra.mxu0 0.0
    %139 = vmatprep.subr.mxu0 0.0
    %140 = vmatpush1.msra.mxu0 0.0
    %141 = vmatprep.subr.mxu0 0.0
    %142 = vmatpush1.msra.mxu0 0.0
    %143 = vmatprep.subr.mxu0 0.0
    %144 = vmatpush1.msra.mxu0 0.0
    %145 = vmatprep.subr.mxu0 0.0
    %146 = vmatpush1.msra.mxu0 0.0
    %147 = vmatprep.subr.mxu0 0.0
    %148 = vmatpush1.msra.mxu0 0.0
    %149 = vmatprep.subr.mxu0 0.0
    %150 = vmatpush1.msra.mxu0 0.0
    %151 = vmatprep.subr.mxu0 0.0
    %152 = vmatpush1.msra.mxu0 0.0
    %153 = vmatprep.subr.mxu0 0.0
    %154 = vmatpush1.msra.mxu0 0.0
    %155 = vmatprep.subr.mxu0 0.0
    %156 = vmatpush1.msra.mxu0 0.0
    %157 = vmatprep.subr.mxu0 0.0
    %158 = vmatpush1.msra.mxu0 0.0
    %159 = vmatprep.subr.mxu0 0.0
    %160 = vmatpush1.msra.mxu0 0.0
    %161 = vmatprep.subr.mxu0 0.0
    %162 = vmatpush1.msra.mxu0 0.0
    %163 = vmatprep.subr.mxu0 0.0
    %164 = vmatpush1.msra.mxu0 0.0
    %165 = vmatprep.subr.mxu0 0.0
    %166 = vmatpush1.msra.mxu0 0.0
    %167 = vmatprep.subr.mxu0 0.0
    %168 = vmatpush1.msra.mxu0 0.0
    %169 = vmatprep.subr.mxu0 0.0
    %170 = vmatpush1.msra.mxu0 0.0
    %171 = vmatprep.subr.mxu0 0.0
    %172 = vmatpush1.msra.mxu0 0.0
    %173 = vmatprep.subr.mxu0 0.0
    %174 = vmatpush1.msra.mxu0 0.0
    %175 = vmatprep.subr.mxu0 0.0
    %176 = vmatpush1.msra.mxu0 0.0
    %177 = vmatprep.subr.mxu0 0.0
    %178 = vmatpush1.msra.mxu0 0.0
    %179 = vmatprep.subr.mxu0 0.0
    %180 = vmatpush1.msra.mxu0 0.0
    %181 = vmatprep.subr.mxu0 0.0
    %182 = vmatpush1.msra.mxu0 0.0
    %183 = vmatprep.subr.mxu0 0.0
    %184 = vmatpush1.msra.mxu0 0.0
    %185 = vmatprep.subr.mxu0 0.0
    %186 = vmatpush1.msra.mxu0 0.0
    %187 = vmatprep.subr.mxu0 0.0
    %188 = vmatpush1.msra.mxu0 0.0
    %189 = vmatprep.subr.mxu0 0.0
    %190 = vmatpush1.msra.mxu0 0.0
    %191 = vmatprep.subr.mxu0 0.0
    %192 = vmatpush1.msra.mxu0 0.0
    %193 = vmatprep.mubr.f32.mxu0 0.0
    %194 = vmatmul.mubr.f32.gmra.mrb[0].mxu0 %v127
    %v195 = vpop.f32.mrb[0].mxu0
    %v196 = vadd.f32 %v123, %v195
    %v197 = vpop.f32.mrb[0].mxu0
    %198 = vdwg.mxu0
    %v201 = vunpack.c.l.s4 1966171168
    %v202 = vunpack.c.0.s8 %v201
    %v203 = vlaneseq
    %v204 = vshrl.u32 %v203, 7
    %v205 = vsub.s32 %v202, %v204
    %v206 = vrot.slane %v196, %v205
    %v207 = vcombine.high %v206, %v206
    %v209 = vunpack.c.l.s4 1966171168
    %v210 = vunpack.c.0.s8 %v209
    %v211 = vlaneseq
    %v212 = vshrl.u32 %v211, 7
    %v213 = vsub.s32 %v210, %v212
    %v214 = vrot.slane %v206, %v213
    %v216 = vunpack.c.l.s4 1966171168
    %v217 = vunpack.c.0.s8 %v216
    %v218 = vlaneseq
    %v219 = vshrl.u32 %v218, 7
    %v220 = vsub.s32 %v217, %v219
    %v221 = vrot.slane %v207, %v220
    %v224 = vlaneseq
    %v225 = vshrl.u32 %v224, 7
    %v226 = vsub.s32 0, %v225
    %v227 = vrot.slane %v214, %v226
    %v228 = vlaneseq
    %v229 = vshrl.u32 %v228, 7
    %v230 = vsub.s32 0, %v229
    %v231 = vrot.slane %v221, %v230
    %232 = vrot.lane.b32.xlu0 %v227, 112
    %v233 = vpop.permute.xlu0 %232
    %234 = vrot.lane.b32.xlu0 %v231, 112
    %v235 = vpop.permute.xlu0 %234
    %238 = vrot.lane.b32.xlu0 %v227, 96
    %v239 = vpop.permute.xlu0 %238
    %240 = vrot.lane.b32.xlu0 %v231, 96
    %v241 = vpop.permute.xlu0 %240
    %244 = vrot.lane.b32.xlu0 %v227, 80
    %v245 = vpop.permute.xlu0 %244
    %246 = vrot.lane.b32.xlu0 %v231, 80
    %v247 = vpop.permute.xlu0 %246
    %vm250 = vcmask 1040384
    %v251 = vsel %vm250, %v214, %v233
    %v252 = vsel %vm250, %v221, %v235
    %vm253 = vcmask 1041408
    %v254 = vsel %vm253, %v251, %v239
    %v255 = vsel %vm253, %v252, %v241
    %vm256 = vcmask 1042432
    %v257 = vsel %vm256, %v254, %v245
    %v258 = vsel %vm256, %v255, %v247
    %vm259 = vcmask 1043456
    %v260 = vsel %vm259, %v257, 0.0
    %v261 = vsel %vm259, %v258, 0.0
    %v264 = vcombine.high %v260, %v260
    %v266 = vunpack.c.l.s4 1966171168
    %v267 = vunpack.c.0.s8 %v266
    %v268 = vlaneseq
    %v269 = vshrl.u32 %v268, 7
    %v270 = vsub.s32 %v267, %v269
    %v271 = vrot.slane %v260, %v270
    %v273 = vunpack.c.l.s4 1966171168
    %v274 = vunpack.c.0.s8 %v273
    %v275 = vlaneseq
    %v276 = vshrl.u32 %v275, 7
    %v277 = vsub.s32 %v274, %v276
    %v278 = vrot.slane %v264, %v277
    %v279 = vcombine.high %v271, %v271
    %v281 = vunpack.c.l.s4 1966171168
    %v282 = vunpack.c.0.s8 %v281
    %v283 = vlaneseq
    %v284 = vshrl.u32 %v283, 7
    %v285 = vsub.s32 %v282, %v284
    %v286 = vrot.slane %v271, %v285
    %v288 = vunpack.c.l.s4 1966171168
    %v289 = vunpack.c.0.s8 %v288
    %v290 = vlaneseq
    %v291 = vshrl.u32 %v290, 7
    %v292 = vsub.s32 %v289, %v291
    %v293 = vrot.slane %v278, %v292
    %v295 = vunpack.c.l.s4 1966171168
    %v296 = vunpack.c.0.s8 %v295
    %v297 = vlaneseq
    %v298 = vshrl.u32 %v297, 7
    %v299 = vsub.s32 %v296, %v298
    %v300 = vrot.slane %v279, %v299
    %v301 = vcombine.high %v286, %v286
    %v302 = vcombine.high %v300, %v300
    %v303 = vcombine.high %v261, %v261
    %v305 = vunpack.c.l.s4 1966171168
    %v306 = vunpack.c.0.s8 %v305
    %v307 = vlaneseq
    %v308 = vshrl.u32 %v307, 7
    %v309 = vsub.s32 %v306, %v308
    %v310 = vrot.slane %v261, %v309
    %v312 = vunpack.c.l.s4 1966171168
    %v313 = vunpack.c.0.s8 %v312
    %v314 = vlaneseq
    %v315 = vshrl.u32 %v314, 7
    %v316 = vsub.s32 %v313, %v315
    %v317 = vrot.slane %v303, %v316
    %v318 = vcombine.high %v310, %v310
    %v320 = vunpack.c.l.s4 1966171168
    %v321 = vunpack.c.0.s8 %v320
    %v322 = vlaneseq
    %v323 = vshrl.u32 %v322, 7
    %v324 = vsub.s32 %v321, %v323
    %v325 = vrot.slane %v310, %v324
    %v327 = vunpack.c.l.s4 1966171168
    %v328 = vunpack.c.0.s8 %v327
    %v329 = vlaneseq
    %v330 = vshrl.u32 %v329, 7
    %v331 = vsub.s32 %v328, %v330
    %v332 = vrot.slane %v317, %v331
    %v334 = vunpack.c.l.s4 1966171168
    %v335 = vunpack.c.0.s8 %v334
    %v336 = vlaneseq
    %v337 = vshrl.u32 %v336, 7
    %v338 = vsub.s32 %v335, %v337
    %v339 = vrot.slane %v318, %v338
    %v340 = vcombine.high %v325, %v325
    %v341 = vcombine.high %v339, %v339
    %v344 = vrot.slane %v257, 7
    %v345 = vrot.slane %v258, 7
    %v348 = vsel %vm250, 0.0, %v344
    %v349 = vsel %vm250, 0.0, %v345
    %v352 = vcombine.high %v348, %v348
    %v354 = vunpack.c.l.s4 1966171168
    %v355 = vunpack.c.0.s8 %v354
    %v356 = vlaneseq
    %v357 = vshrl.u32 %v356, 7
    %v358 = vsub.s32 %v355, %v357
    %v359 = vrot.slane %v348, %v358
    %v361 = vunpack.c.l.s4 1966171168
    %v362 = vunpack.c.0.s8 %v361
    %v363 = vlaneseq
    %v364 = vshrl.u32 %v363, 7
    %v365 = vsub.s32 %v362, %v364
    %v366 = vrot.slane %v352, %v365
    %v367 = vcombine.high %v359, %v359
    %v369 = vunpack.c.l.s4 1966171168
    %v370 = vunpack.c.0.s8 %v369
    %v371 = vlaneseq
    %v372 = vshrl.u32 %v371, 7
    %v373 = vsub.s32 %v370, %v372
    %v374 = vrot.slane %v359, %v373
    %v376 = vunpack.c.l.s4 1966171168
    %v377 = vunpack.c.0.s8 %v376
    %v378 = vlaneseq
    %v379 = vshrl.u32 %v378, 7
    %v380 = vsub.s32 %v377, %v379
    %v381 = vrot.slane %v366, %v380
    %v383 = vunpack.c.l.s4 1966171168
    %v384 = vunpack.c.0.s8 %v383
    %v385 = vlaneseq
    %v386 = vshrl.u32 %v385, 7
    %v387 = vsub.s32 %v384, %v386
    %v388 = vrot.slane %v367, %v387
    %v389 = vcombine.high %v374, %v374
    %v390 = vcombine.high %v388, %v388
    %v391 = vcombine.high %v349, %v349
    %v393 = vunpack.c.l.s4 1966171168
    %v394 = vunpack.c.0.s8 %v393
    %v395 = vlaneseq
    %v396 = vshrl.u32 %v395, 7
    %v397 = vsub.s32 %v394, %v396
    %v398 = vrot.slane %v349, %v397
    %v400 = vunpack.c.l.s4 1966171168
    %v401 = vunpack.c.0.s8 %v400
    %v402 = vlaneseq
    %v403 = vshrl.u32 %v402, 7
    %v404 = vsub.s32 %v401, %v403
    %v405 = vrot.slane %v391, %v404
    %v406 = vcombine.high %v398, %v398
    %v408 = vunpack.c.l.s4 1966171168
    %v409 = vunpack.c.0.s8 %v408
    %v410 = vlaneseq
    %v411 = vshrl.u32 %v410, 7
    %v412 = vsub.s32 %v409, %v411
    %v413 = vrot.slane %v398, %v412
    %v415 = vunpack.c.l.s4 1966171168
    %v416 = vunpack.c.0.s8 %v415
    %v417 = vlaneseq
    %v418 = vshrl.u32 %v417, 7
    %v419 = vsub.s32 %v416, %v418
    %v420 = vrot.slane %v405, %v419
    %v422 = vunpack.c.l.s4 1966171168
    %v423 = vunpack.c.0.s8 %v422
    %v424 = vlaneseq
    %v425 = vshrl.u32 %v424, 7
    %v426 = vsub.s32 %v423, %v425
    %v427 = vrot.slane %v406, %v426
    %v428 = vcombine.high %v413, %v413
    %v429 = vcombine.high %v427, %v427
    %v430 = vld [vmem:[#allocation8] sm:$0xff]
    %v431 = vld [vmem:[#allocation8 + $0x8] sm:$0xff]
    %v432 = vld [vmem:[#allocation10] sm:$0xff]
    %v433 = vld [vmem:[#allocation10 + $0x8] sm:$0xff]
    %v434 = vcombine.low %v374, %v388
    %v435 = vcombine.low %v389, %v390
    %v436 = vcombine.low %v381, %v413
    %v437 = vcombine.low %v427, %v428
    %v439 = vunpack.c.l.s4 1966171168
    %v440 = vunpack.c.0.s8 %v439
    %v441 = vlaneseq
    %v442 = vshrl.u32 %v441, 7
    %v443 = vsub.s32 %v440, %v442
    %v444 = vrot.slane %v434, %v443
    %v446 = vunpack.c.l.s4 1966171168
    %v447 = vunpack.c.0.s8 %v446
    %v448 = vlaneseq
    %v449 = vshrl.u32 %v448, 7
    %v450 = vsub.s32 %v447, %v449
    %v451 = vrot.slane %v435, %v450
    %v453 = vunpack.c.l.s4 1966171168
    %v454 = vunpack.c.0.s8 %v453
    %v455 = vlaneseq
    %v456 = vshrl.u32 %v455, 7
    %v457 = vsub.s32 %v454, %v456
    %v458 = vrot.slane %v436, %v457
    %v460 = vunpack.c.l.s4 1966171168
    %v461 = vunpack.c.0.s8 %v460
    %v462 = vlaneseq
    %v463 = vshrl.u32 %v462, 7
    %v464 = vsub.s32 %v461, %v463
    %v465 = vrot.slane %v437, %v464
    %v466 = vcombine.low %v444, %v451
    %v467 = vcombine.low %v458, %v465
    %v469 = vunpack.c.l.s4 1966171168
    %v470 = vunpack.c.0.s8 %v469
    %v471 = vlaneseq
    %v472 = vshrl.u32 %v471, 7
    %v473 = vsub.s32 %v470, %v472
    %v474 = vrot.slane %v466, %v473
    %v476 = vunpack.c.l.s4 1966171168
    %v477 = vunpack.c.0.s8 %v476
    %v478 = vlaneseq
    %v479 = vshrl.u32 %v478, 7
    %v480 = vsub.s32 %v477, %v479
    %v481 = vrot.slane %v467, %v480
    %v482 = vcombine.low %v474, %v481
    %v483 = vcombine.low %v429, %v420
    %v485 = vunpack.c.l.s4 1966171168
    %v486 = vunpack.c.0.s8 %v485
    %v487 = vlaneseq
    %v488 = vshrl.u32 %v487, 7
    %v489 = vsub.s32 %v486, %v488
    %v490 = vrot.slane %v483, %v489
    %v492 = vunpack.c.l.s4 1966171168
    %v493 = vunpack.c.0.s8 %v492
    %v494 = vlaneseq
    %v495 = vshrl.u32 %v494, 7
    %v496 = vsub.s32 %v493, %v495
    %v497 = vrot.slane %v490, %v496
    %v498 = vsel %vm125, %v482, 0
    %v500 = vsel %vm125, %v497, 0
    %502 = vmatprep.subr.mxu0 0.0
    %503 = vmatpush1.msra.mxu0 %v432
    %504 = vmatprep.subr.mxu0 0.0
    %505 = vmatpush1.msra.mxu0 %v433
    %506 = vmatprep.subr.mxu0 0.0
    %507 = vmatpush1.msra.mxu0 0.0
    %508 = vmatprep.subr.mxu0 0.0
    %509 = vmatpush1.msra.mxu0 0.0
    %510 = vmatprep.subr.mxu0 0.0
    %511 = vmatpush1.msra.mxu0 0.0
    %512 = vmatprep.subr.mxu0 0.0
    %513 = vmatpush1.msra.mxu0 0.0
    %514 = vmatprep.subr.mxu0 0.0
    %515 = vmatpush1.msra.mxu0 0.0
    %516 = vmatprep.subr.mxu0 0.0
    %517 = vmatpush1.msra.mxu0 0.0
    %518 = vmatprep.subr.mxu0 0.0
    %519 = vmatpush1.msra.mxu0 0.0
    %520 = vmatprep.subr.mxu0 0.0
    %521 = vmatpush1.msra.mxu0 0.0
    %522 = vmatprep.subr.mxu0 0.0
    %523 = vmatpush1.msra.mxu0 0.0
    %524 = vmatprep.subr.mxu0 0.0
    %525 = vmatpush1.msra.mxu0 0.0
    %526 = vmatprep.subr.mxu0 0.0
    %527 = vmatpush1.msra.mxu0 0.0
    %528 = vmatprep.subr.mxu0 0.0
    %529 = vmatpush1.msra.mxu0 0.0
    %530 = vmatprep.subr.mxu0 0.0
    %531 = vmatpush1.msra.mxu0 0.0
    %532 = vmatprep.subr.mxu0 0.0
    %533 = vmatpush1.msra.mxu0 0.0
    %534 = vmatprep.subr.mxu0 0.0
    %535 = vmatpush1.msra.mxu0 0.0
    %536 = vmatprep.subr.mxu0 0.0
    %537 = vmatpush1.msra.mxu0 0.0
    %538 = vmatprep.subr.mxu0 0.0
    %539 = vmatpush1.msra.mxu0 0.0
    %540 = vmatprep.subr.mxu0 0.0
    %541 = vmatpush1.msra.mxu0 0.0
    %542 = vmatprep.subr.mxu0 0.0
    %543 = vmatpush1.msra.mxu0 0.0
    %544 = vmatprep.subr.mxu0 0.0
    %545 = vmatpush1.msra.mxu0 0.0
    %546 = vmatprep.subr.mxu0 0.0
    %547 = vmatpush1.msra.mxu0 0.0
    %548 = vmatprep.subr.mxu0 0.0
    %549 = vmatpush1.msra.mxu0 0.0
    %550 = vmatprep.subr.mxu0 0.0
    %551 = vmatpush1.msra.mxu0 0.0
    %552 = vmatprep.subr.mxu0 0.0
    %553 = vmatpush1.msra.mxu0 0.0
    %554 = vmatprep.subr.mxu0 0.0
    %555 = vmatpush1.msra.mxu0 0.0
    %556 = vmatprep.subr.mxu0 0.0
    %557 = vmatpush1.msra.mxu0 0.0
    %558 = vmatprep.subr.mxu0 0.0
    %559 = vmatpush1.msra.mxu0 0.0
    %560 = vmatprep.subr.mxu0 0.0
    %561 = vmatpush1.msra.mxu0 0.0
    %562 = vmatprep.subr.mxu0 0.0
    %563 = vmatpush1.msra.mxu0 0.0
    %564 = vmatprep.subr.mxu0 0.0
    %565 = vmatpush1.msra.mxu0 0.0
    %566 = vmatprep.mubr.f32.mxu0 0.0
    %567 = vmatmul.mubr.f32.gmra.mrb[0].mxu0 %v498
    %v568 = vpop.f32.mrb[0].mxu0
    %v569 = vadd.f32 0.0, %v568
    %v570 = vpop.f32.mrb[0].mxu0
    %571 = vmatprep.mubr.f32.mxu0 0.0
    %572 = vmatmul.mubr.f32.gmra.mrb[0].mxu0 %v500
    %v573 = vpop.f32.mrb[0].mxu0
    %v574 = vadd.f32 0.0, %v573
    %v575 = vpop.f32.mrb[0].mxu0
    %576 = vdwg.mxu0
    %v577 = vcombine.low %v286, %v300
    %v578 = vcombine.low %v301, %v302
    %v579 = vcombine.low %v293, %v325
    %v580 = vcombine.low %v339, %v340
    %v582 = vunpack.c.l.s4 1966171168
    %v583 = vunpack.c.0.s8 %v582
    %v584 = vlaneseq
    %v585 = vshrl.u32 %v584, 7
    %v586 = vsub.s32 %v583, %v585
    %v587 = vrot.slane %v577, %v586
    %v589 = vunpack.c.l.s4 1966171168
    %v590 = vunpack.c.0.s8 %v589
    %v591 = vlaneseq
    %v592 = vshrl.u32 %v591, 7
    %v593 = vsub.s32 %v590, %v592
    %v594 = vrot.slane %v578, %v593
    %v596 = vunpack.c.l.s4 1966171168
    %v597 = vunpack.c.0.s8 %v596
    %v598 = vlaneseq
    %v599 = vshrl.u32 %v598, 7
    %v600 = vsub.s32 %v597, %v599
    %v601 = vrot.slane %v579, %v600
    %v603 = vunpack.c.l.s4 1966171168
    %v604 = vunpack.c.0.s8 %v603
    %v605 = vlaneseq
    %v606 = vshrl.u32 %v605, 7
    %v607 = vsub.s32 %v604, %v606
    %v608 = vrot.slane %v580, %v607
    %v609 = vcombine.low %v587, %v594
    %v610 = vcombine.low %v601, %v608
    %v612 = vunpack.c.l.s4 1966171168
    %v613 = vunpack.c.0.s8 %v612
    %v614 = vlaneseq
    %v615 = vshrl.u32 %v614, 7
    %v616 = vsub.s32 %v613, %v615
    %v617 = vrot.slane %v609, %v616
    %v619 = vunpack.c.l.s4 1966171168
    %v620 = vunpack.c.0.s8 %v619
    %v621 = vlaneseq
    %v622 = vshrl.u32 %v621, 7
    %v623 = vsub.s32 %v620, %v622
    %v624 = vrot.slane %v610, %v623
    %v625 = vcombine.low %v617, %v624
    %v626 = vcombine.low %v341, %v332
    %v628 = vunpack.c.l.s4 1966171168
    %v629 = vunpack.c.0.s8 %v628
    %v630 = vlaneseq
    %v631 = vshrl.u32 %v630, 7
    %v632 = vsub.s32 %v629, %v631
    %v633 = vrot.slane %v626, %v632
    %v635 = vunpack.c.l.s4 1966171168
    %v636 = vunpack.c.0.s8 %v635
    %v637 = vlaneseq
    %v638 = vshrl.u32 %v637, 7
    %v639 = vsub.s32 %v636, %v638
    %v640 = vrot.slane %v633, %v639
    %v641 = vsel %vm125, %v625, 0
    %v643 = vsel %vm125, %v640, 0
    %645 = vmatprep.subr.mxu0 0.0
    %646 = vmatpush1.msra.mxu0 %v430
    %647 = vmatprep.subr.mxu0 0.0
    %648 = vmatpush1.msra.mxu0 %v431
    %649 = vmatprep.subr.mxu0 0.0
    %650 = vmatpush1.msra.mxu0 0.0
    %651 = vmatprep.subr.mxu0 0.0
    %652 = vmatpush1.msra.mxu0 0.0
    %653 = vmatprep.subr.mxu0 0.0
    %654 = vmatpush1.msra.mxu0 0.0
    %655 = vmatprep.subr.mxu0 0.0
    %656 = vmatpush1.msra.mxu0 0.0
    %657 = vmatprep.subr.mxu0 0.0
    %658 = vmatpush1.msra.mxu0 0.0
    %659 = vmatprep.subr.mxu0 0.0
    %660 = vmatpush1.msra.mxu0 0.0
    %661 = vmatprep.subr.mxu0 0.0
    %662 = vmatpush1.msra.mxu0 0.0
    %663 = vmatprep.subr.mxu0 0.0
    %664 = vmatpush1.msra.mxu0 0.0
    %665 = vmatprep.subr.mxu0 0.0
    %666 = vmatpush1.msra.mxu0 0.0
    %667 = vmatprep.subr.mxu0 0.0
    %668 = vmatpush1.msra.mxu0 0.0
    %669 = vmatprep.subr.mxu0 0.0
    %670 = vmatpush1.msra.mxu0 0.0
    %671 = vmatprep.subr.mxu0 0.0
    %672 = vmatpush1.msra.mxu0 0.0
    %673 = vmatprep.subr.mxu0 0.0
    %674 = vmatpush1.msra.mxu0 0.0
    %675 = vmatprep.subr.mxu0 0.0
    %676 = vmatpush1.msra.mxu0 0.0
    %677 = vmatprep.subr.mxu0 0.0
    %678 = vmatpush1.msra.mxu0 0.0
    %679 = vmatprep.subr.mxu0 0.0
    %680 = vmatpush1.msra.mxu0 0.0
    %681 = vmatprep.subr.mxu0 0.0
    %682 = vmatpush1.msra.mxu0 0.0
    %683 = vmatprep.subr.mxu0 0.0
    %684 = vmatpush1.msra.mxu0 0.0
    %685 = vmatprep.subr.mxu0 0.0
    %686 = vmatpush1.msra.mxu0 0.0
    %687 = vmatprep.subr.mxu0 0.0
    %688 = vmatpush1.msra.mxu0 0.0
    %689 = vmatprep.subr.mxu0 0.0
    %690 = vmatpush1.msra.mxu0 0.0
    %691 = vmatprep.subr.mxu0 0.0
    %692 = vmatpush1.msra.mxu0 0.0
    %693 = vmatprep.subr.mxu0 0.0
    %694 = vmatpush1.msra.mxu0 0.0
    %695 = vmatprep.subr.mxu0 0.0
    %696 = vmatpush1.msra.mxu0 0.0
    %697 = vmatprep.subr.mxu0 0.0
    %698 = vmatpush1.msra.mxu0 0.0
    %699 = vmatprep.subr.mxu0 0.0
    %700 = vmatpush1.msra.mxu0 0.0
    %701 = vmatprep.subr.mxu0 0.0
    %702 = vmatpush1.msra.mxu0 0.0
    %703 = vmatprep.subr.mxu0 0.0
    %704 = vmatpush1.msra.mxu0 0.0
    %705 = vmatprep.subr.mxu0 0.0
    %706 = vmatpush1.msra.mxu0 0.0
    %707 = vmatprep.subr.mxu0 0.0
    %708 = vmatpush1.msra.mxu0 0.0
    %709 = vmatprep.mubr.f32.mxu0 0.0
    %710 = vmatmul.mubr.f32.gmra.mrb[0].mxu0 %v641
    %v711 = vpop.f32.mrb[0].mxu0
    %v712 = vadd.f32 %v569, %v711
    %v713 = vpop.f32.mrb[0].mxu0
    %714 = vmatprep.mubr.f32.mxu0 0.0
    %715 = vmatmul.mubr.f32.gmra.mrb[0].mxu0 %v643
    %v716 = vpop.f32.mrb[0].mxu0
    %v717 = vadd.f32 %v574, %v716
    %v718 = vpop.f32.mrb[0].mxu0
    %719 = vdwg.mxu0
    %v720 = vld [vmem:[#allocation11] sm:$0x1]
    %v722 = vlaneseq
    %v723 = vshrl.u32 %v722, 7
    %v724 = vsub.s32 0, %v723
    %v725 = vrot.slane %v720, %v724
    %v727 = vadd.f32 %v712, %v725
    %v728 = vadd.f32 %v717, %v725
    %vm729 = vcmp.ge.f32.partialorder %v727, 0.0
    %vm730 = vcmp.ge.f32.partialorder %v728, 0.0
    %v731 = vmul.f32 %v727, 0.2
    %v732 = vmul.f32 %v728, 0.2
    %v733 = vsel %vm729, %v727, %v731
    %v734 = vsel %vm730, %v728, %v732
    %v737 = vcombine.high %v733, %v733
    %v739 = vunpack.c.l.s4 1966171168
    %v740 = vunpack.c.0.s8 %v739
    %v741 = vlaneseq
    %v742 = vshrl.u32 %v741, 7
    %v743 = vsub.s32 %v740, %v742
    %v744 = vrot.slane %v733, %v743
    %v746 = vunpack.c.l.s4 1966171168
    %v747 = vunpack.c.0.s8 %v746
    %v748 = vlaneseq
    %v749 = vshrl.u32 %v748, 7
    %v750 = vsub.s32 %v747, %v749
    %v751 = vrot.slane %v737, %v750
    %v752 = vcombine.high %v744, %v744
    %v753 = vcombine.high %v751, %v751
    %v755 = vunpack.c.l.s4 1966171168
    %v756 = vunpack.c.0.s8 %v755
    %v757 = vlaneseq
    %v758 = vshrl.u32 %v757, 7
    %v759 = vsub.s32 %v756, %v758
    %v760 = vrot.slane %v744, %v759
    %v762 = vunpack.c.l.s4 1966171168
    %v763 = vunpack.c.0.s8 %v762
    %v764 = vlaneseq
    %v765 = vshrl.u32 %v764, 7
    %v766 = vsub.s32 %v763, %v765
    %v767 = vrot.slane %v751, %v766
    %v769 = vunpack.c.l.s4 1966171168
    %v770 = vunpack.c.0.s8 %v769
    %v771 = vlaneseq
    %v772 = vshrl.u32 %v771, 7
    %v773 = vsub.s32 %v770, %v772
    %v774 = vrot.slane %v752, %v773
    %v776 = vunpack.c.l.s4 1966171168
    %v777 = vunpack.c.0.s8 %v776
    %v778 = vlaneseq
    %v779 = vshrl.u32 %v778, 7
    %v780 = vsub.s32 %v777, %v779
    %v781 = vrot.slane %v753, %v780
    %v782 = vcombine.high %v760, %v760
    %v783 = vcombine.high %v767, %v767
    %v784 = vcombine.high %v774, %v774
    %v785 = vcombine.high %v781, %v781
    %v787 = vunpack.c.l.s4 1966171168
    %v788 = vunpack.c.0.s8 %v787
    %v789 = vlaneseq
    %v790 = vshrl.u32 %v789, 7
    %v791 = vsub.s32 %v788, %v790
    %v792 = vrot.slane %v734, %v791
    %v793 = vcombine.high %v792, %v792
    %v795 = vunpack.c.l.s4 1966171168
    %v796 = vunpack.c.0.s8 %v795
    %v797 = vlaneseq
    %v798 = vshrl.u32 %v797, 7
    %v799 = vsub.s32 %v796, %v798
    %v800 = vrot.slane %v792, %v799
    %v802 = vunpack.c.l.s4 1966171168
    %v803 = vunpack.c.0.s8 %v802
    %v804 = vlaneseq
    %v805 = vshrl.u32 %v804, 7
    %v806 = vsub.s32 %v803, %v805
    %v807 = vrot.slane %v793, %v806
    %vm818 = vcmask 57344
    %819 = vst.msk [vmem:[#allocation2] sm:$0x1] %vm818, %v760
    %820 = vst.msk [vmem:[#allocation2 + $0x4] sm:$0x1] %vm818, %v774
    %821 = vst.msk [vmem:[#allocation2 + $0x8] sm:$0x1] %vm818, %v782
    %822 = vst.msk [vmem:[#allocation2 + $0xc] sm:$0x1] %vm818, %v784
    %823 = vst.msk [vmem:[#allocation2 + $0x10] sm:$0x1] %vm818, %v767
    %824 = vst.msk [vmem:[#allocation2 + $0x14] sm:$0x1] %vm818, %v781
    %825 = vst.msk [vmem:[#allocation2 + $0x18] sm:$0x1] %vm818, %v783
    %826 = vst.msk [vmem:[#allocation2 + $0x1c] sm:$0x1] %vm818, %v785
    %827 = vst.msk [vmem:[#allocation2 + $0x20] sm:$0x1] %vm818, %v800
    %828 = vst.msk [vmem:[#allocation2 + $0x24] sm:$0x1] %vm818, %v807
    %v829 = vlaneseq
    %v830 = vshrl.u32 %v829, 7
    %v831 = vsub.s32 0, %v830
    %v832 = vrot.slane %v760, %v831
    %v833 = vlaneseq
    %v834 = vshrl.u32 %v833, 7
    %v835 = vsub.s32 0, %v834
    %v836 = vrot.slane %v774, %v835
    %v837 = vlaneseq
    %v838 = vshrl.u32 %v837, 7
    %v839 = vsub.s32 0, %v838
    %v840 = vrot.slane %v782, %v839
    %v841 = vlaneseq
    %v842 = vshrl.u32 %v841, 7
    %v843 = vsub.s32 0, %v842
    %v844 = vrot.slane %v784, %v843
    %v845 = vlaneseq
    %v846 = vshrl.u32 %v845, 7
    %v847 = vsub.s32 0, %v846
    %v848 = vrot.slane %v767, %v847
    %v849 = vlaneseq
    %v850 = vshrl.u32 %v849, 7
    %v851 = vsub.s32 0, %v850
    %v852 = vrot.slane %v781, %v851
    %v853 = vlaneseq
    %v854 = vshrl.u32 %v853, 7
    %v855 = vsub.s32 0, %v854
    %v856 = vrot.slane %v783, %v855
    %v857 = vlaneseq
    %v858 = vshrl.u32 %v857, 7
    %v859 = vsub.s32 0, %v858
    %v860 = vrot.slane %v785, %v859
    %v861 = vlaneseq
    %v862 = vshrl.u32 %v861, 7
    %v863 = vsub.s32 0, %v862
    %v864 = vrot.slane %v800, %v863
    %v865 = vlaneseq
    %v866 = vshrl.u32 %v865, 7
    %v867 = vsub.s32 0, %v866
    %v868 = vrot.slane %v807, %v867
    %869 = vrot.lane.b32.xlu0 %v832, 120
    %v870 = vpop.permute.xlu0 %869
    %871 = vrot.lane.b32.xlu0 %v836, 120
    %v872 = vpop.permute.xlu0 %871
    %873 = vrot.lane.b32.xlu0 %v840, 120
    %v874 = vpop.permute.xlu0 %873
    %875 = vrot.lane.b32.xlu0 %v844, 120
    %v876 = vpop.permute.xlu0 %875
    %877 = vrot.lane.b32.xlu0 %v848, 120
    %v878 = vpop.permute.xlu0 %877
    %879 = vrot.lane.b32.xlu0 %v852, 120
    %v880 = vpop.permute.xlu0 %879
    %881 = vrot.lane.b32.xlu0 %v856, 120
    %v882 = vpop.permute.xlu0 %881
    %883 = vrot.lane.b32.xlu0 %v860, 120
    %v884 = vpop.permute.xlu0 %883
    %885 = vrot.lane.b32.xlu0 %v864, 120
    %v886 = vpop.permute.xlu0 %885
    %887 = vrot.lane.b32.xlu0 %v868, 120
    %v888 = vpop.permute.xlu0 %887
    %899 = vst.msk [vmem:[#allocation2 + $0x1] sm:$0x1] %vm818, %v870
    %900 = vst.msk [vmem:[#allocation2 + $0x5] sm:$0x1] %vm818, %v872
    %901 = vst.msk [vmem:[#allocation2 + $0x9] sm:$0x1] %vm818, %v874
    %902 = vst.msk [vmem:[#allocation2 + $0xd] sm:$0x1] %vm818, %v876
    %903 = vst.msk [vmem:[#allocation2 + $0x11] sm:$0x1] %vm818, %v878
    %904 = vst.msk [vmem:[#allocation2 + $0x15] sm:$0x1] %vm818, %v880
    %905 = vst.msk [vmem:[#allocation2 + $0x19] sm:$0x1] %vm818, %v882
    %906 = vst.msk [vmem:[#allocation2 + $0x1d] sm:$0x1] %vm818, %v884
    %907 = vst.msk [vmem:[#allocation2 + $0x21] sm:$0x1] %vm818, %v886
    %908 = vst.msk [vmem:[#allocation2 + $0x25] sm:$0x1] %vm818, %v888
    %909 = vrot.lane.b32.xlu0 %v832, 112
    %v910 = vpop.permute.xlu0 %909
    %911 = vrot.lane.b32.xlu0 %v836, 112
    %v912 = vpop.permute.xlu0 %911
    %913 = vrot.lane.b32.xlu0 %v840, 112
    %v914 = vpop.permute.xlu0 %913
    %915 = vrot.lane.b32.xlu0 %v844, 112
    %v916 = vpop.permute.xlu0 %915
    %917 = vrot.lane.b32.xlu0 %v848, 112
    %v918 = vpop.permute.xlu0 %917
    %919 = vrot.lane.b32.xlu0 %v852, 112
    %v920 = vpop.permute.xlu0 %919
    %921 = vrot.lane.b32.xlu0 %v856, 112
    %v922 = vpop.permute.xlu0 %921
    %923 = vrot.lane.b32.xlu0 %v860, 112
    %v924 = vpop.permute.xlu0 %923
    %925 = vrot.lane.b32.xlu0 %v864, 112
    %v926 = vpop.permute.xlu0 %925
    %927 = vrot.lane.b32.xlu0 %v868, 112
    %v928 = vpop.permute.xlu0 %927
    %939 = vst.msk [vmem:[#allocation2 + $0x2] sm:$0x1] %vm818, %v910
    %940 = vst.msk [vmem:[#allocation2 + $0x6] sm:$0x1] %vm818, %v912
    %941 = vst.msk [vmem:[#allocation2 + $0xa] sm:$0x1] %vm818, %v914
    %942 = vst.msk [vmem:[#allocation2 + $0xe] sm:$0x1] %vm818, %v916
    %943 = vst.msk [vmem:[#allocation2 + $0x12] sm:$0x1] %vm818, %v918
    %944 = vst.msk [vmem:[#allocation2 + $0x16] sm:$0x1] %vm818, %v920
    %945 = vst.msk [vmem:[#allocation2 + $0x1a] sm:$0x1] %vm818, %v922
    %946 = vst.msk [vmem:[#allocation2 + $0x1e] sm:$0x1] %vm818, %v924
    %947 = vst.msk [vmem:[#allocation2 + $0x22] sm:$0x1] %vm818, %v926
    %948 = vst.msk [vmem:[#allocation2 + $0x26] sm:$0x1] %vm818, %v928
    %949 = vrot.lane.b32.xlu0 %v832, 104
    %v950 = vpop.permute.xlu0 %949
    %951 = vrot.lane.b32.xlu0 %v836, 104
    %v952 = vpop.permute.xlu0 %951
    %953 = vrot.lane.b32.xlu0 %v840, 104
    %v954 = vpop.permute.xlu0 %953
    %955 = vrot.lane.b32.xlu0 %v844, 104
    %v956 = vpop.permute.xlu0 %955
    %957 = vrot.lane.b32.xlu0 %v848, 104
    %v958 = vpop.permute.xlu0 %957
    %959 = vrot.lane.b32.xlu0 %v852, 104
    %v960 = vpop.permute.xlu0 %959
    %961 = vrot.lane.b32.xlu0 %v856, 104
    %v962 = vpop.permute.xlu0 %961
    %963 = vrot.lane.b32.xlu0 %v860, 104
    %v964 = vpop.permute.xlu0 %963
    %965 = vrot.lane.b32.xlu0 %v864, 104
    %v966 = vpop.permute.xlu0 %965
    %967 = vrot.lane.b32.xlu0 %v868, 104
    %v968 = vpop.permute.xlu0 %967
    %979 = vst.msk [vmem:[#allocation2 + $0x3] sm:$0x1] %vm818, %v950
    %980 = vst.msk [vmem:[#allocation2 + $0x7] sm:$0x1] %vm818, %v952
    %981 = vst.msk [vmem:[#allocation2 + $0xb] sm:$0x1] %vm818, %v954
    %982 = vst.msk [vmem:[#allocation2 + $0xf] sm:$0x1] %vm818, %v956
    %983 = vst.msk [vmem:[#allocation2 + $0x13] sm:$0x1] %vm818, %v958
    %984 = vst.msk [vmem:[#allocation2 + $0x17] sm:$0x1] %vm818, %v960
    %985 = vst.msk [vmem:[#allocation2 + $0x1b] sm:$0x1] %vm818, %v962
    %986 = vst.msk [vmem:[#allocation2 + $0x1f] sm:$0x1] %vm818, %v964
    %987 = vst.msk [vmem:[#allocation2 + $0x23] sm:$0x1] %vm818, %v966
    %988 = vst.msk [vmem:[#allocation2 + $0x27] sm:$0x1] %vm818, %v968
    %v989 = vld [vmem:[#allocation2] sm:$0xf]
    %v990 = vld [vmem:[#allocation2 + $0x4] sm:$0xf]
    %v991 = vld [vmem:[#allocation2 + $0x8] sm:$0xf]
    %v992 = vld [vmem:[#allocation2 + $0xc] sm:$0xf]
    %v993 = vld [vmem:[#allocation2 + $0x10] sm:$0xf]
    %v994 = vld [vmem:[#allocation2 + $0x14] sm:$0xf]
    %v995 = vld [vmem:[#allocation2 + $0x18] sm:$0xf]
    %v996 = vld [vmem:[#allocation2 + $0x1c] sm:$0xf]
    %v997 = vld [vmem:[#allocation2 + $0x20] sm:$0xf]
    %v998 = vld [vmem:[#allocation2 + $0x24] sm:$0xf]
    %v1009 = vcombine.low %v989, %v990
    %v1010 = vcombine.low %v991, %v992
    %v1011 = vcombine.low %v994, %v995
    %v1012 = vcombine.low %v996, %v997
    %vm1013 = vcmask 1045504
    %v1014 = vrot.slane %v1009, 2
    %v1015 = vrot.slane %v1010, 2
    %v1016 = vsel %vm1013, %v1014, %v1015
    %v1017 = vrot.slane %v993, 2
    %v1018 = vsel %vm1013, %v1015, %v1017
    %v1019 = vrot.slane %v1011, 2
    %v1020 = vrot.slane %v1012, 2
    %v1021 = vsel %vm1013, %v1019, %v1020
    %v1022 = vrot.slane %v998, 2
    %v1023 = vsel %vm1013, %v1020, %v1022
    %vm1028 = vcmask 64512
    %v1029 = vsel %vm1028, %v1016, 0.0
    %v1030 = vsel %vm1028, %v1018, 0.0
    %v1031 = vadd.f32 %v1029, %v1030
    %v1032 = vrot.slane %v1031, 4
    %v1033 = vadd.f32 %v1031, %v1032
    %v1034 = vrot.slane %v1033, 2
    %v1035 = vadd.f32 %v1033, %v1034
    %v1036 = vrot.slane %v1035, 1
    %v1037 = vadd.f32 %v1035, %v1036
    %v1038 = vsel %vm1028, %v1021, 0.0
    %v1039 = vsel %vm1028, %v1023, 0.0
    %v1040 = vadd.f32 %v1038, %v1039
    %v1041 = vrot.slane %v1040, 4
    %v1042 = vadd.f32 %v1040, %v1041
    %v1043 = vrot.slane %v1042, 2
    %v1044 = vadd.f32 %v1042, %v1043
    %v1045 = vrot.slane %v1044, 1
    %v1046 = vadd.f32 %v1044, %v1045
    %v1047 = vsel %vm1028, %v1037, 0.0
    %v1048 = vsel %vm1028, %v1046, 0.0
    %v1049 = vadd.f32 %v1047, %v1048
    %v1050 = vmul.f32 %v989, %v989
    %v1051 = vmul.f32 %v990, %v990
    %v1052 = vmul.f32 %v991, %v991
    %v1053 = vmul.f32 %v992, %v992
    %v1054 = vmul.f32 %v993, %v993
    %v1055 = vmul.f32 %v994, %v994
    %v1056 = vmul.f32 %v995, %v995
    %v1057 = vmul.f32 %v996, %v996
    %v1058 = vmul.f32 %v997, %v997
    %v1059 = vmul.f32 %v998, %v998
    %v1070 = vcombine.low %v1050, %v1051
    %v1071 = vcombine.low %v1052, %v1053
    %v1072 = vcombine.low %v1055, %v1056
    %v1073 = vcombine.low %v1057, %v1058
    %v1074 = vrot.slane %v1070, 2
    %v1075 = vrot.slane %v1071, 2
    %v1076 = vsel %vm1013, %v1074, %v1075
    %v1077 = vrot.slane %v1054, 2
    %v1078 = vsel %vm1013, %v1075, %v1077
    %v1079 = vrot.slane %v1072, 2
    %v1080 = vrot.slane %v1073, 2
    %v1081 = vsel %vm1013, %v1079, %v1080
    %v1082 = vrot.slane %v1059, 2
    %v1083 = vsel %vm1013, %v1080, %v1082
    %v1088 = vsel %vm1028, %v1076, 0.0
    %v1089 = vsel %vm1028, %v1078, 0.0
    %v1090 = vadd.f32 %v1088, %v1089
    %v1091 = vrot.slane %v1090, 4
    %v1092 = vadd.f32 %v1090, %v1091
    %v1093 = vrot.slane %v1092, 2
    %v1094 = vadd.f32 %v1092, %v1093
    %v1095 = vrot.slane %v1094, 1
    %v1096 = vadd.f32 %v1094, %v1095
    %v1097 = vsel %vm1028, %v1081, 0.0
    %v1098 = vsel %vm1028, %v1083, 0.0
    %v1099 = vadd.f32 %v1097, %v1098
    %v1100 = vrot.slane %v1099, 4
    %v1101 = vadd.f32 %v1099, %v1100
    %v1102 = vrot.slane %v1101, 2
    %v1103 = vadd.f32 %v1101, %v1102
    %v1104 = vrot.slane %v1103, 1
    %v1105 = vadd.f32 %v1103, %v1104
    %v1106 = vsel %vm1028, %v1096, 0.0
    %v1107 = vsel %vm1028, %v1105, 0.0
    %v1108 = vadd.f32 %v1106, %v1107
    %v1109 = vmul.f32 %v1049, 0.03125
    %v1110 = vmul.f32 %v1108, 0.03125
    %v1111 = vmul.f32 %v1109, %v1109
    %v1112 = vsub.f32 %v1110, %v1111
    %v1113 = vadd.f32 %v1112, 1e-05
    %v1114 = vrsqrt.pop %v1113
    %v1116 = vcombine.high %v1109, %v1109
    %vm1117 = vcmask 1045508
    %vm1118 = vmor %vm253, %vm1117
    %v1119 = vrot.slane %v1109, 6
    %v1120 = vrot.slane %v1119, 4
    %v1121 = vrot.slane %v1116, 6
    %v1122 = vsel %vm1118, %v1120, %v1121
    %v1123 = vrot.slane %v1121, 4
    %v1124 = vsel %vm1118, %v1123, %v1119
    %v1129 = vsub.f32 %v989, %v1119
    %v1130 = vsub.f32 %v990, %v1122
    %v1131 = vsub.f32 %v991, %v1124
    %v1132 = vsub.f32 %v992, %v1122
    %v1133 = vsub.f32 %v993, %v1123
    %v1134 = vsub.f32 %v994, %v1119
    %v1135 = vsub.f32 %v995, %v1122
    %v1136 = vsub.f32 %v996, %v1124
    %v1137 = vsub.f32 %v997, %v1122
    %v1138 = vsub.f32 %v998, %v1123
    %v1139 = vld [vmem:[#allocation13] sm:$0x1]
    %v1140 = vmul.f32 %v1114, %v1139
    %v1141 = vlaneseq
    %v1142 = vshrl.u32 %v1141, 7
    %v1143 = vsub.s32 0, %v1142
    %v1144 = vrot.slane %v1140, %v1143
    %v1146 = vcombine.high %v1144, %v1144
    %v1147 = vrot.slane %v1144, 6
    %v1148 = vrot.slane %v1147, 4
    %v1149 = vrot.slane %v1146, 6
    %v1150 = vsel %vm1118, %v1148, %v1149
    %v1151 = vrot.slane %v1149, 4
    %v1152 = vsel %vm1118, %v1151, %v1147
    %v1157 = vmul.f32 %v1129, %v1147
    %v1158 = vmul.f32 %v1130, %v1150
    %v1159 = vmul.f32 %v1131, %v1152
    %v1160 = vmul.f32 %v1132, %v1150
    %v1161 = vmul.f32 %v1133, %v1151
    %v1162 = vmul.f32 %v1134, %v1147
    %v1163 = vmul.f32 %v1135, %v1150
    %v1164 = vmul.f32 %v1136, %v1152
    %v1165 = vmul.f32 %v1137, %v1150
    %v1166 = vmul.f32 %v1138, %v1151
    %v1167 = vld [vmem:[%s7] sm:$0x1]
    %v1169 = vlaneseq
    %v1170 = vshrl.u32 %v1169, 7
    %v1171 = vsub.s32 0, %v1170
    %v1172 = vrot.slane %v1167, %v1171
    %v1173 = vcombine.high %v1172, %v1172
    %v1174 = vrot.slane %v1172, 6
    %v1175 = vrot.slane %v1174, 4
    %v1176 = vrot.slane %v1173, 6
    %v1177 = vsel %vm1118, %v1175, %v1176
    %v1178 = vrot.slane %v1176, 4
    %v1179 = vsel %vm1118, %v1178, %v1174
    %v1184 = vadd.f32 %v1157, %v1174
    %v1185 = vadd.f32 %v1158, %v1177
    %v1186 = vadd.f32 %v1159, %v1179
    %v1187 = vadd.f32 %v1160, %v1177
    %v1188 = vadd.f32 %v1161, %v1178
    %v1189 = vadd.f32 %v1162, %v1174
    %v1190 = vadd.f32 %v1163, %v1177
    %v1191 = vadd.f32 %v1164, %v1179
    %v1192 = vadd.f32 %v1165, %v1177
    %v1193 = vadd.f32 %v1166, %v1178
    %v1204 = vcombine.low %v1184, %v1185
    %v1205 = vcombine.low %v1186, %v1187
    %v1206 = vcombine.low %v1189, %v1190
    %v1207 = vcombine.low %v1191, %v1192
    %v1208 = vrot.slane %v1204, 2
    %v1209 = vrot.slane %v1205, 2
    %v1210 = vsel %vm1013, %v1208, %v1209
    %v1211 = vrot.slane %v1188, 2
    %v1212 = vsel %vm1013, %v1209, %v1211
    %v1213 = vrot.slane %v1206, 2
    %v1214 = vrot.slane %v1207, 2
    %v1215 = vsel %vm1013, %v1213, %v1214
    %v1216 = vrot.slane %v1193, 2
    %v1217 = vsel %vm1013, %v1214, %v1216
    %v1219 = vcombine.high %v1210, %v1210
    %v1221 = vunpack.c.l.s4 1966171168
    %v1222 = vunpack.c.0.s8 %v1221
    %v1223 = vlaneseq
    %v1224 = vshrl.u32 %v1223, 7
    %v1225 = vsub.s32 %v1222, %v1224
    %v1226 = vrot.slane %v1210, %v1225
    %v1228 = vunpack.c.l.s4 1966171168
    %v1229 = vunpack.c.0.s8 %v1228
    %v1230 = vlaneseq
    %v1231 = vshrl.u32 %v1230, 7
    %v1232 = vsub.s32 %v1229, %v1231
    %v1233 = vrot.slane %v1219, %v1232
    %v1234 = vcombine.high %v1226, %v1226
    %v1235 = vcombine.high %v1233, %v1233
    %v1237 = vunpack.c.l.s4 1966171168
    %v1238 = vunpack.c.0.s8 %v1237
    %v1239 = vlaneseq
    %v1240 = vshrl.u32 %v1239, 7
    %v1241 = vsub.s32 %v1238, %v1240
    %v1242 = vrot.slane %v1226, %v1241
    %v1244 = vunpack.c.l.s4 1966171168
    %v1245 = vunpack.c.0.s8 %v1244
    %v1246 = vlaneseq
    %v1247 = vshrl.u32 %v1246, 7
    %v1248 = vsub.s32 %v1245, %v1247
    %v1249 = vrot.slane %v1233, %v1248
    %v1251 = vunpack.c.l.s4 1966171168
    %v1252 = vunpack.c.0.s8 %v1251
    %v1253 = vlaneseq
    %v1254 = vshrl.u32 %v1253, 7
    %v1255 = vsub.s32 %v1252, %v1254
    %v1256 = vrot.slane %v1234, %v1255
    %v1258 = vunpack.c.l.s4 1966171168
    %v1259 = vunpack.c.0.s8 %v1258
    %v1260 = vlaneseq
    %v1261 = vshrl.u32 %v1260, 7
    %v1262 = vsub.s32 %v1259, %v1261
    %v1263 = vrot.slane %v1235, %v1262
    %v1264 = vcombine.high %v1242, %v1242
    %v1265 = vcombine.high %v1249, %v1249
    %v1266 = vcombine.high %v1256, %v1256
    %v1267 = vcombine.high %v1263, %v1263
    %v1268 = vcombine.high %v1212, %v1212
    %v1270 = vunpack.c.l.s4 1966171168
    %v1271 = vunpack.c.0.s8 %v1270
    %v1272 = vlaneseq
    %v1273 = vshrl.u32 %v1272, 7
    %v1274 = vsub.s32 %v1271, %v1273
    %v1275 = vrot.slane %v1212, %v1274
    %v1277 = vunpack.c.l.s4 1966171168
    %v1278 = vunpack.c.0.s8 %v1277
    %v1279 = vlaneseq
    %v1280 = vshrl.u32 %v1279, 7
    %v1281 = vsub.s32 %v1278, %v1280
    %v1282 = vrot.slane %v1268, %v1281
    %v1283 = vcombine.high %v1275, %v1275
    %v1284 = vcombine.high %v1282, %v1282
    %v1286 = vunpack.c.l.s4 1966171168
    %v1287 = vunpack.c.0.s8 %v1286
    %v1288 = vlaneseq
    %v1289 = vshrl.u32 %v1288, 7
    %v1290 = vsub.s32 %v1287, %v1289
    %v1291 = vrot.slane %v1275, %v1290
    %v1293 = vunpack.c.l.s4 1966171168
    %v1294 = vunpack.c.0.s8 %v1293
    %v1295 = vlaneseq
    %v1296 = vshrl.u32 %v1295, 7
    %v1297 = vsub.s32 %v1294, %v1296
    %v1298 = vrot.slane %v1282, %v1297
    %v1300 = vunpack.c.l.s4 1966171168
    %v1301 = vunpack.c.0.s8 %v1300
    %v1302 = vlaneseq
    %v1303 = vshrl.u32 %v1302, 7
    %v1304 = vsub.s32 %v1301, %v1303
    %v1305 = vrot.slane %v1283, %v1304
    %v1307 = vunpack.c.l.s4 1966171168
    %v1308 = vunpack.c.0.s8 %v1307
    %v1309 = vlaneseq
    %v1310 = vshrl.u32 %v1309, 7
    %v1311 = vsub.s32 %v1308, %v1310
    %v1312 = vrot.slane %v1284, %v1311
    %v1313 = vcombine.high %v1291, %v1291
    %v1314 = vcombine.high %v1298, %v1298
    %v1315 = vcombine.high %v1305, %v1305
    %v1316 = vcombine.high %v1312, %v1312
    %v1318 = vunpack.c.l.s4 1966171168
    %v1319 = vunpack.c.0.s8 %v1318
    %v1320 = vlaneseq
    %v1321 = vshrl.u32 %v1320, 7
    %v1322 = vsub.s32 %v1319, %v1321
    %v1323 = vrot.slane 0.0, %v1322
    %v1325 = vunpack.c.l.s4 1966171168
    %v1326 = vunpack.c.0.s8 %v1325
    %v1327 = vlaneseq
    %v1328 = vshrl.u32 %v1327, 7
    %v1329 = vsub.s32 %v1326, %v1328
    %v1330 = vrot.slane %v1323, %v1329
    %v1331 = vcombine.high %v1215, %v1215
    %v1333 = vunpack.c.l.s4 1966171168
    %v1334 = vunpack.c.0.s8 %v1333
    %v1335 = vlaneseq
    %v1336 = vshrl.u32 %v1335, 7
    %v1337 = vsub.s32 %v1334, %v1336
    %v1338 = vrot.slane %v1215, %v1337
    %v1340 = vunpack.c.l.s4 1966171168
    %v1341 = vunpack.c.0.s8 %v1340
    %v1342 = vlaneseq
    %v1343 = vshrl.u32 %v1342, 7
    %v1344 = vsub.s32 %v1341, %v1343
    %v1345 = vrot.slane %v1331, %v1344
    %v1346 = vcombine.high %v1338, %v1338
    %v1347 = vcombine.high %v1345, %v1345
    %v1349 = vunpack.c.l.s4 1966171168
    %v1350 = vunpack.c.0.s8 %v1349
    %v1351 = vlaneseq
    %v1352 = vshrl.u32 %v1351, 7
    %v1353 = vsub.s32 %v1350, %v1352
    %v1354 = vrot.slane %v1338, %v1353
    %v1356 = vunpack.c.l.s4 1966171168
    %v1357 = vunpack.c.0.s8 %v1356
    %v1358 = vlaneseq
    %v1359 = vshrl.u32 %v1358, 7
    %v1360 = vsub.s32 %v1357, %v1359
    %v1361 = vrot.slane %v1345, %v1360
    %v1363 = vunpack.c.l.s4 1966171168
    %v1364 = vunpack.c.0.s8 %v1363
    %v1365 = vlaneseq
    %v1366 = vshrl.u32 %v1365, 7
    %v1367 = vsub.s32 %v1364, %v1366
    %v1368 = vrot.slane %v1346, %v1367
    %v1370 = vunpack.c.l.s4 1966171168
    %v1371 = vunpack.c.0.s8 %v1370
    %v1372 = vlaneseq
    %v1373 = vshrl.u32 %v1372, 7
    %v1374 = vsub.s32 %v1371, %v1373
    %v1375 = vrot.slane %v1347, %v1374
    %v1376 = vcombine.high %v1354, %v1354
    %v1377 = vcombine.high %v1361, %v1361
    %v1378 = vcombine.high %v1368, %v1368
    %v1379 = vcombine.high %v1375, %v1375
    %v1380 = vcombine.high %v1217, %v1217
    %v1382 = vunpack.c.l.s4 1966171168
    %v1383 = vunpack.c.0.s8 %v1382
    %v1384 = vlaneseq
    %v1385 = vshrl.u32 %v1384, 7
    %v1386 = vsub.s32 %v1383, %v1385
    %v1387 = vrot.slane %v1217, %v1386
    %v1389 = vunpack.c.l.s4 1966171168
    %v1390 = vunpack.c.0.s8 %v1389
    %v1391 = vlaneseq
    %v1392 = vshrl.u32 %v1391, 7
    %v1393 = vsub.s32 %v1390, %v1392
    %v1394 = vrot.slane %v1380, %v1393
    %v1395 = vcombine.high %v1387, %v1387
    %v1396 = vcombine.high %v1394, %v1394
    %v1398 = vunpack.c.l.s4 1966171168
    %v1399 = vunpack.c.0.s8 %v1398
    %v1400 = vlaneseq
    %v1401 = vshrl.u32 %v1400, 7
    %v1402 = vsub.s32 %v1399, %v1401
    %v1403 = vrot.slane %v1387, %v1402
    %v1405 = vunpack.c.l.s4 1966171168
    %v1406 = vunpack.c.0.s8 %v1405
    %v1407 = vlaneseq
    %v1408 = vshrl.u32 %v1407, 7
    %v1409 = vsub.s32 %v1406, %v1408
    %v1410 = vrot.slane %v1394, %v1409
    %v1412 = vunpack.c.l.s4 1966171168
    %v1413 = vunpack.c.0.s8 %v1412
    %v1414 = vlaneseq
    %v1415 = vshrl.u32 %v1414, 7
    %v1416 = vsub.s32 %v1413, %v1415
    %v1417 = vrot.slane %v1395, %v1416
    %v1419 = vunpack.c.l.s4 1966171168
    %v1420 = vunpack.c.0.s8 %v1419
    %v1421 = vlaneseq
    %v1422 = vshrl.u32 %v1421, 7
    %v1423 = vsub.s32 %v1420, %v1422
    %v1424 = vrot.slane %v1396, %v1423
    %v1425 = vcombine.high %v1403, %v1403
    %v1426 = vcombine.high %v1410, %v1410
    %v1427 = vcombine.high %v1417, %v1417
    %v1428 = vcombine.high %v1424, %v1424
    %vm1429 = vcmask 1046528
    %v1430 = vrot.slane %v1204, 1
    %v1431 = vrot.slane %v1205, 1
    %v1432 = vsel %vm1429, %v1430, %v1431
    %v1433 = vrot.slane %v1188, 1
    %v1434 = vsel %vm1429, %v1431, %v1433
    %v1435 = vrot.slane %v1206, 1
    %v1436 = vrot.slane %v1207, 1
    %v1437 = vsel %vm1429, %v1435, %v1436
    %v1438 = vrot.slane %v1193, 1
    %v1439 = vsel %vm1429, %v1436, %v1438
    %v1442 = vsel %vm250, 0.0, %v1432
    %v1443 = vsel %vm250, 0.0, %v1437
    %v1446 = vcombine.high %v1442, %v1442
    %v1448 = vunpack.c.l.s4 1966171168
    %v1449 = vunpack.c.0.s8 %v1448
    %v1450 = vlaneseq
    %v1451 = vshrl.u32 %v1450, 7
    %v1452 = vsub.s32 %v1449, %v1451
    %v1453 = vrot.slane %v1442, %v1452
    %v1455 = vunpack.c.l.s4 1966171168
    %v1456 = vunpack.c.0.s8 %v1455
    %v1457 = vlaneseq
    %v1458 = vshrl.u32 %v1457, 7
    %v1459 = vsub.s32 %v1456, %v1458
    %v1460 = vrot.slane %v1446, %v1459
    %v1461 = vcombine.high %v1453, %v1453
    %v1462 = vcombine.high %v1460, %v1460
    %v1464 = vunpack.c.l.s4 1966171168
    %v1465 = vunpack.c.0.s8 %v1464
    %v1466 = vlaneseq
    %v1467 = vshrl.u32 %v1466, 7
    %v1468 = vsub.s32 %v1465, %v1467
    %v1469 = vrot.slane %v1453, %v1468
    %v1471 = vunpack.c.l.s4 1966171168
    %v1472 = vunpack.c.0.s8 %v1471
    %v1473 = vlaneseq
    %v1474 = vshrl.u32 %v1473, 7
    %v1475 = vsub.s32 %v1472, %v1474
    %v1476 = vrot.slane %v1460, %v1475
    %v1478 = vunpack.c.l.s4 1966171168
    %v1479 = vunpack.c.0.s8 %v1478
    %v1480 = vlaneseq
    %v1481 = vshrl.u32 %v1480, 7
    %v1482 = vsub.s32 %v1479, %v1481
    %v1483 = vrot.slane %v1461, %v1482
    %v1485 = vunpack.c.l.s4 1966171168
    %v1486 = vunpack.c.0.s8 %v1485
    %v1487 = vlaneseq
    %v1488 = vshrl.u32 %v1487, 7
    %v1489 = vsub.s32 %v1486, %v1488
    %v1490 = vrot.slane %v1462, %v1489
    %v1491 = vcombine.high %v1469, %v1469
    %v1492 = vcombine.high %v1476, %v1476
    %v1493 = vcombine.high %v1483, %v1483
    %v1494 = vcombine.high %v1490, %v1490
    %v1495 = vcombine.high %v1434, %v1434
    %v1497 = vunpack.c.l.s4 1966171168
    %v1498 = vunpack.c.0.s8 %v1497
    %v1499 = vlaneseq
    %v1500 = vshrl.u32 %v1499, 7
    %v1501 = vsub.s32 %v1498, %v1500
    %v1502 = vrot.slane %v1434, %v1501
    %v1504 = vunpack.c.l.s4 1966171168
    %v1505 = vunpack.c.0.s8 %v1504
    %v1506 = vlaneseq
    %v1507 = vshrl.u32 %v1506, 7
    %v1508 = vsub.s32 %v1505, %v1507
    %v1509 = vrot.slane %v1495, %v1508
    %v1510 = vcombine.high %v1502, %v1502
    %v1511 = vcombine.high %v1509, %v1509
    %v1513 = vunpack.c.l.s4 1966171168
    %v1514 = vunpack.c.0.s8 %v1513
    %v1515 = vlaneseq
    %v1516 = vshrl.u32 %v1515, 7
    %v1517 = vsub.s32 %v1514, %v1516
    %v1518 = vrot.slane %v1502, %v1517
    %v1520 = vunpack.c.l.s4 1966171168
    %v1521 = vunpack.c.0.s8 %v1520
    %v1522 = vlaneseq
    %v1523 = vshrl.u32 %v1522, 7
    %v1524 = vsub.s32 %v1521, %v1523
    %v1525 = vrot.slane %v1509, %v1524
    %v1527 = vunpack.c.l.s4 1966171168
    %v1528 = vunpack.c.0.s8 %v1527
    %v1529 = vlaneseq
    %v1530 = vshrl.u32 %v1529, 7
    %v1531 = vsub.s32 %v1528, %v1530
    %v1532 = vrot.slane %v1510, %v1531
    %v1534 = vunpack.c.l.s4 1966171168
    %v1535 = vunpack.c.0.s8 %v1534
    %v1536 = vlaneseq
    %v1537 = vshrl.u32 %v1536, 7
    %v1538 = vsub.s32 %v1535, %v1537
    %v1539 = vrot.slane %v1511, %v1538
    %v1540 = vcombine.high %v1518, %v1518
    %v1541 = vcombine.high %v1525, %v1525
    %v1542 = vcombine.high %v1532, %v1532
    %v1543 = vcombine.high %v1539, %v1539
    %v1545 = vunpack.c.l.s4 1966171168
    %v1546 = vunpack.c.0.s8 %v1545
    %v1547 = vlaneseq
    %v1548 = vshrl.u32 %v1547, 7
    %v1549 = vsub.s32 %v1546, %v1548
    %v1550 = vrot.slane %v1433, %v1549
    %v1552 = vunpack.c.l.s4 1966171168
    %v1553 = vunpack.c.0.s8 %v1552
    %v1554 = vlaneseq
    %v1555 = vshrl.u32 %v1554, 7
    %v1556 = vsub.s32 %v1553, %v1555
    %v1557 = vrot.slane %v1550, %v1556
    %v1558 = vcombine.high %v1443, %v1443
    %v1560 = vunpack.c.l.s4 1966171168
    %v1561 = vunpack.c.0.s8 %v1560
    %v1562 = vlaneseq
    %v1563 = vshrl.u32 %v1562, 7
    %v1564 = vsub.s32 %v1561, %v1563
    %v1565 = vrot.slane %v1443, %v1564
    %v1567 = vunpack.c.l.s4 1966171168
    %v1568 = vunpack.c.0.s8 %v1567
    %v1569 = vlaneseq
    %v1570 = vshrl.u32 %v1569, 7
    %v1571 = vsub.s32 %v1568, %v1570
    %v1572 = vrot.slane %v1558, %v1571
    %v1573 = vcombine.high %v1565, %v1565
    %v1574 = vcombine.high %v1572, %v1572
    %v1576 = vunpack.c.l.s4 1966171168
    %v1577 = vunpack.c.0.s8 %v1576
    %v1578 = vlaneseq
    %v1579 = vshrl.u32 %v1578, 7
    %v1580 = vsub.s32 %v1577, %v1579
    %v1581 = vrot.slane %v1565, %v1580
    %v1583 = vunpack.c.l.s4 1966171168
    %v1584 = vunpack.c.0.s8 %v1583
    %v1585 = vlaneseq
    %v1586 = vshrl.u32 %v1585, 7
    %v1587 = vsub.s32 %v1584, %v1586
    %v1588 = vrot.slane %v1572, %v1587
    %v1590 = vunpack.c.l.s4 1966171168
    %v1591 = vunpack.c.0.s8 %v1590
    %v1592 = vlaneseq
    %v1593 = vshrl.u32 %v1592, 7
    %v1594 = vsub.s32 %v1591, %v1593
    %v1595 = vrot.slane %v1573, %v1594
    %v1597 = vunpack.c.l.s4 1966171168
    %v1598 = vunpack.c.0.s8 %v1597
    %v1599 = vlaneseq
    %v1600 = vshrl.u32 %v1599, 7
    %v1601 = vsub.s32 %v1598, %v1600
    %v1602 = vrot.slane %v1574, %v1601
    %v1603 = vcombine.high %v1581, %v1581
    %v1604 = vcombine.high %v1588, %v1588
    %v1605 = vcombine.high %v1595, %v1595
    %v1606 = vcombine.high %v1602, %v1602
    %v1607 = vcombine.high %v1439, %v1439
    %v1609 = vunpack.c.l.s4 1966171168
    %v1610 = vunpack.c.0.s8 %v1609
    %v1611 = vlaneseq
    %v1612 = vshrl.u32 %v1611, 7
    %v1613 = vsub.s32 %v1610, %v1612
    %v1614 = vrot.slane %v1439, %v1613
    %v1616 = vunpack.c.l.s4 1966171168
    %v1617 = vunpack.c.0.s8 %v1616
    %v1618 = vlaneseq
    %v1619 = vshrl.u32 %v1618, 7
    %v1620 = vsub.s32 %v1617, %v1619
    %v1621 = vrot.slane %v1607, %v1620
    %v1622 = vcombine.high %v1614, %v1614
    %v1623 = vcombine.high %v1621, %v1621
    %v1625 = vunpack.c.l.s4 1966171168
    %v1626 = vunpack.c.0.s8 %v1625
    %v1627 = vlaneseq
    %v1628 = vshrl.u32 %v1627, 7
    %v1629 = vsub.s32 %v1626, %v1628
    %v1630 = vrot.slane %v1614, %v1629
    %v1632 = vunpack.c.l.s4 1966171168
    %v1633 = vunpack.c.0.s8 %v1632
    %v1634 = vlaneseq
    %v1635 = vshrl.u32 %v1634, 7
    %v1636 = vsub.s32 %v1633, %v1635
    %v1637 = vrot.slane %v1621, %v1636
    %v1639 = vunpack.c.l.s4 1966171168
    %v1640 = vunpack.c.0.s8 %v1639
    %v1641 = vlaneseq
    %v1642 = vshrl.u32 %v1641, 7
    %v1643 = vsub.s32 %v1640, %v1642
    %v1644 = vrot.slane %v1622, %v1643
    %v1646 = vunpack.c.l.s4 1966171168
    %v1647 = vunpack.c.0.s8 %v1646
    %v1648 = vlaneseq
    %v1649 = vshrl.u32 %v1648, 7
    %v1650 = vsub.s32 %v1647, %v1649
    %v1651 = vrot.slane %v1623, %v1650
    %v1652 = vcombine.high %v1630, %v1630
    %v1653 = vcombine.high %v1637, %v1637
    %v1654 = vcombine.high %v1644, %v1644
    %v1655 = vcombine.high %v1651, %v1651
    %v1657 = vunpack.c.l.s4 1966171168
    %v1658 = vunpack.c.0.s8 %v1657
    %v1659 = vlaneseq
    %v1660 = vshrl.u32 %v1659, 7
    %v1661 = vsub.s32 %v1658, %v1660
    %v1662 = vrot.slane %v1438, %v1661
    %v1664 = vunpack.c.l.s4 1966171168
    %v1665 = vunpack.c.0.s8 %v1664
    %v1666 = vlaneseq
    %v1667 = vshrl.u32 %v1666, 7
    %v1668 = vsub.s32 %v1665, %v1667
    %v1669 = vrot.slane %v1662, %v1668
    %v1670 = vld [vmem:[%s8] sm:$0xff]
    %v1671 = vld [vmem:[%s9] sm:$0xff]
    %v1672 = vcombine.low %v1469, %v1483
    %v1673 = vcombine.low %v1491, %v1493
    %v1674 = vcombine.low %v1476, %v1490
    %v1675 = vcombine.low %v1492, %v1494
    %v1677 = vunpack.c.l.s4 1966171168
    %v1678 = vunpack.c.0.s8 %v1677
    %v1679 = vlaneseq
    %v1680 = vshrl.u32 %v1679, 7
    %v1681 = vsub.s32 %v1678, %v1680
    %v1682 = vrot.slane %v1672, %v1681
    %v1684 = vunpack.c.l.s4 1966171168
    %v1685 = vunpack.c.0.s8 %v1684
    %v1686 = vlaneseq
    %v1687 = vshrl.u32 %v1686, 7
    %v1688 = vsub.s32 %v1685, %v1687
    %v1689 = vrot.slane %v1673, %v1688
    %v1691 = vunpack.c.l.s4 1966171168
    %v1692 = vunpack.c.0.s8 %v1691
    %v1693 = vlaneseq
    %v1694 = vshrl.u32 %v1693, 7
    %v1695 = vsub.s32 %v1692, %v1694
    %v1696 = vrot.slane %v1674, %v1695
    %v1698 = vunpack.c.l.s4 1966171168
    %v1699 = vunpack.c.0.s8 %v1698
    %v1700 = vlaneseq
    %v1701 = vshrl.u32 %v1700, 7
    %v1702 = vsub.s32 %v1699, %v1701
    %v1703 = vrot.slane %v1675, %v1702
    %v1704 = vcombine.low %v1682, %v1689
    %v1705 = vcombine.low %v1696, %v1703
    %v1707 = vunpack.c.l.s4 1966171168
    %v1708 = vunpack.c.0.s8 %v1707
    %v1709 = vlaneseq
    %v1710 = vshrl.u32 %v1709, 7
    %v1711 = vsub.s32 %v1708, %v1710
    %v1712 = vrot.slane %v1704, %v1711
    %v1714 = vunpack.c.l.s4 1966171168
    %v1715 = vunpack.c.0.s8 %v1714
    %v1716 = vlaneseq
    %v1717 = vshrl.u32 %v1716, 7
    %v1718 = vsub.s32 %v1715, %v1717
    %v1719 = vrot.slane %v1705, %v1718
    %v1720 = vcombine.low %v1712, %v1719
    %v1721 = vcombine.low %v1518, %v1532
    %v1722 = vcombine.low %v1540, %v1542
    %v1723 = vcombine.low %v1525, %v1539
    %v1724 = vcombine.low %v1541, %v1543
    %v1726 = vunpack.c.l.s4 1966171168
    %v1727 = vunpack.c.0.s8 %v1726
    %v1728 = vlaneseq
    %v1729 = vshrl.u32 %v1728, 7
    %v1730 = vsub.s32 %v1727, %v1729
    %v1731 = vrot.slane %v1721, %v1730
    %v1733 = vunpack.c.l.s4 1966171168
    %v1734 = vunpack.c.0.s8 %v1733
    %v1735 = vlaneseq
    %v1736 = vshrl.u32 %v1735, 7
    %v1737 = vsub.s32 %v1734, %v1736
    %v1738 = vrot.slane %v1722, %v1737
    %v1740 = vunpack.c.l.s4 1966171168
    %v1741 = vunpack.c.0.s8 %v1740
    %v1742 = vlaneseq
    %v1743 = vshrl.u32 %v1742, 7
    %v1744 = vsub.s32 %v1741, %v1743
    %v1745 = vrot.slane %v1723, %v1744
    %v1747 = vunpack.c.l.s4 1966171168
    %v1748 = vunpack.c.0.s8 %v1747
    %v1749 = vlaneseq
    %v1750 = vshrl.u32 %v1749, 7
    %v1751 = vsub.s32 %v1748, %v1750
    %v1752 = vrot.slane %v1724, %v1751
    %v1753 = vcombine.low %v1731, %v1738
    %v1754 = vcombine.low %v1745, %v1752
    %v1756 = vunpack.c.l.s4 1966171168
    %v1757 = vunpack.c.0.s8 %v1756
    %v1758 = vlaneseq
    %v1759 = vshrl.u32 %v1758, 7
    %v1760 = vsub.s32 %v1757, %v1759
    %v1761 = vrot.slane %v1753, %v1760
    %v1763 = vunpack.c.l.s4 1966171168
    %v1764 = vunpack.c.0.s8 %v1763
    %v1765 = vlaneseq
    %v1766 = vshrl.u32 %v1765, 7
    %v1767 = vsub.s32 %v1764, %v1766
    %v1768 = vrot.slane %v1754, %v1767
    %v1769 = vcombine.low %v1761, %v1768
    %v1770 = vcombine.low %v1557, %v1581
    %v1771 = vcombine.low %v1595, %v1603
    %v1772 = vcombine.low %v1605, %v1588
    %v1773 = vcombine.low %v1602, %v1604
    %v1775 = vunpack.c.l.s4 1966171168
    %v1776 = vunpack.c.0.s8 %v1775
    %v1777 = vlaneseq
    %v1778 = vshrl.u32 %v1777, 7
    %v1779 = vsub.s32 %v1776, %v1778
    %v1780 = vrot.slane %v1770, %v1779
    %v1782 = vunpack.c.l.s4 1966171168
    %v1783 = vunpack.c.0.s8 %v1782
    %v1784 = vlaneseq
    %v1785 = vshrl.u32 %v1784, 7
    %v1786 = vsub.s32 %v1783, %v1785
    %v1787 = vrot.slane %v1771, %v1786
    %v1789 = vunpack.c.l.s4 1966171168
    %v1790 = vunpack.c.0.s8 %v1789
    %v1791 = vlaneseq
    %v1792 = vshrl.u32 %v1791, 7
    %v1793 = vsub.s32 %v1790, %v1792
    %v1794 = vrot.slane %v1772, %v1793
    %v1796 = vunpack.c.l.s4 1966171168
    %v1797 = vunpack.c.0.s8 %v1796
    %v1798 = vlaneseq
    %v1799 = vshrl.u32 %v1798, 7
    %v1800 = vsub.s32 %v1797, %v1799
    %v1801 = vrot.slane %v1773, %v1800
    %v1802 = vcombine.low %v1780, %v1787
    %v1803 = vcombine.low %v1794, %v1801
    %v1805 = vunpack.c.l.s4 1966171168
    %v1806 = vunpack.c.0.s8 %v1805
    %v1807 = vlaneseq
    %v1808 = vshrl.u32 %v1807, 7
    %v1809 = vsub.s32 %v1806, %v1808
    %v1810 = vrot.slane %v1802, %v1809
    %v1812 = vunpack.c.l.s4 1966171168
    %v1813 = vunpack.c.0.s8 %v1812
    %v1814 = vlaneseq
    %v1815 = vshrl.u32 %v1814, 7
    %v1816 = vsub.s32 %v1813, %v1815
    %v1817 = vrot.slane %v1803, %v1816
    %v1818 = vcombine.low %v1810, %v1817
    %v1819 = vcombine.low %v1606, %v1630
    %v1820 = vcombine.low %v1644, %v1652
    %v1821 = vcombine.low %v1654, %v1637
    %v1822 = vcombine.low %v1651, %v1653
    %v1824 = vunpack.c.l.s4 1966171168
    %v1825 = vunpack.c.0.s8 %v1824
    %v1826 = vlaneseq
    %v1827 = vshrl.u32 %v1826, 7
    %v1828 = vsub.s32 %v1825, %v1827
    %v1829 = vrot.slane %v1819, %v1828
    %v1831 = vunpack.c.l.s4 1966171168
    %v1832 = vunpack.c.0.s8 %v1831
    %v1833 = vlaneseq
    %v1834 = vshrl.u32 %v1833, 7
    %v1835 = vsub.s32 %v1832, %v1834
    %v1836 = vrot.slane %v1820, %v1835
    %v1838 = vunpack.c.l.s4 1966171168
    %v1839 = vunpack.c.0.s8 %v1838
    %v1840 = vlaneseq
    %v1841 = vshrl.u32 %v1840, 7
    %v1842 = vsub.s32 %v1839, %v1841
    %v1843 = vrot.slane %v1821, %v1842
    %v1845 = vunpack.c.l.s4 1966171168
    %v1846 = vunpack.c.0.s8 %v1845
    %v1847 = vlaneseq
    %v1848 = vshrl.u32 %v1847, 7
    %v1849 = vsub.s32 %v1846, %v1848
    %v1850 = vrot.slane %v1822, %v1849
    %v1851 = vcombine.low %v1829, %v1836
    %v1852 = vcombine.low %v1843, %v1850
    %v1854 = vunpack.c.l.s4 1966171168
    %v1855 = vunpack.c.0.s8 %v1854
    %v1856 = vlaneseq
    %v1857 = vshrl.u32 %v1856, 7
    %v1858 = vsub.s32 %v1855, %v1857
    %v1859 = vrot.slane %v1851, %v1858
    %v1861 = vunpack.c.l.s4 1966171168
    %v1862 = vunpack.c.0.s8 %v1861
    %v1863 = vlaneseq
    %v1864 = vshrl.u32 %v1863, 7
    %v1865 = vsub.s32 %v1862, %v1864
    %v1866 = vrot.slane %v1852, %v1865
    %v1867 = vcombine.low %v1859, %v1866
    %v1868 = vcombine.low %v1655, %v1669
    %v1870 = vunpack.c.l.s4 1966171168
    %v1871 = vunpack.c.0.s8 %v1870
    %v1872 = vlaneseq
    %v1873 = vshrl.u32 %v1872, 7
    %v1874 = vsub.s32 %v1871, %v1873
    %v1875 = vrot.slane %v1868, %v1874
    %v1877 = vunpack.c.l.s4 1966171168
    %v1878 = vunpack.c.0.s8 %v1877
    %v1879 = vlaneseq
    %v1880 = vshrl.u32 %v1879, 7
    %v1881 = vsub.s32 %v1878, %v1880
    %v1882 = vrot.slane %v1875, %v1881
    %v1883 = vsel %vm1028, %v1720, 0
    %v1885 = vsel %vm1028, %v1769, 0
    %v1887 = vsel %vm1028, %v1818, 0
    %v1889 = vsel %vm1028, %v1867, 0
    %v1891 = vsel %vm1028, %v1882, 0
    %1893 = vmatprep.subr.mxu0 0.0
    %1894 = vmatpush1.msra.mxu0 %v1671
    %1895 = vmatprep.subr.mxu0 0.0
    %1896 = vmatpush1.msra.mxu0 0.0
    %1897 = vmatprep.subr.mxu0 0.0
    %1898 = vmatpush1.msra.mxu0 0.0
    %1899 = vmatprep.subr.mxu0 0.0
    %1900 = vmatpush1.msra.mxu0 0.0
    %1901 = vmatprep.subr.mxu0 0.0
    %1902 = vmatpush1.msra.mxu0 0.0
    %1903 = vmatprep.subr.mxu0 0.0
    %1904 = vmatpush1.msra.mxu0 0.0
    %1905 = vmatprep.subr.mxu0 0.0
    %1906 = vmatpush1.msra.mxu0 0.0
    %1907 = vmatprep.subr.mxu0 0.0
    %1908 = vmatpush1.msra.mxu0 0.0
    %1909 = vmatprep.subr.mxu0 0.0
    %1910 = vmatpush1.msra.mxu0 0.0
    %1911 = vmatprep.subr.mxu0 0.0
    %1912 = vmatpush1.msra.mxu0 0.0
    %1913 = vmatprep.subr.mxu0 0.0
    %1914 = vmatpush1.msra.mxu0 0.0
    %1915 = vmatprep.subr.mxu0 0.0
    %1916 = vmatpush1.msra.mxu0 0.0
    %1917 = vmatprep.subr.mxu0 0.0
    %1918 = vmatpush1.msra.mxu0 0.0
    %1919 = vmatprep.subr.mxu0 0.0
    %1920 = vmatpush1.msra.mxu0 0.0
    %1921 = vmatprep.subr.mxu0 0.0
    %1922 = vmatpush1.msra.mxu0 0.0
    %1923 = vmatprep.subr.mxu0 0.0
    %1924 = vmatpush1.msra.mxu0 0.0
    %1925 = vmatprep.subr.mxu0 0.0
    %1926 = vmatpush1.msra.mxu0 0.0
    %1927 = vmatprep.subr.mxu0 0.0
    %1928 = vmatpush1.msra.mxu0 0.0
    %1929 = vmatprep.subr.mxu0 0.0
    %1930 = vmatpush1.msra.mxu0 0.0
    %1931 = vmatprep.subr.mxu0 0.0
    %1932 = vmatpush1.msra.mxu0 0.0
    %1933 = vmatprep.subr.mxu0 0.0
    %1934 = vmatpush1.msra.mxu0 0.0
    %1935 = vmatprep.subr.mxu0 0.0
    %1936 = vmatpush1.msra.mxu0 0.0
    %1937 = vmatprep.subr.mxu0 0.0
    %1938 = vmatpush1.msra.mxu0 0.0
    %1939 = vmatprep.subr.mxu0 0.0
    %1940 = vmatpush1.msra.mxu0 0.0
    %1941 = vmatprep.subr.mxu0 0.0
    %1942 = vmatpush1.msra.mxu0 0.0
    %1943 = vmatprep.subr.mxu0 0.0
    %1944 = vmatpush1.msra.mxu0 0.0
    %1945 = vmatprep.subr.mxu0 0.0
    %1946 = vmatpush1.msra.mxu0 0.0
    %1947 = vmatprep.subr.mxu0 0.0
    %1948 = vmatpush1.msra.mxu0 0.0
    %1949 = vmatprep.subr.mxu0 0.0
    %1950 = vmatpush1.msra.mxu0 0.0
    %1951 = vmatprep.subr.mxu0 0.0
    %1952 = vmatpush1.msra.mxu0 0.0
    %1953 = vmatprep.subr.mxu0 0.0
    %1954 = vmatpush1.msra.mxu0 0.0
    %1955 = vmatprep.subr.mxu0 0.0
    %1956 = vmatpush1.msra.mxu0 0.0
    %1957 = vmatprep.mubr.f32.mxu0 0.0
    %1958 = vmatmul.mubr.f32.gmra.mrb[0].mxu0 %v1883
    %v1959 = vpop.f32.mrb[0].mxu0
    %v1960 = vadd.f32 0.0, %v1959
    %v1961 = vpop.f32.mrb[0].mxu0
    %1962 = vmatprep.mubr.f32.mxu0 0.0
    %1963 = vmatmul.mubr.f32.gmra.mrb[0].mxu0 %v1885
    %v1964 = vpop.f32.mrb[0].mxu0
    %v1965 = vadd.f32 0.0, %v1964
    %v1966 = vpop.f32.mrb[0].mxu0
    %1967 = vmatprep.mubr.f32.mxu0 0.0
    %1968 = vmatmul.mubr.f32.gmra.mrb[0].mxu0 %v1887
    %v1969 = vpop.f32.mrb[0].mxu0
    %v1970 = vadd.f32 0.0, %v1969
    %v1971 = vpop.f32.mrb[0].mxu0
    %1972 = vmatprep.mubr.f32.mxu0 0.0
    %1973 = vmatmul.mubr.f32.gmra.mrb[0].mxu0 %v1889
    %v1974 = vpop.f32.mrb[0].mxu0
    %v1975 = vadd.f32 0.0, %v1974
    %v1976 = vpop.f32.mrb[0].mxu0
    %1977 = vmatprep.mubr.f32.mxu0 0.0
    %1978 = vmatmul.mubr.f32.gmra.mrb[0].mxu0 %v1891
    %v1979 = vpop.f32.mrb[0].mxu0
    %v1980 = vadd.f32 0.0, %v1979
    %v1981 = vpop.f32.mrb[0].mxu0
    %1982 = vdwg.mxu0
    %v1983 = vcombine.low %v1242, %v1256
    %v1984 = vcombine.low %v1264, %v1266
    %v1985 = vcombine.low %v1249, %v1263
    %v1986 = vcombine.low %v1265, %v1267
    %v1988 = vunpack.c.l.s4 1966171168
    %v1989 = vunpack.c.0.s8 %v1988
    %v1990 = vlaneseq
    %v1991 = vshrl.u32 %v1990, 7
    %v1992 = vsub.s32 %v1989, %v1991
    %v1993 = vrot.slane %v1983, %v1992
    %v1995 = vunpack.c.l.s4 1966171168
    %v1996 = vunpack.c.0.s8 %v1995
    %v1997 = vlaneseq
    %v1998 = vshrl.u32 %v1997, 7
    %v1999 = vsub.s32 %v1996, %v1998
    %v2000 = vrot.slane %v1984, %v1999
    %v2002 = vunpack.c.l.s4 1966171168
    %v2003 = vunpack.c.0.s8 %v2002
    %v2004 = vlaneseq
    %v2005 = vshrl.u32 %v2004, 7
    %v2006 = vsub.s32 %v2003, %v2005
    %v2007 = vrot.slane %v1985, %v2006
    %v2009 = vunpack.c.l.s4 1966171168
    %v2010 = vunpack.c.0.s8 %v2009
    %v2011 = vlaneseq
    %v2012 = vshrl.u32 %v2011, 7
    %v2013 = vsub.s32 %v2010, %v2012
    %v2014 = vrot.slane %v1986, %v2013
    %v2015 = vcombine.low %v1993, %v2000
    %v2016 = vcombine.low %v2007, %v2014
    %v2018 = vunpack.c.l.s4 1966171168
    %v2019 = vunpack.c.0.s8 %v2018
    %v2020 = vlaneseq
    %v2021 = vshrl.u32 %v2020, 7
    %v2022 = vsub.s32 %v2019, %v2021
    %v2023 = vrot.slane %v2015, %v2022
    %v2025 = vunpack.c.l.s4 1966171168
    %v2026 = vunpack.c.0.s8 %v2025
    %v2027 = vlaneseq
    %v2028 = vshrl.u32 %v2027, 7
    %v2029 = vsub.s32 %v2026, %v2028
    %v2030 = vrot.slane %v2016, %v2029
    %v2031 = vcombine.low %v2023, %v2030
    %v2032 = vcombine.low %v1291, %v1305
    %v2033 = vcombine.low %v1313, %v1315
    %v2034 = vcombine.low %v1298, %v1312
    %v2035 = vcombine.low %v1314, %v1316
    %v2037 = vunpack.c.l.s4 1966171168
    %v2038 = vunpack.c.0.s8 %v2037
    %v2039 = vlaneseq
    %v2040 = vshrl.u32 %v2039, 7
    %v2041 = vsub.s32 %v2038, %v2040
    %v2042 = vrot.slane %v2032, %v2041
    %v2044 = vunpack.c.l.s4 1966171168
    %v2045 = vunpack.c.0.s8 %v2044
    %v2046 = vlaneseq
    %v2047 = vshrl.u32 %v2046, 7
    %v2048 = vsub.s32 %v2045, %v2047
    %v2049 = vrot.slane %v2033, %v2048
    %v2051 = vunpack.c.l.s4 1966171168
    %v2052 = vunpack.c.0.s8 %v2051
    %v2053 = vlaneseq
    %v2054 = vshrl.u32 %v2053, 7
    %v2055 = vsub.s32 %v2052, %v2054
    %v2056 = vrot.slane %v2034, %v2055
    %v2058 = vunpack.c.l.s4 1966171168
    %v2059 = vunpack.c.0.s8 %v2058
    %v2060 = vlaneseq
    %v2061 = vshrl.u32 %v2060, 7
    %v2062 = vsub.s32 %v2059, %v2061
    %v2063 = vrot.slane %v2035, %v2062
    %v2064 = vcombine.low %v2042, %v2049
    %v2065 = vcombine.low %v2056, %v2063
    %v2067 = vunpack.c.l.s4 1966171168
    %v2068 = vunpack.c.0.s8 %v2067
    %v2069 = vlaneseq
    %v2070 = vshrl.u32 %v2069, 7
    %v2071 = vsub.s32 %v2068, %v2070
    %v2072 = vrot.slane %v2064, %v2071
    %v2074 = vunpack.c.l.s4 1966171168
    %v2075 = vunpack.c.0.s8 %v2074
    %v2076 = vlaneseq
    %v2077 = vshrl.u32 %v2076, 7
    %v2078 = vsub.s32 %v2075, %v2077
    %v2079 = vrot.slane %v2065, %v2078
    %v2080 = vcombine.low %v2072, %v2079
    %v2081 = vcombine.low %v1330, %v1354
    %v2082 = vcombine.low %v1368, %v1376
    %v2083 = vcombine.low %v1378, %v1361
    %v2084 = vcombine.low %v1375, %v1377
    %v2086 = vunpack.c.l.s4 1966171168
    %v2087 = vunpack.c.0.s8 %v2086
    %v2088 = vlaneseq
    %v2089 = vshrl.u32 %v2088, 7
    %v2090 = vsub.s32 %v2087, %v2089
    %v2091 = vrot.slane %v2081, %v2090
    %v2093 = vunpack.c.l.s4 1966171168
    %v2094 = vunpack.c.0.s8 %v2093
    %v2095 = vlaneseq
    %v2096 = vshrl.u32 %v2095, 7
    %v2097 = vsub.s32 %v2094, %v2096
    %v2098 = vrot.slane %v2082, %v2097
    %v2100 = vunpack.c.l.s4 1966171168
    %v2101 = vunpack.c.0.s8 %v2100
    %v2102 = vlaneseq
    %v2103 = vshrl.u32 %v2102, 7
    %v2104 = vsub.s32 %v2101, %v2103
    %v2105 = vrot.slane %v2083, %v2104
    %v2107 = vunpack.c.l.s4 1966171168
    %v2108 = vunpack.c.0.s8 %v2107
    %v2109 = vlaneseq
    %v2110 = vshrl.u32 %v2109, 7
    %v2111 = vsub.s32 %v2108, %v2110
    %v2112 = vrot.slane %v2084, %v2111
    %v2113 = vcombine.low %v2091, %v2098
    %v2114 = vcombine.low %v2105, %v2112
    %v2116 = vunpack.c.l.s4 1966171168
    %v2117 = vunpack.c.0.s8 %v2116
    %v2118 = vlaneseq
    %v2119 = vshrl.u32 %v2118, 7
    %v2120 = vsub.s32 %v2117, %v2119
    %v2121 = vrot.slane %v2113, %v2120
    %v2123 = vunpack.c.l.s4 1966171168
    %v2124 = vunpack.c.0.s8 %v2123
    %v2125 = vlaneseq
    %v2126 = vshrl.u32 %v2125, 7
    %v2127 = vsub.s32 %v2124, %v2126
    %v2128 = vrot.slane %v2114, %v2127
    %v2129 = vcombine.low %v2121, %v2128
    %v2130 = vcombine.low %v1379, %v1403
    %v2131 = vcombine.low %v1417, %v1425
    %v2132 = vcombine.low %v1427, %v1410
    %v2133 = vcombine.low %v1424, %v1426
    %v2135 = vunpack.c.l.s4 1966171168
    %v2136 = vunpack.c.0.s8 %v2135
    %v2137 = vlaneseq
    %v2138 = vshrl.u32 %v2137, 7
    %v2139 = vsub.s32 %v2136, %v2138
    %v2140 = vrot.slane %v2130, %v2139
    %v2142 = vunpack.c.l.s4 1966171168
    %v2143 = vunpack.c.0.s8 %v2142
    %v2144 = vlaneseq
    %v2145 = vshrl.u32 %v2144, 7
    %v2146 = vsub.s32 %v2143, %v2145
    %v2147 = vrot.slane %v2131, %v2146
    %v2149 = vunpack.c.l.s4 1966171168
    %v2150 = vunpack.c.0.s8 %v2149
    %v2151 = vlaneseq
    %v2152 = vshrl.u32 %v2151, 7
    %v2153 = vsub.s32 %v2150, %v2152
    %v2154 = vrot.slane %v2132, %v2153
    %v2156 = vunpack.c.l.s4 1966171168
    %v2157 = vunpack.c.0.s8 %v2156
    %v2158 = vlaneseq
    %v2159 = vshrl.u32 %v2158, 7
    %v2160 = vsub.s32 %v2157, %v2159
    %v2161 = vrot.slane %v2133, %v2160
    %v2162 = vcombine.low %v2140, %v2147
    %v2163 = vcombine.low %v2154, %v2161
    %v2165 = vunpack.c.l.s4 1966171168
    %v2166 = vunpack.c.0.s8 %v2165
    %v2167 = vlaneseq
    %v2168 = vshrl.u32 %v2167, 7
    %v2169 = vsub.s32 %v2166, %v2168
    %v2170 = vrot.slane %v2162, %v2169
    %v2172 = vunpack.c.l.s4 1966171168
    %v2173 = vunpack.c.0.s8 %v2172
    %v2174 = vlaneseq
    %v2175 = vshrl.u32 %v2174, 7
    %v2176 = vsub.s32 %v2173, %v2175
    %v2177 = vrot.slane %v2163, %v2176
    %v2178 = vcombine.low %v2170, %v2177
    %v2179 = vcombine.low %v1428, %v1330
    %v2181 = vunpack.c.l.s4 1966171168
    %v2182 = vunpack.c.0.s8 %v2181
    %v2183 = vlaneseq
    %v2184 = vshrl.u32 %v2183, 7
    %v2185 = vsub.s32 %v2182, %v2184
    %v2186 = vrot.slane %v2179, %v2185
    %v2188 = vunpack.c.l.s4 1966171168
    %v2189 = vunpack.c.0.s8 %v2188
    %v2190 = vlaneseq
    %v2191 = vshrl.u32 %v2190, 7
    %v2192 = vsub.s32 %v2189, %v2191
    %v2193 = vrot.slane %v2186, %v2192
    %v2194 = vsel %vm1028, %v2031, 0
    %v2196 = vsel %vm1028, %v2080, 0
    %v2198 = vsel %vm1028, %v2129, 0
    %v2200 = vsel %vm1028, %v2178, 0
    %v2202 = vsel %vm1028, %v2193, 0
    %2204 = vmatprep.subr.mxu0 0.0
    %2205 = vmatpush1.msra.mxu0 %v1670
    %2206 = vmatprep.subr.mxu0 0.0
    %2207 = vmatpush1.msra.mxu0 0.0
    %2208 = vmatprep.subr.mxu0 0.0
    %2209 = vmatpush1.msra.mxu0 0.0
    %2210 = vmatprep.subr.mxu0 0.0
    %2211 = vmatpush1.msra.mxu0 0.0
    %2212 = vmatprep.subr.mxu0 0.0
    %2213 = vmatpush1.msra.mxu0 0.0
    %2214 = vmatprep.subr.mxu0 0.0
    %2215 = vmatpush1.msra.mxu0 0.0
    %2216 = vmatprep.subr.mxu0 0.0
    %2217 = vmatpush1.msra.mxu0 0.0
    %2218 = vmatprep.subr.mxu0 0.0
    %2219 = vmatpush1.msra.mxu0 0.0
    %2220 = vmatprep.subr.mxu0 0.0
    %2221 = vmatpush1.msra.mxu0 0.0
    %2222 = vmatprep.subr.mxu0 0.0
    %2223 = vmatpush1.msra.mxu0 0.0
    %2224 = vmatprep.subr.mxu0 0.0
    %2225 = vmatpush1.msra.mxu0 0.0
    %2226 = vmatprep.subr.mxu0 0.0
    %2227 = vmatpush1.msra.mxu0 0.0
    %2228 = vmatprep.subr.mxu0 0.0
    %2229 = vmatpush1.msra.mxu0 0.0
    %2230 = vmatprep.subr.mxu0 0.0
    %2231 = vmatpush1.msra.mxu0 0.0
    %2232 = vmatprep.subr.mxu0 0.0
    %2233 = vmatpush1.msra.mxu0 0.0
    %2234 = vmatprep.subr.mxu0 0.0
    %2235 = vmatpush1.msra.mxu0 0.0
    %2236 = vmatprep.subr.mxu0 0.0
    %2237 = vmatpush1.msra.mxu0 0.0
    %2238 = vmatprep.subr.mxu0 0.0
    %2239 = vmatpush1.msra.mxu0 0.0
    %2240 = vmatprep.subr.mxu0 0.0
    %2241 = vmatpush1.msra.mxu0 0.0
    %2242 = vmatprep.subr.mxu0 0.0
    %2243 = vmatpush1.msra.mxu0 0.0
    %2244 = vmatprep.subr.mxu0 0.0
    %2245 = vmatpush1.msra.mxu0 0.0
    %2246 = vmatprep.subr.mxu0 0.0
    %2247 = vmatpush1.msra.mxu0 0.0
    %2248 = vmatprep.subr.mxu0 0.0
    %2249 = vmatpush1.msra.mxu0 0.0
    %2250 = vmatprep.subr.mxu0 0.0
    %2251 = vmatpush1.msra.mxu0 0.0
    %2252 = vmatprep.subr.mxu0 0.0
    %2253 = vmatpush1.msra.mxu0 0.0
    %2254 = vmatprep.subr.mxu0 0.0
    %2255 = vmatpush1.msra.mxu0 0.0
    %2256 = vmatprep.subr.mxu0 0.0
    %2257 = vmatpush1.msra.mxu0 0.0
    %2258 = vmatprep.subr.mxu0 0.0
    %2259 = vmatpush1.msra.mxu0 0.0
    %2260 = vmatprep.subr.mxu0 0.0
    %2261 = vmatpush1.msra.mxu0 0.0
    %2262 = vmatprep.subr.mxu0 0.0
    %2263 = vmatpush1.msra.mxu0 0.0
    %2264 = vmatprep.subr.mxu0 0.0
    %2265 = vmatpush1.msra.mxu0 0.0
    %2266 = vmatprep.subr.mxu0 0.0
    %2267 = vmatpush1.msra.mxu0 0.0
    %2268 = vmatprep.mubr.f32.mxu0 0.0
    %2269 = vmatmul.mubr.f32.gmra.mrb[0].mxu0 %v2194
    %v2270 = vpop.f32.mrb[0].mxu0
    %v2271 = vadd.f32 %v1960, %v2270
    %v2272 = vpop.f32.mrb[0].mxu0
    %2273 = vmatprep.mubr.f32.mxu0 0.0
    %2274 = vmatmul.mubr.f32.gmra.mrb[0].mxu0 %v2196
    %v2275 = vpop.f32.mrb[0].mxu0
    %v2276 = vadd.f32 %v1965, %v2275
    %v2277 = vpop.f32.mrb[0].mxu0
    %2278 = vmatprep.mubr.f32.mxu0 0.0
    %2279 = vmatmul.mubr.f32.gmra.mrb[0].mxu0 %v2198
    %v2280 = vpop.f32.mrb[0].mxu0
    %v2281 = vadd.f32 %v1970, %v2280
    %v2282 = vpop.f32.mrb[0].mxu0
    %2283 = vmatprep.mubr.f32.mxu0 0.0
    %2284 = vmatmul.mubr.f32.gmra.mrb[0].mxu0 %v2200
    %v2285 = vpop.f32.mrb[0].mxu0
    %v2286 = vadd.f32 %v1975, %v2285
    %v2287 = vpop.f32.mrb[0].mxu0
    %2288 = vmatprep.mubr.f32.mxu0 0.0
    %2289 = vmatmul.mubr.f32.gmra.mrb[0].mxu0 %v2202
    %v2290 = vpop.f32.mrb[0].mxu0
    %v2291 = vadd.f32 %v1980, %v2290
    %v2292 = vpop.f32.mrb[0].mxu0
    %2293 = vdwg.mxu0
    %v2294 = vld [vmem:[%s10] sm:$0x1]
    %v2296 = vlaneseq
    %v2297 = vshrl.u32 %v2296, 7
    %v2298 = vsub.s32 0, %v2297
    %v2299 = vrot.slane %v2294, %v2298
    %v2301 = vadd.f32 %v2271, %v2299
    %v2302 = vadd.f32 %v2276, %v2299
    %v2303 = vadd.f32 %v2281, %v2299
    %v2304 = vadd.f32 %v2286, %v2299
    %v2305 = vadd.f32 %v2291, %v2299
    %vm2306 = vcmp.ge.f32.partialorder %v2301, 0.0
    %vm2307 = vcmp.ge.f32.partialorder %v2302, 0.0
    %vm2308 = vcmp.ge.f32.partialorder %v2303, 0.0
    %vm2309 = vcmp.ge.f32.partialorder %v2304, 0.0
    %vm2310 = vcmp.ge.f32.partialorder %v2305, 0.0
    %v2311 = vmul.f32 %v2301, 0.2
    %v2312 = vmul.f32 %v2302, 0.2
    %v2313 = vmul.f32 %v2303, 0.2
    %v2314 = vmul.f32 %v2304, 0.2
    %v2315 = vmul.f32 %v2305, 0.2
    %v2316 = vsel %vm2306, %v2301, %v2311
    %v2317 = vsel %vm2307, %v2302, %v2312
    %v2318 = vsel %vm2308, %v2303, %v2313
    %v2319 = vsel %vm2309, %v2304, %v2314
    %v2320 = vsel %vm2310, %v2305, %v2315
    %v2326 = vcombine.high %v2316, %v2316
    %v2328 = vunpack.c.l.s4 1966171168
    %v2329 = vunpack.c.0.s8 %v2328
    %v2330 = vlaneseq
    %v2331 = vshrl.u32 %v2330, 7
    %v2332 = vsub.s32 %v2329, %v2331
    %v2333 = vrot.slane %v2316, %v2332
    %v2335 = vunpack.c.l.s4 1966171168
    %v2336 = vunpack.c.0.s8 %v2335
    %v2337 = vlaneseq
    %v2338 = vshrl.u32 %v2337, 7
    %v2339 = vsub.s32 %v2336, %v2338
    %v2340 = vrot.slane %v2326, %v2339
    %v2341 = vcombine.high %v2333, %v2333
    %v2342 = vcombine.high %v2340, %v2340
    %v2344 = vunpack.c.l.s4 1966171168
    %v2345 = vunpack.c.0.s8 %v2344
    %v2346 = vlaneseq
    %v2347 = vshrl.u32 %v2346, 7
    %v2348 = vsub.s32 %v2345, %v2347
    %v2349 = vrot.slane %v2333, %v2348
    %v2351 = vunpack.c.l.s4 1966171168
    %v2352 = vunpack.c.0.s8 %v2351
    %v2353 = vlaneseq
    %v2354 = vshrl.u32 %v2353, 7
    %v2355 = vsub.s32 %v2352, %v2354
    %v2356 = vrot.slane %v2340, %v2355
    %v2358 = vunpack.c.l.s4 1966171168
    %v2359 = vunpack.c.0.s8 %v2358
    %v2360 = vlaneseq
    %v2361 = vshrl.u32 %v2360, 7
    %v2362 = vsub.s32 %v2359, %v2361
    %v2363 = vrot.slane %v2341, %v2362
    %v2365 = vunpack.c.l.s4 1966171168
    %v2366 = vunpack.c.0.s8 %v2365
    %v2367 = vlaneseq
    %v2368 = vshrl.u32 %v2367, 7
    %v2369 = vsub.s32 %v2366, %v2368
    %v2370 = vrot.slane %v2342, %v2369
    %v2371 = vcombine.high %v2349, %v2349
    %v2372 = vcombine.high %v2356, %v2356
    %v2373 = vcombine.high %v2363, %v2363
    %v2374 = vcombine.high %v2370, %v2370
    %v2375 = vcombine.high %v2317, %v2317
    %v2377 = vunpack.c.l.s4 1966171168
    %v2378 = vunpack.c.0.s8 %v2377
    %v2379 = vlaneseq
    %v2380 = vshrl.u32 %v2379, 7
    %v2381 = vsub.s32 %v2378, %v2380
    %v2382 = vrot.slane %v2317, %v2381
    %v2384 = vunpack.c.l.s4 1966171168
    %v2385 = vunpack.c.0.s8 %v2384
    %v2386 = vlaneseq
    %v2387 = vshrl.u32 %v2386, 7
    %v2388 = vsub.s32 %v2385, %v2387
    %v2389 = vrot.slane %v2375, %v2388
    %v2390 = vcombine.high %v2382, %v2382
    %v2391 = vcombine.high %v2389, %v2389
    %v2393 = vunpack.c.l.s4 1966171168
    %v2394 = vunpack.c.0.s8 %v2393
    %v2395 = vlaneseq
    %v2396 = vshrl.u32 %v2395, 7
    %v2397 = vsub.s32 %v2394, %v2396
    %v2398 = vrot.slane %v2382, %v2397
    %v2400 = vunpack.c.l.s4 1966171168
    %v2401 = vunpack.c.0.s8 %v2400
    %v2402 = vlaneseq
    %v2403 = vshrl.u32 %v2402, 7
    %v2404 = vsub.s32 %v2401, %v2403
    %v2405 = vrot.slane %v2389, %v2404
    %v2407 = vunpack.c.l.s4 1966171168
    %v2408 = vunpack.c.0.s8 %v2407
    %v2409 = vlaneseq
    %v2410 = vshrl.u32 %v2409, 7
    %v2411 = vsub.s32 %v2408, %v2410
    %v2412 = vrot.slane %v2390, %v2411
    %v2414 = vunpack.c.l.s4 1966171168
    %v2415 = vunpack.c.0.s8 %v2414
    %v2416 = vlaneseq
    %v2417 = vshrl.u32 %v2416, 7
    %v2418 = vsub.s32 %v2415, %v2417
    %v2419 = vrot.slane %v2391, %v2418
    %v2420 = vcombine.high %v2398, %v2398
    %v2421 = vcombine.high %v2405, %v2405
    %v2422 = vcombine.high %v2412, %v2412
    %v2423 = vcombine.high %v2419, %v2419
    %v2424 = vcombine.high %v2318, %v2318
    %v2426 = vunpack.c.l.s4 1966171168
    %v2427 = vunpack.c.0.s8 %v2426
    %v2428 = vlaneseq
    %v2429 = vshrl.u32 %v2428, 7
    %v2430 = vsub.s32 %v2427, %v2429
    %v2431 = vrot.slane %v2318, %v2430
    %v2433 = vunpack.c.l.s4 1966171168
    %v2434 = vunpack.c.0.s8 %v2433
    %v2435 = vlaneseq
    %v2436 = vshrl.u32 %v2435, 7
    %v2437 = vsub.s32 %v2434, %v2436
    %v2438 = vrot.slane %v2424, %v2437
    %v2439 = vcombine.high %v2431, %v2431
    %v2440 = vcombine.high %v2438, %v2438
    %v2442 = vunpack.c.l.s4 1966171168
    %v2443 = vunpack.c.0.s8 %v2442
    %v2444 = vlaneseq
    %v2445 = vshrl.u32 %v2444, 7
    %v2446 = vsub.s32 %v2443, %v2445
    %v2447 = vrot.slane %v2431, %v2446
    %v2449 = vunpack.c.l.s4 1966171168
    %v2450 = vunpack.c.0.s8 %v2449
    %v2451 = vlaneseq
    %v2452 = vshrl.u32 %v2451, 7
    %v2453 = vsub.s32 %v2450, %v2452
    %v2454 = vrot.slane %v2438, %v2453
    %v2456 = vunpack.c.l.s4 1966171168
    %v2457 = vunpack.c.0.s8 %v2456
    %v2458 = vlaneseq
    %v2459 = vshrl.u32 %v2458, 7
    %v2460 = vsub.s32 %v2457, %v2459
    %v2461 = vrot.slane %v2439, %v2460
    %v2463 = vunpack.c.l.s4 1966171168
    %v2464 = vunpack.c.0.s8 %v2463
    %v2465 = vlaneseq
    %v2466 = vshrl.u32 %v2465, 7
    %v2467 = vsub.s32 %v2464, %v2466
    %v2468 = vrot.slane %v2440, %v2467
    %v2469 = vcombine.high %v2447, %v2447
    %v2470 = vcombine.high %v2454, %v2454
    %v2471 = vcombine.high %v2461, %v2461
    %v2472 = vcombine.high %v2468, %v2468
    %v2473 = vcombine.high %v2319, %v2319
    %v2475 = vunpack.c.l.s4 1966171168
    %v2476 = vunpack.c.0.s8 %v2475
    %v2477 = vlaneseq
    %v2478 = vshrl.u32 %v2477, 7
    %v2479 = vsub.s32 %v2476, %v2478
    %v2480 = vrot.slane %v2319, %v2479
    %v2482 = vunpack.c.l.s4 1966171168
    %v2483 = vunpack.c.0.s8 %v2482
    %v2484 = vlaneseq
    %v2485 = vshrl.u32 %v2484, 7
    %v2486 = vsub.s32 %v2483, %v2485
    %v2487 = vrot.slane %v2473, %v2486
    %v2488 = vcombine.high %v2480, %v2480
    %v2489 = vcombine.high %v2487, %v2487
    %v2491 = vunpack.c.l.s4 1966171168
    %v2492 = vunpack.c.0.s8 %v2491
    %v2493 = vlaneseq
    %v2494 = vshrl.u32 %v2493, 7
    %v2495 = vsub.s32 %v2492, %v2494
    %v2496 = vrot.slane %v2480, %v2495
    %v2498 = vunpack.c.l.s4 1966171168
    %v2499 = vunpack.c.0.s8 %v2498
    %v2500 = vlaneseq
    %v2501 = vshrl.u32 %v2500, 7
    %v2502 = vsub.s32 %v2499, %v2501
    %v2503 = vrot.slane %v2487, %v2502
    %v2505 = vunpack.c.l.s4 1966171168
    %v2506 = vunpack.c.0.s8 %v2505
    %v2507 = vlaneseq
    %v2508 = vshrl.u32 %v2507, 7
    %v2509 = vsub.s32 %v2506, %v2508
    %v2510 = vrot.slane %v2488, %v2509
    %v2512 = vunpack.c.l.s4 1966171168
    %v2513 = vunpack.c.0.s8 %v2512
    %v2514 = vlaneseq
    %v2515 = vshrl.u32 %v2514, 7
    %v2516 = vsub.s32 %v2513, %v2515
    %v2517 = vrot.slane %v2489, %v2516
    %v2518 = vcombine.high %v2496, %v2496
    %v2519 = vcombine.high %v2503, %v2503
    %v2520 = vcombine.high %v2510, %v2510
    %v2521 = vcombine.high %v2517, %v2517
    %v2523 = vunpack.c.l.s4 1966171168
    %v2524 = vunpack.c.0.s8 %v2523
    %v2525 = vlaneseq
    %v2526 = vshrl.u32 %v2525, 7
    %v2527 = vsub.s32 %v2524, %v2526
    %v2528 = vrot.slane %v2320, %v2527
    %v2529 = vcombine.high %v2528, %v2528
    %v2531 = vunpack.c.l.s4 1966171168
    %v2532 = vunpack.c.0.s8 %v2531
    %v2533 = vlaneseq
    %v2534 = vshrl.u32 %v2533, 7
    %v2535 = vsub.s32 %v2532, %v2534
    %v2536 = vrot.slane %v2528, %v2535
    %v2538 = vunpack.c.l.s4 1966171168
    %v2539 = vunpack.c.0.s8 %v2538
    %v2540 = vlaneseq
    %v2541 = vshrl.u32 %v2540, 7
    %v2542 = vsub.s32 %v2539, %v2541
    %v2543 = vrot.slane %v2529, %v2542
    %vm2578 = vcmask 24576
    %2579 = vst.msk [vmem:[#allocation3] sm:$0x1] %vm2578, %v2349
    %2580 = vst.msk [vmem:[#allocation3 + $0x2] sm:$0x1] %vm2578, %v2363
    %2581 = vst.msk [vmem:[#allocation3 + $0x4] sm:$0x1] %vm2578, %v2371
    %2582 = vst.msk [vmem:[#allocation3 + $0x6] sm:$0x1] %vm2578, %v2373
    %2583 = vst.msk [vmem:[#allocation3 + $0x8] sm:$0x1] %vm2578, %v2356
    %2584 = vst.msk [vmem:[#allocation3 + $0xa] sm:$0x1] %vm2578, %v2370
    %2585 = vst.msk [vmem:[#allocation3 + $0xc] sm:$0x1] %vm2578, %v2372
    %2586 = vst.msk [vmem:[#allocation3 + $0xe] sm:$0x1] %vm2578, %v2374
    %2587 = vst.msk [vmem:[#allocation3 + $0x10] sm:$0x1] %vm2578, %v2398
    %2588 = vst.msk [vmem:[#allocation3 + $0x12] sm:$0x1] %vm2578, %v2412
    %2589 = vst.msk [vmem:[#allocation3 + $0x14] sm:$0x1] %vm2578, %v2420
    %2590 = vst.msk [vmem:[#allocation3 + $0x16] sm:$0x1] %vm2578, %v2422
    %2591 = vst.msk [vmem:[#allocation3 + $0x18] sm:$0x1] %vm2578, %v2405
    %2592 = vst.msk [vmem:[#allocation3 + $0x1a] sm:$0x1] %vm2578, %v2419
    %2593 = vst.msk [vmem:[#allocation3 + $0x1c] sm:$0x1] %vm2578, %v2421
    %2594 = vst.msk [vmem:[#allocation3 + $0x1e] sm:$0x1] %vm2578, %v2423
    %2595 = vst.msk [vmem:[#allocation3 + $0x20] sm:$0x1] %vm2578, %v2447
    %2596 = vst.msk [vmem:[#allocation3 + $0x22] sm:$0x1] %vm2578, %v2461
    %2597 = vst.msk [vmem:[#allocation3 + $0x24] sm:$0x1] %vm2578, %v2469
    %2598 = vst.msk [vmem:[#allocation3 + $0x26] sm:$0x1] %vm2578, %v2471
    %2599 = vst.msk [vmem:[#allocation3 + $0x28] sm:$0x1] %vm2578, %v2454
    %2600 = vst.msk [vmem:[#allocation3 + $0x2a] sm:$0x1] %vm2578, %v2468
    %2601 = vst.msk [vmem:[#allocation3 + $0x2c] sm:$0x1] %vm2578, %v2470
    %2602 = vst.msk [vmem:[#allocation3 + $0x2e] sm:$0x1] %vm2578, %v2472
    %2603 = vst.msk [vmem:[#allocation3 + $0x30] sm:$0x1] %vm2578, %v2496
    %2604 = vst.msk [vmem:[#allocation3 + $0x32] sm:$0x1] %vm2578, %v2510
    %2605 = vst.msk [vmem:[#allocation3 + $0x34] sm:$0x1] %vm2578, %v2518
    %2606 = vst.msk [vmem:[#allocation3 + $0x36] sm:$0x1] %vm2578, %v2520
    %2607 = vst.msk [vmem:[#allocation3 + $0x38] sm:$0x1] %vm2578, %v2503
    %2608 = vst.msk [vmem:[#allocation3 + $0x3a] sm:$0x1] %vm2578, %v2517
    %2609 = vst.msk [vmem:[#allocation3 + $0x3c] sm:$0x1] %vm2578, %v2519
    %2610 = vst.msk [vmem:[#allocation3 + $0x3e] sm:$0x1] %vm2578, %v2521
    %2611 = vst.msk [vmem:[#allocation3 + $0x40] sm:$0x1] %vm2578, %v2536
    %2612 = vst.msk [vmem:[#allocation3 + $0x42] sm:$0x1] %vm2578, %v2543
    %v2613 = vlaneseq
    %v2614 = vshrl.u32 %v2613, 7
    %v2615 = vsub.s32 0, %v2614
    %v2616 = vrot.slane %v2349, %v2615
    %v2617 = vlaneseq
    %v2618 = vshrl.u32 %v2617, 7
    %v2619 = vsub.s32 0, %v2618
    %v2620 = vrot.slane %v2363, %v2619
    %v2621 = vlaneseq
    %v2622 = vshrl.u32 %v2621, 7
    %v2623 = vsub.s32 0, %v2622
    %v2624 = vrot.slane %v2371, %v2623
    %v2625 = vlaneseq
    %v2626 = vshrl.u32 %v2625, 7
    %v2627 = vsub.s32 0, %v2626
    %v2628 = vrot.slane %v2373, %v2627
    %v2629 = vlaneseq
    %v2630 = vshrl.u32 %v2629, 7
    %v2631 = vsub.s32 0, %v2630
    %v2632 = vrot.slane %v2356, %v2631
    %v2633 = vlaneseq
    %v2634 = vshrl.u32 %v2633, 7
    %v2635 = vsub.s32 0, %v2634
    %v2636 = vrot.slane %v2370, %v2635
    %v2637 = vlaneseq
    %v2638 = vshrl.u32 %v2637, 7
    %v2639 = vsub.s32 0, %v2638
    %v2640 = vrot.slane %v2372, %v2639
    %v2641 = vlaneseq
    %v2642 = vshrl.u32 %v2641, 7
    %v2643 = vsub.s32 0, %v2642
    %v2644 = vrot.slane %v2374, %v2643
    %v2645 = vlaneseq
    %v2646 = vshrl.u32 %v2645, 7
    %v2647 = vsub.s32 0, %v2646
    %v2648 = vrot.slane %v2398, %v2647
    %v2649 = vlaneseq
    %v2650 = vshrl.u32 %v2649, 7
    %v2651 = vsub.s32 0, %v2650
    %v2652 = vrot.slane %v2412, %v2651
    %v2653 = vlaneseq
    %v2654 = vshrl.u32 %v2653, 7
    %v2655 = vsub.s32 0, %v2654
    %v2656 = vrot.slane %v2420, %v2655
    %v2657 = vlaneseq
    %v2658 = vshrl.u32 %v2657, 7
    %v2659 = vsub.s32 0, %v2658
    %v2660 = vrot.slane %v2422, %v2659
    %v2661 = vlaneseq
    %v2662 = vshrl.u32 %v2661, 7
    %v2663 = vsub.s32 0, %v2662
    %v2664 = vrot.slane %v2405, %v2663
    %v2665 = vlaneseq
    %v2666 = vshrl.u32 %v2665, 7
    %v2667 = vsub.s32 0, %v2666
    %v2668 = vrot.slane %v2419, %v2667
    %v2669 = vlaneseq
    %v2670 = vshrl.u32 %v2669, 7
    %v2671 = vsub.s32 0, %v2670
    %v2672 = vrot.slane %v2421, %v2671
    %v2673 = vlaneseq
    %v2674 = vshrl.u32 %v2673, 7
    %v2675 = vsub.s32 0, %v2674
    %v2676 = vrot.slane %v2423, %v2675
    %v2677 = vlaneseq
    %v2678 = vshrl.u32 %v2677, 7
    %v2679 = vsub.s32 0, %v2678
    %v2680 = vrot.slane %v2447, %v2679
    %v2681 = vlaneseq
    %v2682 = vshrl.u32 %v2681, 7
    %v2683 = vsub.s32 0, %v2682
    %v2684 = vrot.slane %v2461, %v2683
    %v2685 = vlaneseq
    %v2686 = vshrl.u32 %v2685, 7
    %v2687 = vsub.s32 0, %v2686
    %v2688 = vrot.slane %v2469, %v2687
    %v2689 = vlaneseq
    %v2690 = vshrl.u32 %v2689, 7
    %v2691 = vsub.s32 0, %v2690
    %v2692 = vrot.slane %v2471, %v2691
    %v2693 = vlaneseq
    %v2694 = vshrl.u32 %v2693, 7
    %v2695 = vsub.s32 0, %v2694
    %v2696 = vrot.slane %v2454, %v2695
    %v2697 = vlaneseq
    %v2698 = vshrl.u32 %v2697, 7
    %v2699 = vsub.s32 0, %v2698
    %v2700 = vrot.slane %v2468, %v2699
    %v2701 = vlaneseq
    %v2702 = vshrl.u32 %v2701, 7
    %v2703 = vsub.s32 0, %v2702
    %v2704 = vrot.slane %v2470, %v2703
    %v2705 = vlaneseq
    %v2706 = vshrl.u32 %v2705, 7
    %v2707 = vsub.s32 0, %v2706
    %v2708 = vrot.slane %v2472, %v2707
    %v2709 = vlaneseq
    %v2710 = vshrl.u32 %v2709, 7
    %v2711 = vsub.s32 0, %v2710
    %v2712 = vrot.slane %v2496, %v2711
    %v2713 = vlaneseq
    %v2714 = vshrl.u32 %v2713, 7
    %v2715 = vsub.s32 0, %v2714
    %v2716 = vrot.slane %v2510, %v2715
    %v2717 = vlaneseq
    %v2718 = vshrl.u32 %v2717, 7
    %v2719 = vsub.s32 0, %v2718
    %v2720 = vrot.slane %v2518, %v2719
    %v2721 = vlaneseq
    %v2722 = vshrl.u32 %v2721, 7
    %v2723 = vsub.s32 0, %v2722
    %v2724 = vrot.slane %v2520, %v2723
    %v2725 = vlaneseq
    %v2726 = vshrl.u32 %v2725, 7
    %v2727 = vsub.s32 0, %v2726
    %v2728 = vrot.slane %v2503, %v2727
    %v2729 = vlaneseq
    %v2730 = vshrl.u32 %v2729, 7
    %v2731 = vsub.s32 0, %v2730
    %v2732 = vrot.slane %v2517, %v2731
    %v2733 = vlaneseq
    %v2734 = vshrl.u32 %v2733, 7
    %v2735 = vsub.s32 0, %v2734
    %v2736 = vrot.slane %v2519, %v2735
    %v2737 = vlaneseq
    %v2738 = vshrl.u32 %v2737, 7
    %v2739 = vsub.s32 0, %v2738
    %v2740 = vrot.slane %v2521, %v2739
    %v2741 = vlaneseq
    %v2742 = vshrl.u32 %v2741, 7
    %v2743 = vsub.s32 0, %v2742
    %v2744 = vrot.slane %v2536, %v2743
    %v2745 = vlaneseq
    %v2746 = vshrl.u32 %v2745, 7
    %v2747 = vsub.s32 0, %v2746
    %v2748 = vrot.slane %v2543, %v2747
    %2749 = vrot.lane.b32.xlu0 %v2616, 124
    %v2750 = vpop.permute.xlu0 %2749
    %2751 = vrot.lane.b32.xlu0 %v2620, 124
    %v2752 = vpop.permute.xlu0 %2751
    %2753 = vrot.lane.b32.xlu0 %v2624, 124
    %v2754 = vpop.permute.xlu0 %2753
    %2755 = vrot.lane.b32.xlu0 %v2628, 124
    %v2756 = vpop.permute.xlu0 %2755
    %2757 = vrot.lane.b32.xlu0 %v2632, 124
    %v2758 = vpop.permute.xlu0 %2757
    %2759 = vrot.lane.b32.xlu0 %v2636, 124
    %v2760 = vpop.permute.xlu0 %2759
    %2761 = vrot.lane.b32.xlu0 %v2640, 124
    %v2762 = vpop.permute.xlu0 %2761
    %2763 = vrot.lane.b32.xlu0 %v2644, 124
    %v2764 = vpop.permute.xlu0 %2763
    %2765 = vrot.lane.b32.xlu0 %v2648, 124
    %v2766 = vpop.permute.xlu0 %2765
    %2767 = vrot.lane.b32.xlu0 %v2652, 124
    %v2768 = vpop.permute.xlu0 %2767
    %2769 = vrot.lane.b32.xlu0 %v2656, 124
    %v2770 = vpop.permute.xlu0 %2769
    %2771 = vrot.lane.b32.xlu0 %v2660, 124
    %v2772 = vpop.permute.xlu0 %2771
    %2773 = vrot.lane.b32.xlu0 %v2664, 124
    %v2774 = vpop.permute.xlu0 %2773
    %2775 = vrot.lane.b32.xlu0 %v2668, 124
    %v2776 = vpop.permute.xlu0 %2775
    %2777 = vrot.lane.b32.xlu0 %v2672, 124
    %v2778 = vpop.permute.xlu0 %2777
    %2779 = vrot.lane.b32.xlu0 %v2676, 124
    %v2780 = vpop.permute.xlu0 %2779
    %2781 = vrot.lane.b32.xlu0 %v2680, 124
    %v2782 = vpop.permute.xlu0 %2781
    %2783 = vrot.lane.b32.xlu0 %v2684, 124
    %v2784 = vpop.permute.xlu0 %2783
    %2785 = vrot.lane.b32.xlu0 %v2688, 124
    %v2786 = vpop.permute.xlu0 %2785
    %2787 = vrot.lane.b32.xlu0 %v2692, 124
    %v2788 = vpop.permute.xlu0 %2787
    %2789 = vrot.lane.b32.xlu0 %v2696, 124
    %v2790 = vpop.permute.xlu0 %2789
    %2791 = vrot.lane.b32.xlu0 %v2700, 124
    %v2792 = vpop.permute.xlu0 %2791
    %2793 = vrot.lane.b32.xlu0 %v2704, 124
    %v2794 = vpop.permute.xlu0 %2793
    %2795 = vrot.lane.b32.xlu0 %v2708, 124
    %v2796 = vpop.permute.xlu0 %2795
    %2797 = vrot.lane.b32.xlu0 %v2712, 124
    %v2798 = vpop.permute.xlu0 %2797
    %2799 = vrot.lane.b32.xlu0 %v2716, 124
    %v2800 = vpop.permute.xlu0 %2799
    %2801 = vrot.lane.b32.xlu0 %v2720, 124
    %v2802 = vpop.permute.xlu0 %2801
    %2803 = vrot.lane.b32.xlu0 %v2724, 124
    %v2804 = vpop.permute.xlu0 %2803
    %2805 = vrot.lane.b32.xlu0 %v2728, 124
    %v2806 = vpop.permute.xlu0 %2805
    %2807 = vrot.lane.b32.xlu0 %v2732, 124
    %v2808 = vpop.permute.xlu0 %2807
    %2809 = vrot.lane.b32.xlu0 %v2736, 124
    %v2810 = vpop.permute.xlu0 %2809
    %2811 = vrot.lane.b32.xlu0 %v2740, 124
    %v2812 = vpop.permute.xlu0 %2811
    %2813 = vrot.lane.b32.xlu0 %v2744, 124
    %v2814 = vpop.permute.xlu0 %2813
    %2815 = vrot.lane.b32.xlu0 %v2748, 124
    %v2816 = vpop.permute.xlu0 %2815
    %2851 = vst.msk [vmem:[#allocation3 + $0x1] sm:$0x1] %vm2578, %v2750
    %2852 = vst.msk [vmem:[#allocation3 + $0x3] sm:$0x1] %vm2578, %v2752
    %2853 = vst.msk [vmem:[#allocation3 + $0x5] sm:$0x1] %vm2578, %v2754
    %2854 = vst.msk [vmem:[#allocation3 + $0x7] sm:$0x1] %vm2578, %v2756
    %2855 = vst.msk [vmem:[#allocation3 + $0x9] sm:$0x1] %vm2578, %v2758
    %2856 = vst.msk [vmem:[#allocation3 + $0xb] sm:$0x1] %vm2578, %v2760
    %2857 = vst.msk [vmem:[#allocation3 + $0xd] sm:$0x1] %vm2578, %v2762
    %2858 = vst.msk [vmem:[#allocation3 + $0xf] sm:$0x1] %vm2578, %v2764
    %2859 = vst.msk [vmem:[#allocation3 + $0x11] sm:$0x1] %vm2578, %v2766
    %2860 = vst.msk [vmem:[#allocation3 + $0x13] sm:$0x1] %vm2578, %v2768
    %2861 = vst.msk [vmem:[#allocation3 + $0x15] sm:$0x1] %vm2578, %v2770
    %2862 = vst.msk [vmem:[#allocation3 + $0x17] sm:$0x1] %vm2578, %v2772
    %2863 = vst.msk [vmem:[#allocation3 + $0x19] sm:$0x1] %vm2578, %v2774
    %2864 = vst.msk [vmem:[#allocation3 + $0x1b] sm:$0x1] %vm2578, %v2776
    %2865 = vst.msk [vmem:[#allocation3 + $0x1d] sm:$0x1] %vm2578, %v2778
    %2866 = vst.msk [vmem:[#allocation3 + $0x1f] sm:$0x1] %vm2578, %v2780
    %2867 = vst.msk [vmem:[#allocation3 + $0x21] sm:$0x1] %vm2578, %v2782
    %2868 = vst.msk [vmem:[#allocation3 + $0x23] sm:$0x1] %vm2578, %v2784
    %2869 = vst.msk [vmem:[#allocation3 + $0x25] sm:$0x1] %vm2578, %v2786
    %2870 = vst.msk [vmem:[#allocation3 + $0x27] sm:$0x1] %vm2578, %v2788
    %2871 = vst.msk [vmem:[#allocation3 + $0x29] sm:$0x1] %vm2578, %v2790
    %2872 = vst.msk [vmem:[#allocation3 + $0x2b] sm:$0x1] %vm2578, %v2792
    %2873 = vst.msk [vmem:[#allocation3 + $0x2d] sm:$0x1] %vm2578, %v2794
    %2874 = vst.msk [vmem:[#allocation3 + $0x2f] sm:$0x1] %vm2578, %v2796
    %2875 = vst.msk [vmem:[#allocation3 + $0x31] sm:$0x1] %vm2578, %v2798
    %2876 = vst.msk [vmem:[#allocation3 + $0x33] sm:$0x1] %vm2578, %v2800
    %2877 = vst.msk [vmem:[#allocation3 + $0x35] sm:$0x1] %vm2578, %v2802
    %2878 = vst.msk [vmem:[#allocation3 + $0x37] sm:$0x1] %vm2578, %v2804
    %2879 = vst.msk [vmem:[#allocation3 + $0x39] sm:$0x1] %vm2578, %v2806
    %2880 = vst.msk [vmem:[#allocation3 + $0x3b] sm:$0x1] %vm2578, %v2808
    %2881 = vst.msk [vmem:[#allocation3 + $0x3d] sm:$0x1] %vm2578, %v2810
    %2882 = vst.msk [vmem:[#allocation3 + $0x3f] sm:$0x1] %vm2578, %v2812
    %2883 = vst.msk [vmem:[#allocation3 + $0x41] sm:$0x1] %vm2578, %v2814
    %2884 = vst.msk [vmem:[#allocation3 + $0x43] sm:$0x1] %vm2578, %v2816
    %v2885 = vld [vmem:[#allocation3] sm:$0x3]
    %v2886 = vld [vmem:[#allocation3 + $0x2] sm:$0x3]
    %v2887 = vld [vmem:[#allocation3 + $0x4] sm:$0x3]
    %v2888 = vld [vmem:[#allocation3 + $0x6] sm:$0x3]
    %v2889 = vld [vmem:[#allocation3 + $0x8] sm:$0x3]
    %v2890 = vld [vmem:[#allocation3 + $0xa] sm:$0x3]
    %v2891 = vld [vmem:[#allocation3 + $0xc] sm:$0x3]
    %v2892 = vld [vmem:[#allocation3 + $0xe] sm:$0x3]
    %v2893 = vld [vmem:[#allocation3 + $0x10] sm:$0x3]
    %v2894 = vld [vmem:[#allocation3 + $0x12] sm:$0x3]
    %v2895 = vld [vmem:[#allocation3 + $0x14] sm:$0x3]
    %v2896 = vld [vmem:[#allocation3 + $0x16] sm:$0x3]
    %v2897 = vld [vmem:[#allocation3 + $0x18] sm:$0x3]
    %v2898 = vld [vmem:[#allocation3 + $0x1a] sm:$0x3]
    %v2899 = vld [vmem:[#allocation3 + $0x1c] sm:$0x3]
    %v2900 = vld [vmem:[#allocation3 + $0x1e] sm:$0x3]
    %v2901 = vld [vmem:[#allocation3 + $0x20] sm:$0x3]
    %v2902 = vld [vmem:[#allocation3 + $0x22] sm:$0x3]
    %v2903 = vld [vmem:[#allocation3 + $0x24] sm:$0x3]
    %v2904 = vld [vmem:[#allocation3 + $0x26] sm:$0x3]
    %v2905 = vld [vmem:[#allocation3 + $0x28] sm:$0x3]
    %v2906 = vld [vmem:[#allocation3 + $0x2a] sm:$0x3]
    %v2907 = vld [vmem:[#allocation3 + $0x2c] sm:$0x3]
    %v2908 = vld [vmem:[#allocation3 + $0x2e] sm:$0x3]
    %v2909 = vld [vmem:[#allocation3 + $0x30] sm:$0x3]
    %v2910 = vld [vmem:[#allocation3 + $0x32] sm:$0x3]
    %v2911 = vld [vmem:[#allocation3 + $0x34] sm:$0x3]
    %v2912 = vld [vmem:[#allocation3 + $0x36] sm:$0x3]
    %v2913 = vld [vmem:[#allocation3 + $0x38] sm:$0x3]
    %v2914 = vld [vmem:[#allocation3 + $0x3a] sm:$0x3]
    %v2915 = vld [vmem:[#allocation3 + $0x3c] sm:$0x3]
    %v2916 = vld [vmem:[#allocation3 + $0x3e] sm:$0x3]
    %v2917 = vld [vmem:[#allocation3 + $0x40] sm:$0x3]
    %v2918 = vld [vmem:[#allocation3 + $0x42] sm:$0x3]
    %v2953 = vcombine.low %v2885, %v2886
    %v2954 = vcombine.low %v2887, %v2888
    %v2956 = vunpack.c.l.s4 1983009808
    %v2957 = vunpack.c.0.s8 %v2956
    %v2958 = vlaneseq
    %v2959 = vshrl.u32 %v2958, 7
    %v2960 = vsub.s32 %v2957, %v2959
    %v2961 = vrot.slane %v2953, %v2960
    %v2963 = vunpack.c.l.s4 1983009808
    %v2964 = vunpack.c.0.s8 %v2963
    %v2965 = vlaneseq
    %v2966 = vshrl.u32 %v2965, 7
    %v2967 = vsub.s32 %v2964, %v2966
    %v2968 = vrot.slane %v2954, %v2967
    %v2969 = vcombine.low %v2961, %v2968
    %v2970 = vcombine.low %v2889, %v2890
    %v2971 = vcombine.low %v2891, %v2892
    %v2973 = vunpack.c.l.s4 1983009808
    %v2974 = vunpack.c.0.s8 %v2973
    %v2975 = vlaneseq
    %v2976 = vshrl.u32 %v2975, 7
    %v2977 = vsub.s32 %v2974, %v2976
    %v2978 = vrot.slane %v2970, %v2977
    %v2980 = vunpack.c.l.s4 1983009808
    %v2981 = vunpack.c.0.s8 %v2980
    %v2982 = vlaneseq
    %v2983 = vshrl.u32 %v2982, 7
    %v2984 = vsub.s32 %v2981, %v2983
    %v2985 = vrot.slane %v2971, %v2984
    %v2986 = vcombine.low %v2978, %v2985
    %v2987 = vcombine.low %v2893, %v2894
    %v2988 = vcombine.low %v2895, %v2896
    %v2990 = vunpack.c.l.s4 1983009808
    %v2991 = vunpack.c.0.s8 %v2990
    %v2992 = vlaneseq
    %v2993 = vshrl.u32 %v2992, 7
    %v2994 = vsub.s32 %v2991, %v2993
    %v2995 = vrot.slane %v2987, %v2994
    %v2997 = vunpack.c.l.s4 1983009808
    %v2998 = vunpack.c.0.s8 %v2997
    %v2999 = vlaneseq
    %v3000 = vshrl.u32 %v2999, 7
    %v3001 = vsub.s32 %v2998, %v3000
    %v3002 = vrot.slane %v2988, %v3001
    %v3003 = vcombine.low %v2995, %v3002
    %v3004 = vcombine.low %v2897, %v2898
    %v3005 = vcombine.low %v2899, %v2900
    %v3007 = vunpack.c.l.s4 1983009808
    %v3008 = vunpack.c.0.s8 %v3007
    %v3009 = vlaneseq
    %v3010 = vshrl.u32 %v3009, 7
    %v3011 = vsub.s32 %v3008, %v3010
    %v3012 = vrot.slane %v3004, %v3011
    %v3014 = vunpack.c.l.s4 1983009808
    %v3015 = vunpack.c.0.s8 %v3014
    %v3016 = vlaneseq
    %v3017 = vshrl.u32 %v3016, 7
    %v3018 = vsub.s32 %v3015, %v3017
    %v3019 = vrot.slane %v3005, %v3018
    %v3020 = vcombine.low %v3012, %v3019
    %v3022 = vunpack.c.l.s4 1983009808
    %v3023 = vunpack.c.0.s8 %v3022
    %v3024 = vlaneseq
    %v3025 = vshrl.u32 %v3024, 7
    %v3026 = vsub.s32 %v3023, %v3025
    %v3027 = vrot.slane %v2901, %v3026
    %v3028 = vcombine.low %v2902, %v2903
    %v3029 = vcombine.low %v2904, %v2905
    %v3031 = vunpack.c.l.s4 1983009808
    %v3032 = vunpack.c.0.s8 %v3031
    %v3033 = vlaneseq
    %v3034 = vshrl.u32 %v3033, 7
    %v3035 = vsub.s32 %v3032, %v3034
    %v3036 = vrot.slane %v3028, %v3035
    %v3038 = vunpack.c.l.s4 1983009808
    %v3039 = vunpack.c.0.s8 %v3038
    %v3040 = vlaneseq
    %v3041 = vshrl.u32 %v3040, 7
    %v3042 = vsub.s32 %v3039, %v3041
    %v3043 = vrot.slane %v3029, %v3042
    %v3044 = vcombine.low %v3036, %v3043
    %v3045 = vcombine.low %v2906, %v2907
    %v3046 = vcombine.low %v2908, %v2909
    %v3048 = vunpack.c.l.s4 1983009808
    %v3049 = vunpack.c.0.s8 %v3048
    %v3050 = vlaneseq
    %v3051 = vshrl.u32 %v3050, 7
    %v3052 = vsub.s32 %v3049, %v3051
    %v3053 = vrot.slane %v3045, %v3052
    %v3055 = vunpack.c.l.s4 1983009808
    %v3056 = vunpack.c.0.s8 %v3055
    %v3057 = vlaneseq
    %v3058 = vshrl.u32 %v3057, 7
    %v3059 = vsub.s32 %v3056, %v3058
    %v3060 = vrot.slane %v3046, %v3059
    %v3061 = vcombine.low %v3053, %v3060
    %v3062 = vcombine.low %v2910, %v2911
    %v3063 = vcombine.low %v2912, %v2913
    %v3065 = vunpack.c.l.s4 1983009808
    %v3066 = vunpack.c.0.s8 %v3065
    %v3067 = vlaneseq
    %v3068 = vshrl.u32 %v3067, 7
    %v3069 = vsub.s32 %v3066, %v3068
    %v3070 = vrot.slane %v3062, %v3069
    %v3072 = vunpack.c.l.s4 1983009808
    %v3073 = vunpack.c.0.s8 %v3072
    %v3074 = vlaneseq
    %v3075 = vshrl.u32 %v3074, 7
    %v3076 = vsub.s32 %v3073, %v3075
    %v3077 = vrot.slane %v3063, %v3076
    %v3078 = vcombine.low %v3070, %v3077
    %v3079 = vcombine.low %v2914, %v2915
    %v3080 = vcombine.low %v2916, %v2917
    %v3082 = vunpack.c.l.s4 1983009808
    %v3083 = vunpack.c.0.s8 %v3082
    %v3084 = vlaneseq
    %v3085 = vshrl.u32 %v3084, 7
    %v3086 = vsub.s32 %v3083, %v3085
    %v3087 = vrot.slane %v3079, %v3086
    %v3089 = vunpack.c.l.s4 1983009808
    %v3090 = vunpack.c.0.s8 %v3089
    %v3091 = vlaneseq
    %v3092 = vshrl.u32 %v3091, 7
    %v3093 = vsub.s32 %v3090, %v3092
    %v3094 = vrot.slane %v3080, %v3093
    %v3095 = vcombine.low %v3087, %v3094
    %v3097 = vunpack.c.l.s4 1983009808
    %v3098 = vunpack.c.0.s8 %v3097
    %v3099 = vlaneseq
    %v3100 = vshrl.u32 %v3099, 7
    %v3101 = vsub.s32 %v3098, %v3100
    %v3102 = vrot.slane %v2918, %v3101
    %v3103 = vrot.slane %v2969, 1
    %v3104 = vrot.slane %v2986, 1
    %v3105 = vsel %vm1429, %v3103, %v3104
    %v3106 = vrot.slane %v3003, 1
    %v3107 = vsel %vm1429, %v3104, %v3106
    %v3108 = vrot.slane %v3020, 1
    %v3109 = vsel %vm1429, %v3106, %v3108
    %v3110 = vrot.slane %v3027, 1
    %v3111 = vsel %vm1429, %v3108, %v3110
    %v3112 = vrot.slane %v3044, 1
    %v3113 = vrot.slane %v3061, 1
    %v3114 = vsel %vm1429, %v3112, %v3113
    %v3115 = vrot.slane %v3078, 1
    %v3116 = vsel %vm1429, %v3113, %v3115
    %v3117 = vrot.slane %v3095, 1
    %v3118 = vsel %vm1429, %v3115, %v3117
    %v3119 = vrot.slane %v3102, 1
    %v3120 = vsel %vm1429, %v3117, %v3119
    %vm3129 = vcmask 31744
    %v3130 = vsel %vm3129, %v3105, 0.0
    %v3131 = vsel %vm3129, %v3107, 0.0
    %v3132 = vadd.f32 %v3130, %v3131
    %v3133 = vsel %vm3129, %v3109, 0.0
    %v3134 = vadd.f32 %v3132, %v3133
    %v3135 = vsel %vm3129, %v3111, 0.0
    %v3136 = vadd.f32 %v3134, %v3135
    %v3137 = vrot.slane %v3136, 4
    %v3138 = vadd.f32 %v3136, %v3137
    %v3139 = vrot.slane %v3138, 2
    %v3140 = vadd.f32 %v3138, %v3139
    %v3141 = vrot.slane %v3140, 1
    %v3142 = vadd.f32 %v3140, %v3141
    %v3143 = vsel %vm3129, %v3114, 0.0
    %v3144 = vsel %vm3129, %v3116, 0.0
    %v3145 = vadd.f32 %v3143, %v3144
    %v3146 = vsel %vm3129, %v3118, 0.0
    %v3147 = vadd.f32 %v3145, %v3146
    %v3148 = vsel %vm3129, %v3120, 0.0
    %v3149 = vadd.f32 %v3147, %v3148
    %v3150 = vrot.slane %v3149, 4
    %v3151 = vadd.f32 %v3149, %v3150
    %v3152 = vrot.slane %v3151, 2
    %v3153 = vadd.f32 %v3151, %v3152
    %v3154 = vrot.slane %v3153, 1
    %v3155 = vadd.f32 %v3153, %v3154
    %v3156 = vsel %vm3129, %v3142, 0.0
    %v3157 = vsel %vm3129, %v3155, 0.0
    %v3158 = vadd.f32 %v3156, %v3157
    %v3159 = vmul.f32 %v2885, %v2885
    %v3160 = vmul.f32 %v2886, %v2886
    %v3161 = vmul.f32 %v2887, %v2887
    %v3162 = vmul.f32 %v2888, %v2888
    %v3163 = vmul.f32 %v2889, %v2889
    %v3164 = vmul.f32 %v2890, %v2890
    %v3165 = vmul.f32 %v2891, %v2891
    %v3166 = vmul.f32 %v2892, %v2892
    %v3167 = vmul.f32 %v2893, %v2893
    %v3168 = vmul.f32 %v2894, %v2894
    %v3169 = vmul.f32 %v2895, %v2895
    %v3170 = vmul.f32 %v2896, %v2896
    %v3171 = vmul.f32 %v2897, %v2897
    %v3172 = vmul.f32 %v2898, %v2898
    %v3173 = vmul.f32 %v2899, %v2899
    %v3174 = vmul.f32 %v2900, %v2900
    %v3175 = vmul.f32 %v2901, %v2901
    %v3176 = vmul.f32 %v2902, %v2902
    %v3177 = vmul.f32 %v2903, %v2903
    %v3178 = vmul.f32 %v2904, %v2904
    %v3179 = vmul.f32 %v2905, %v2905
    %v3180 = vmul.f32 %v2906, %v2906
    %v3181 = vmul.f32 %v2907, %v2907
    %v3182 = vmul.f32 %v2908, %v2908
    %v3183 = vmul.f32 %v2909, %v2909
    %v3184 = vmul.f32 %v2910, %v2910
    %v3185 = vmul.f32 %v2911, %v2911
    %v3186 = vmul.f32 %v2912, %v2912
    %v3187 = vmul.f32 %v2913, %v2913
    %v3188 = vmul.f32 %v2914, %v2914
    %v3189 = vmul.f32 %v2915, %v2915
    %v3190 = vmul.f32 %v2916, %v2916
    %v3191 = vmul.f32 %v2917, %v2917
    %v3192 = vmul.f32 %v2918, %v2918
    %v3227 = vcombine.low %v3159, %v3160
    %v3228 = vcombine.low %v3161, %v3162
    %v3230 = vunpack.c.l.s4 1983009808
    %v3231 = vunpack.c.0.s8 %v3230
    %v3232 = vlaneseq
    %v3233 = vshrl.u32 %v3232, 7
    %v3234 = vsub.s32 %v3231, %v3233
    %v3235 = vrot.slane %v3227, %v3234
    %v3237 = vunpack.c.l.s4 1983009808
    %v3238 = vunpack.c.0.s8 %v3237
    %v3239 = vlaneseq
    %v3240 = vshrl.u32 %v3239, 7
    %v3241 = vsub.s32 %v3238, %v3240
    %v3242 = vrot.slane %v3228, %v3241
    %v3243 = vcombine.low %v3235, %v3242
    %v3244 = vcombine.low %v3163, %v3164
    %v3245 = vcombine.low %v3165, %v3166
    %v3247 = vunpack.c.l.s4 1983009808
    %v3248 = vunpack.c.0.s8 %v3247
    %v3249 = vlaneseq
    %v3250 = vshrl.u32 %v3249, 7
    %v3251 = vsub.s32 %v3248, %v3250
    %v3252 = vrot.slane %v3244, %v3251
    %v3254 = vunpack.c.l.s4 1983009808
    %v3255 = vunpack.c.0.s8 %v3254
    %v3256 = vlaneseq
    %v3257 = vshrl.u32 %v3256, 7
    %v3258 = vsub.s32 %v3255, %v3257
    %v3259 = vrot.slane %v3245, %v3258
    %v3260 = vcombine.low %v3252, %v3259
    %v3261 = vcombine.low %v3167, %v3168
    %v3262 = vcombine.low %v3169, %v3170
    %v3264 = vunpack.c.l.s4 1983009808
    %v3265 = vunpack.c.0.s8 %v3264
    %v3266 = vlaneseq
    %v3267 = vshrl.u32 %v3266, 7
    %v3268 = vsub.s32 %v3265, %v3267
    %v3269 = vrot.slane %v3261, %v3268
    %v3271 = vunpack.c.l.s4 1983009808
    %v3272 = vunpack.c.0.s8 %v3271
    %v3273 = vlaneseq
    %v3274 = vshrl.u32 %v3273, 7
    %v3275 = vsub.s32 %v3272, %v3274
    %v3276 = vrot.slane %v3262, %v3275
    %v3277 = vcombine.low %v3269, %v3276
    %v3278 = vcombine.low %v3171, %v3172
    %v3279 = vcombine.low %v3173, %v3174
    %v3281 = vunpack.c.l.s4 1983009808
    %v3282 = vunpack.c.0.s8 %v3281
    %v3283 = vlaneseq
    %v3284 = vshrl.u32 %v3283, 7
    %v3285 = vsub.s32 %v3282, %v3284
    %v3286 = vrot.slane %v3278, %v3285
    %v3288 = vunpack.c.l.s4 1983009808
    %v3289 = vunpack.c.0.s8 %v3288
    %v3290 = vlaneseq
    %v3291 = vshrl.u32 %v3290, 7
    %v3292 = vsub.s32 %v3289, %v3291
    %v3293 = vrot.slane %v3279, %v3292
    %v3294 = vcombine.low %v3286, %v3293
    %v3296 = vunpack.c.l.s4 1983009808
    %v3297 = vunpack.c.0.s8 %v3296
    %v3298 = vlaneseq
    %v3299 = vshrl.u32 %v3298, 7
    %v3300 = vsub.s32 %v3297, %v3299
    %v3301 = vrot.slane %v3175, %v3300
    %v3302 = vcombine.low %v3176, %v3177
    %v3303 = vcombine.low %v3178, %v3179
    %v3305 = vunpack.c.l.s4 1983009808
    %v3306 = vunpack.c.0.s8 %v3305
    %v3307 = vlaneseq
    %v3308 = vshrl.u32 %v3307, 7
    %v3309 = vsub.s32 %v3306, %v3308
    %v3310 = vrot.slane %v3302, %v3309
    %v3312 = vunpack.c.l.s4 1983009808
    %v3313 = vunpack.c.0.s8 %v3312
    %v3314 = vlaneseq
    %v3315 = vshrl.u32 %v3314, 7
    %v3316 = vsub.s32 %v3313, %v3315
    %v3317 = vrot.slane %v3303, %v3316
    %v3318 = vcombine.low %v3310, %v3317
    %v3319 = vcombine.low %v3180, %v3181
    %v3320 = vcombine.low %v3182, %v3183
    %v3322 = vunpack.c.l.s4 1983009808
    %v3323 = vunpack.c.0.s8 %v3322
    %v3324 = vlaneseq
    %v3325 = vshrl.u32 %v3324, 7
    %v3326 = vsub.s32 %v3323, %v3325
    %v3327 = vrot.slane %v3319, %v3326
    %v3329 = vunpack.c.l.s4 1983009808
    %v3330 = vunpack.c.0.s8 %v3329
    %v3331 = vlaneseq
    %v3332 = vshrl.u32 %v3331, 7
    %v3333 = vsub.s32 %v3330, %v3332
    %v3334 = vrot.slane %v3320, %v3333
    %v3335 = vcombine.low %v3327, %v3334
    %v3336 = vcombine.low %v3184, %v3185
    %v3337 = vcombine.low %v3186, %v3187
    %v3339 = vunpack.c.l.s4 1983009808
    %v3340 = vunpack.c.0.s8 %v3339
    %v3341 = vlaneseq
    %v3342 = vshrl.u32 %v3341, 7
    %v3343 = vsub.s32 %v3340, %v3342
    %v3344 = vrot.slane %v3336, %v3343
    %v3346 = vunpack.c.l.s4 1983009808
    %v3347 = vunpack.c.0.s8 %v3346
    %v3348 = vlaneseq
    %v3349 = vshrl.u32 %v3348, 7
    %v3350 = vsub.s32 %v3347, %v3349
    %v3351 = vrot.slane %v3337, %v3350
    %v3352 = vcombine.low %v3344, %v3351
    %v3353 = vcombine.low %v3188, %v3189
    %v3354 = vcombine.low %v3190, %v3191
    %v3356 = vunpack.c.l.s4 1983009808
    %v3357 = vunpack.c.0.s8 %v3356
    %v3358 = vlaneseq
    %v3359 = vshrl.u32 %v3358, 7
    %v3360 = vsub.s32 %v3357, %v3359
    %v3361 = vrot.slane %v3353, %v3360
    %v3363 = vunpack.c.l.s4 1983009808
    %v3364 = vunpack.c.0.s8 %v3363
    %v3365 = vlaneseq
    %v3366 = vshrl.u32 %v3365, 7
    %v3367 = vsub.s32 %v3364, %v3366
    %v3368 = vrot.slane %v3354, %v3367
    %v3369 = vcombine.low %v3361, %v3368
    %v3371 = vunpack.c.l.s4 1983009808
    %v3372 = vunpack.c.0.s8 %v3371
    %v3373 = vlaneseq
    %v3374 = vshrl.u32 %v3373, 7
    %v3375 = vsub.s32 %v3372, %v3374
    %v3376 = vrot.slane %v3192, %v3375
    %v3377 = vrot.slane %v3243, 1
    %v3378 = vrot.slane %v3260, 1
    %v3379 = vsel %vm1429, %v3377, %v3378
    %v3380 = vrot.slane %v3277, 1
    %v3381 = vsel %vm1429, %v3378, %v3380
    %v3382 = vrot.slane %v3294, 1
    %v3383 = vsel %vm1429, %v3380, %v3382
    %v3384 = vrot.slane %v3301, 1
    %v3385 = vsel %vm1429, %v3382, %v3384
    %v3386 = vrot.slane %v3318, 1
    %v3387 = vrot.slane %v3335, 1
    %v3388 = vsel %vm1429, %v3386, %v3387
    %v3389 = vrot.slane %v3352, 1
    %v3390 = vsel %vm1429, %v3387, %v3389
    %v3391 = vrot.slane %v3369, 1
    %v3392 = vsel %vm1429, %v3389, %v3391
    %v3393 = vrot.slane %v3376, 1
    %v3394 = vsel %vm1429, %v3391, %v3393
    %v3403 = vsel %vm3129, %v3379, 0.0
    %v3404 = vsel %vm3129, %v3381, 0.0
    %v3405 = vadd.f32 %v3403, %v3404
    %v3406 = vsel %vm3129, %v3383, 0.0
    %v3407 = vadd.f32 %v3405, %v3406
    %v3408 = vsel %vm3129, %v3385, 0.0
    %v3409 = vadd.f32 %v3407, %v3408
    %v3410 = vrot.slane %v3409, 4
    %v3411 = vadd.f32 %v3409, %v3410
    %v3412 = vrot.slane %v3411, 2
    %v3413 = vadd.f32 %v3411, %v3412
    %v3414 = vrot.slane %v3413, 1
    %v3415 = vadd.f32 %v3413, %v3414
    %v3416 = vsel %vm3129, %v3388, 0.0
    %v3417 = vsel %vm3129, %v3390, 0.0
    %v3418 = vadd.f32 %v3416, %v3417
    %v3419 = vsel %vm3129, %v3392, 0.0
    %v3420 = vadd.f32 %v3418, %v3419
    %v3421 = vsel %vm3129, %v3394, 0.0
    %v3422 = vadd.f32 %v3420, %v3421
    %v3423 = vrot.slane %v3422, 4
    %v3424 = vadd.f32 %v3422, %v3423
    %v3425 = vrot.slane %v3424, 2
    %v3426 = vadd.f32 %v3424, %v3425
    %v3427 = vrot.slane %v3426, 1
    %v3428 = vadd.f32 %v3426, %v3427
    %v3429 = vsel %vm3129, %v3415, 0.0
    %v3430 = vsel %vm3129, %v3428, 0.0
    %v3431 = vadd.f32 %v3429, %v3430
    %v3432 = vmul.f32 %v3158, 0.015625
    %v3433 = vmul.f32 %v3431, 0.015625
    %v3434 = vmul.f32 %v3432, %v3432
    %v3435 = vsub.f32 %v3433, %v3434
    %v3436 = vadd.f32 %v3435, 1e-05
    %v3437 = vrsqrt.pop %v3436
    %v3439 = vcombine.high %v3432, %v3432
    %v3441 = vunpack.c.l.s4 1983009808
    %v3442 = vunpack.c.0.s8 %v3441
    %v3443 = vlaneseq
    %v3444 = vshrl.u32 %v3443, 7
    %v3445 = vsub.s32 %v3442, %v3444
    %v3446 = vrot.slane %v3432, %v3445
    %v3448 = vunpack.c.l.s4 1983009808
    %v3449 = vunpack.c.0.s8 %v3448
    %v3450 = vlaneseq
    %v3451 = vshrl.u32 %v3450, 7
    %v3452 = vsub.s32 %v3449, %v3451
    %v3453 = vrot.slane %v3439, %v3452
    %v3454 = vcombine.high %v3446, %v3446
    %v3455 = vcombine.high %v3453, %v3453
    %vm3456 = vcmask 1042434
    %vm3457 = vmor %vm250, %vm3456
    %vm3458 = vcmask 1044484
    %vm3459 = vmor %vm3457, %vm3458
    %vm3460 = vcmask 1046534
    %vm3461 = vmor %vm3459, %vm3460
    %v3462 = vrot.slane %v3446, 7
    %v3463 = vrot.slane %v3462, 2
    %v3464 = vrot.slane %v3454, 7
    %v3465 = vsel %vm3461, %v3463, %v3464
    %v3466 = vrot.slane %v3464, 2
    %v3467 = vrot.slane %v3453, 7
    %v3468 = vsel %vm3461, %v3466, %v3467
    %v3469 = vrot.slane %v3467, 2
    %v3470 = vrot.slane %v3455, 7
    %v3471 = vsel %vm3461, %v3469, %v3470
    %v3472 = vrot.slane %v3470, 2
    %v3473 = vsel %vm3461, %v3472, %v3462
    %v3480 = vsub.f32 %v2885, %v3462
    %v3481 = vsub.f32 %v2886, %v3465
    %v3482 = vsub.f32 %v2887, %v3468
    %v3483 = vsub.f32 %v2888, %v3471
    %v3484 = vsub.f32 %v2889, %v3473
    %v3485 = vsub.f32 %v2890, %v3465
    %v3486 = vsub.f32 %v2891, %v3468
    %v3487 = vsub.f32 %v2892, %v3471
    %v3488 = vsub.f32 %v2893, %v3473
    %v3489 = vsub.f32 %v2894, %v3465
    %v3490 = vsub.f32 %v2895, %v3468
    %v3491 = vsub.f32 %v2896, %v3471
    %v3492 = vsub.f32 %v2897, %v3473
    %v3493 = vsub.f32 %v2898, %v3465
    %v3494 = vsub.f32 %v2899, %v3468
    %v3495 = vsub.f32 %v2900, %v3471
    %v3496 = vsub.f32 %v2901, %v3472
    %v3497 = vsub.f32 %v2902, %v3462
    %v3498 = vsub.f32 %v2903, %v3465
    %v3499 = vsub.f32 %v2904, %v3468
    %v3500 = vsub.f32 %v2905, %v3471
    %v3501 = vsub.f32 %v2906, %v3473
    %v3502 = vsub.f32 %v2907, %v3465
    %v3503 = vsub.f32 %v2908, %v3468
    %v3504 = vsub.f32 %v2909, %v3471
    %v3505 = vsub.f32 %v2910, %v3473
    %v3506 = vsub.f32 %v2911, %v3465
    %v3507 = vsub.f32 %v2912, %v3468
    %v3508 = vsub.f32 %v2913, %v3471
    %v3509 = vsub.f32 %v2914, %v3473
    %v3510 = vsub.f32 %v2915, %v3465
    %v3511 = vsub.f32 %v2916, %v3468
    %v3512 = vsub.f32 %v2917, %v3471
    %v3513 = vsub.f32 %v2918, %v3472
    %v3514 = vld [vmem:[%s11] sm:$0x1]
    %v3515 = vmul.f32 %v3437, %v3514
    %v3516 = vlaneseq
    %v3517 = vshrl.u32 %v3516, 7
    %v3518 = vsub.s32 0, %v3517
    %v3519 = vrot.slane %v3515, %v3518
    %v3521 = vcombine.high %v3519, %v3519
    %v3523 = vunpack.c.l.s4 1983009808
    %v3524 = vunpack.c.0.s8 %v3523
    %v3525 = vlaneseq
    %v3526 = vshrl.u32 %v3525, 7
    %v3527 = vsub.s32 %v3524, %v3526
    %v3528 = vrot.slane %v3519, %v3527
    %v3530 = vunpack.c.l.s4 1983009808
    %v3531 = vunpack.c.0.s8 %v3530
    %v3532 = vlaneseq
    %v3533 = vshrl.u32 %v3532, 7
    %v3534 = vsub.s32 %v3531, %v3533
    %v3535 = vrot.slane %v3521, %v3534
    %v3536 = vcombine.high %v3528, %v3528
    %v3537 = vcombine.high %v3535, %v3535
    %v3538 = vrot.slane %v3528, 7
    %v3539 = vrot.slane %v3538, 2
    %v3540 = vrot.slane %v3536, 7
    %v3541 = vsel %vm3461, %v3539, %v3540
    %v3542 = vrot.slane %v3540, 2
    %v3543 = vrot.slane %v3535, 7
    %v3544 = vsel %vm3461, %v3542, %v3543
    %v3545 = vrot.slane %v3543, 2
    %v3546 = vrot.slane %v3537, 7
    %v3547 = vsel %vm3461, %v3545, %v3546
    %v3548 = vrot.slane %v3546, 2
    %v3549 = vsel %vm3461, %v3548, %v3538
    %v3556 = vmul.f32 %v3480, %v3538
    %v3557 = vmul.f32 %v3481, %v3541
    %v3558 = vmul.f32 %v3482, %v3544
    %v3559 = vmul.f32 %v3483, %v3547
    %v3560 = vmul.f32 %v3484, %v3549
    %v3561 = vmul.f32 %v3485, %v3541
    %v3562 = vmul.f32 %v3486, %v3544
    %v3563 = vmul.f32 %v3487, %v3547
    %v3564 = vmul.f32 %v3488, %v3549
    %v3565 = vmul.f32 %v3489, %v3541
    %v3566 = vmul.f32 %v3490, %v3544
    %v3567 = vmul.f32 %v3491, %v3547
    %v3568 = vmul.f32 %v3492, %v3549
    %v3569 = vmul.f32 %v3493, %v3541
    %v3570 = vmul.f32 %v3494, %v3544
    %v3571 = vmul.f32 %v3495, %v3547
    %v3572 = vmul.f32 %v3496, %v3548
    %v3573 = vmul.f32 %v3497, %v3538
    %v3574 = vmul.f32 %v3498, %v3541
    %v3575 = vmul.f32 %v3499, %v3544
    %v3576 = vmul.f32 %v3500, %v3547
    %v3577 = vmul.f32 %v3501, %v3549
    %v3578 = vmul.f32 %v3502, %v3541
    %v3579 = vmul.f32 %v3503, %v3544
    %v3580 = vmul.f32 %v3504, %v3547
    %v3581 = vmul.f32 %v3505, %v3549
    %v3582 = vmul.f32 %v3506, %v3541
    %v3583 = vmul.f32 %v3507, %v3544
    %v3584 = vmul.f32 %v3508, %v3547
    %v3585 = vmul.f32 %v3509, %v3549
    %v3586 = vmul.f32 %v3510, %v3541
    %v3587 = vmul.f32 %v3511, %v3544
    %v3588 = vmul.f32 %v3512, %v3547
    %v3589 = vmul.f32 %v3513, %v3548
    %v3590 = vld [vmem:[%s12] sm:$0x1]
    %v3592 = vlaneseq
    %v3593 = vshrl.u32 %v3592, 7
    %v3594 = vsub.s32 0, %v3593
    %v3595 = vrot.slane %v3590, %v3594
    %v3596 = vcombine.high %v3595, %v3595
    %v3598 = vunpack.c.l.s4 1983009808
    %v3599 = vunpack.c.0.s8 %v3598
    %v3600 = vlaneseq
    %v3601 = vshrl.u32 %v3600, 7
    %v3602 = vsub.s32 %v3599, %v3601
    %v3603 = vrot.slane %v3595, %v3602
    %v3605 = vunpack.c.l.s4 1983009808
    %v3606 = vunpack.c.0.s8 %v3605
    %v3607 = vlaneseq
    %v3608 = vshrl.u32 %v3607, 7
    %v3609 = vsub.s32 %v3606, %v3608
    %v3610 = vrot.slane %v3596, %v3609
    %v3611 = vcombine.high %v3603, %v3603
    %v3612 = vcombine.high %v3610, %v3610
    %v3613 = vrot.slane %v3603, 7
    %v3614 = vrot.slane %v3613, 2
    %v3615 = vrot.slane %v3611, 7
    %v3616 = vsel %vm3461, %v3614, %v3615
    %v3617 = vrot.slane %v3615, 2
    %v3618 = vrot.slane %v3610, 7
    %v3619 = vsel %vm3461, %v3617, %v3618
    %v3620 = vrot.slane %v3618, 2
    %v3621 = vrot.slane %v3612, 7
    %v3622 = vsel %vm3461, %v3620, %v3621
    %v3623 = vrot.slane %v3621, 2
    %v3624 = vsel %vm3461, %v3623, %v3613
    %v3631 = vadd.f32 %v3556, %v3613
    %v3632 = vadd.f32 %v3557, %v3616
    %v3633 = vadd.f32 %v3558, %v3619
    %v3634 = vadd.f32 %v3559, %v3622
    %v3635 = vadd.f32 %v3560, %v3624
    %v3636 = vadd.f32 %v3561, %v3616
    %v3637 = vadd.f32 %v3562, %v3619
    %v3638 = vadd.f32 %v3563, %v3622
    %v3639 = vadd.f32 %v3564, %v3624
    %v3640 = vadd.f32 %v3565, %v3616
    %v3641 = vadd.f32 %v3566, %v3619
    %v3642 = vadd.f32 %v3567, %v3622
    %v3643 = vadd.f32 %v3568, %v3624
    %v3644 = vadd.f32 %v3569, %v3616
    %v3645 = vadd.f32 %v3570, %v3619
    %v3646 = vadd.f32 %v3571, %v3622
    %v3647 = vadd.f32 %v3572, %v3623
    %v3648 = vadd.f32 %v3573, %v3613
    %v3649 = vadd.f32 %v3574, %v3616
    %v3650 = vadd.f32 %v3575, %v3619
    %v3651 = vadd.f32 %v3576, %v3622
    %v3652 = vadd.f32 %v3577, %v3624
    %v3653 = vadd.f32 %v3578, %v3616
    %v3654 = vadd.f32 %v3579, %v3619
    %v3655 = vadd.f32 %v3580, %v3622
    %v3656 = vadd.f32 %v3581, %v3624
    %v3657 = vadd.f32 %v3582, %v3616
    %v3658 = vadd.f32 %v3583, %v3619
    %v3659 = vadd.f32 %v3584, %v3622
    %v3660 = vadd.f32 %v3585, %v3624
    %v3661 = vadd.f32 %v3586, %v3616
    %v3662 = vadd.f32 %v3587, %v3619
    %v3663 = vadd.f32 %v3588, %v3622
    %v3664 = vadd.f32 %v3589, %v3623
    %v3699 = vcombine.low %v3631, %v3631
    %v3700 = vcombine.low %v3632, %v3633
    %v3702 = vunpack.c.l.s4 1983009808
    %v3703 = vunpack.c.0.s8 %v3702
    %v3704 = vlaneseq
    %v3705 = vshrl.u32 %v3704, 7
    %v3706 = vsub.s32 %v3703, %v3705
    %v3707 = vrot.slane %v3699, %v3706
    %v3709 = vunpack.c.l.s4 1983009808
    %v3710 = vunpack.c.0.s8 %v3709
    %v3711 = vlaneseq
    %v3712 = vshrl.u32 %v3711, 7
    %v3713 = vsub.s32 %v3710, %v3712
    %v3714 = vrot.slane %v3700, %v3713
    %v3715 = vcombine.low %v3707, %v3714
    %v3716 = vcombine.low %v3634, %v3635
    %v3717 = vcombine.low %v3636, %v3637
    %v3719 = vunpack.c.l.s4 1983009808
    %v3720 = vunpack.c.0.s8 %v3719
    %v3721 = vlaneseq
    %v3722 = vshrl.u32 %v3721, 7
    %v3723 = vsub.s32 %v3720, %v3722
    %v3724 = vrot.slane %v3716, %v3723
    %v3726 = vunpack.c.l.s4 1983009808
    %v3727 = vunpack.c.0.s8 %v3726
    %v3728 = vlaneseq
    %v3729 = vshrl.u32 %v3728, 7
    %v3730 = vsub.s32 %v3727, %v3729
    %v3731 = vrot.slane %v3717, %v3730
    %v3732 = vcombine.low %v3724, %v3731
    %v3733 = vcombine.low %v3638, %v3639
    %v3734 = vcombine.low %v3640, %v3641
    %v3736 = vunpack.c.l.s4 1983009808
    %v3737 = vunpack.c.0.s8 %v3736
    %v3738 = vlaneseq
    %v3739 = vshrl.u32 %v3738, 7
    %v3740 = vsub.s32 %v3737, %v3739
    %v3741 = vrot.slane %v3733, %v3740
    %v3743 = vunpack.c.l.s4 1983009808
    %v3744 = vunpack.c.0.s8 %v3743
    %v3745 = vlaneseq
    %v3746 = vshrl.u32 %v3745, 7
    %v3747 = vsub.s32 %v3744, %v3746
    %v3748 = vrot.slane %v3734, %v3747
    %v3749 = vcombine.low %v3741, %v3748
    %v3750 = vcombine.low %v3642, %v3643
    %v3751 = vcombine.low %v3644, %v3645
    %v3753 = vunpack.c.l.s4 1983009808
    %v3754 = vunpack.c.0.s8 %v3753
    %v3755 = vlaneseq
    %v3756 = vshrl.u32 %v3755, 7
    %v3757 = vsub.s32 %v3754, %v3756
    %v3758 = vrot.slane %v3750, %v3757
    %v3760 = vunpack.c.l.s4 1983009808
    %v3761 = vunpack.c.0.s8 %v3760
    %v3762 = vlaneseq
    %v3763 = vshrl.u32 %v3762, 7
    %v3764 = vsub.s32 %v3761, %v3763
    %v3765 = vrot.slane %v3751, %v3764
    %v3766 = vcombine.low %v3758, %v3765
    %v3767 = vcombine.low %v3646, %v3647
    %v3769 = vunpack.c.l.s4 1983009808
    %v3770 = vunpack.c.0.s8 %v3769
    %v3771 = vlaneseq
    %v3772 = vshrl.u32 %v3771, 7
    %v3773 = vsub.s32 %v3770, %v3772
    %v3774 = vrot.slane %v3767, %v3773
    %v3775 = vcombine.low %v3648, %v3648
    %v3776 = vcombine.low %v3649, %v3650
    %v3778 = vunpack.c.l.s4 1983009808
    %v3779 = vunpack.c.0.s8 %v3778
    %v3780 = vlaneseq
    %v3781 = vshrl.u32 %v3780, 7
    %v3782 = vsub.s32 %v3779, %v3781
    %v3783 = vrot.slane %v3775, %v3782
    %v3785 = vunpack.c.l.s4 1983009808
    %v3786 = vunpack.c.0.s8 %v3785
    %v3787 = vlaneseq
    %v3788 = vshrl.u32 %v3787, 7
    %v3789 = vsub.s32 %v3786, %v3788
    %v3790 = vrot.slane %v3776, %v3789
    %v3791 = vcombine.low %v3783, %v3790
    %v3792 = vcombine.low %v3651, %v3652
    %v3793 = vcombine.low %v3653, %v3654
    %v3795 = vunpack.c.l.s4 1983009808
    %v3796 = vunpack.c.0.s8 %v3795
    %v3797 = vlaneseq
    %v3798 = vshrl.u32 %v3797, 7
    %v3799 = vsub.s32 %v3796, %v3798
    %v3800 = vrot.slane %v3792, %v3799
    %v3802 = vunpack.c.l.s4 1983009808
    %v3803 = vunpack.c.0.s8 %v3802
    %v3804 = vlaneseq
    %v3805 = vshrl.u32 %v3804, 7
    %v3806 = vsub.s32 %v3803, %v3805
    %v3807 = vrot.slane %v3793, %v3806
    %v3808 = vcombine.low %v3800, %v3807
    %v3809 = vcombine.low %v3655, %v3656
    %v3810 = vcombine.low %v3657, %v3658
    %v3812 = vunpack.c.l.s4 1983009808
    %v3813 = vunpack.c.0.s8 %v3812
    %v3814 = vlaneseq
    %v3815 = vshrl.u32 %v3814, 7
    %v3816 = vsub.s32 %v3813, %v3815
    %v3817 = vrot.slane %v3809, %v3816
    %v3819 = vunpack.c.l.s4 1983009808
    %v3820 = vunpack.c.0.s8 %v3819
    %v3821 = vlaneseq
    %v3822 = vshrl.u32 %v3821, 7
    %v3823 = vsub.s32 %v3820, %v3822
    %v3824 = vrot.slane %v3810, %v3823
    %v3825 = vcombine.low %v3817, %v3824
    %v3826 = vcombine.low %v3659, %v3660
    %v3827 = vcombine.low %v3661, %v3662
    %v3829 = vunpack.c.l.s4 1983009808
    %v3830 = vunpack.c.0.s8 %v3829
    %v3831 = vlaneseq
    %v3832 = vshrl.u32 %v3831, 7
    %v3833 = vsub.s32 %v3830, %v3832
    %v3834 = vrot.slane %v3826, %v3833
    %v3836 = vunpack.c.l.s4 1983009808
    %v3837 = vunpack.c.0.s8 %v3836
    %v3838 = vlaneseq
    %v3839 = vshrl.u32 %v3838, 7
    %v3840 = vsub.s32 %v3837, %v3839
    %v3841 = vrot.slane %v3827, %v3840
    %v3842 = vcombine.low %v3834, %v3841
    %v3843 = vcombine.low %v3663, %v3664
    %v3845 = vunpack.c.l.s4 1983009808
    %v3846 = vunpack.c.0.s8 %v3845
    %v3847 = vlaneseq
    %v3848 = vshrl.u32 %v3847, 7
    %v3849 = vsub.s32 %v3846, %v3848
    %v3850 = vrot.slane %v3843, %v3849
    %v3861 = vsel %vm256, 0.0, %v3715
    %v3862 = vsel %vm256, 0.0, %v3791
    %v3863 = vsel %vm256, %v3774, 0.0
    %v3864 = vsel %vm256, %v3850, 0.0
    %v3865 = vld [vmem:[#allocation4] sm:$0x1]
    %v3867 = vlaneseq
    %v3868 = vshrl.u32 %v3867, 7
    %v3869 = vsub.s32 0, %v3868
    %v3870 = vrot.slane %v3865, %v3869
    %3871 = vset.pattern.permute.xlu0 0
    %3872 = vperm.xlu0 %3871, %v3870
    %v3873 = vpop.permute.xlu0 %3872
    %v3875 = vadd.f32 %v3873, 0.0
    %v3876 = vld [vmem:[%s13] sm:$0x1]
    %v3878 = vlaneseq
    %v3879 = vshrl.u32 %v3878, 7
    %v3880 = vsub.s32 0, %v3879
    %v3881 = vrot.slane %v3876, %v3880
    %v3883 = vmul.f32 %v3861, %v3881
    %v3884 = vmul.f32 %v3732, %v3881
    %v3885 = vmul.f32 %v3749, %v3881
    %v3886 = vmul.f32 %v3766, %v3881
    %v3887 = vmul.f32 %v3862, %v3881
    %v3888 = vmul.f32 %v3808, %v3881
    %v3889 = vmul.f32 %v3825, %v3881
    %v3890 = vmul.f32 %v3842, %v3881
    %v3891 = vsel %vm3129, %v3883, 0.0
    %3892 = vadd.xlane.f32.xlu0 %v3891
    %v3893 = vpop.xlane.xlu0 %3892
    %v3894 = vsel %vm3129, %v3884, 0.0
    %3895 = vadd.xlane.f32.xlu0 %v3894
    %v3896 = vpop.xlane.xlu0 %3895
    %v3897 = vsel %vm3129, %v3885, 0.0
    %3898 = vadd.xlane.f32.xlu0 %v3897
    %v3899 = vpop.xlane.xlu0 %3898
    %v3900 = vsel %vm3129, %v3886, 0.0
    %3901 = vadd.xlane.f32.xlu0 %v3900
    %v3902 = vpop.xlane.xlu0 %3901
    %v3903 = vsel %vm3129, %v3887, 0.0
    %3904 = vadd.xlane.f32.xlu0 %v3903
    %v3905 = vpop.xlane.xlu0 %3904
    %v3906 = vsel %vm3129, %v3888, 0.0
    %3907 = vadd.xlane.f32.xlu0 %v3906
    %v3908 = vpop.xlane.xlu0 %3907
    %v3909 = vsel %vm3129, %v3889, 0.0
    %3910 = vadd.xlane.f32.xlu0 %v3909
    %v3911 = vpop.xlane.xlu0 %3910
    %v3912 = vsel %vm3129, %v3890, 0.0
    %3913 = vadd.xlane.f32.xlu0 %v3912
    %v3914 = vpop.xlane.xlu0 %3913
    %v3915 = vadd.f32 %v3875, %v3893
    %v3916 = vadd.f32 %v3875, %v3896
    %v3917 = vadd.f32 %v3875, %v3899
    %v3918 = vadd.f32 %v3875, %v3902
    %v3919 = vadd.f32 %v3875, %v3905
    %v3920 = vadd.f32 %v3875, %v3908
    %v3921 = vadd.f32 %v3875, %v3911
    %v3922 = vadd.f32 %v3875, %v3914
    %s3923 = scalar_lea.vmem %s13, 1
    %v3924 = vld [vmem:[%s3923] sm:$0x1]
    %v3926 = vlaneseq
    %v3927 = vshrl.u32 %v3926, 7
    %v3928 = vsub.s32 0, %v3927
    %v3929 = vrot.slane %v3924, %v3928
    %v3931 = vmul.f32 %v3861, %v3929
    %v3932 = vmul.f32 %v3732, %v3929
    %v3933 = vmul.f32 %v3749, %v3929
    %v3934 = vmul.f32 %v3766, %v3929
    %v3935 = vmul.f32 %v3863, %v3929
    %v3936 = vmul.f32 %v3862, %v3929
    %v3937 = vmul.f32 %v3808, %v3929
    %v3938 = vmul.f32 %v3825, %v3929
    %v3939 = vmul.f32 %v3842, %v3929
    %v3940 = vmul.f32 %v3864, %v3929
    %vm3941 = vcmask 31745
    %v3942 = vsel %vm3941, %v3931, 0.0
    %3943 = vadd.xlane.f32.xlu0 %v3942
    %v3944 = vpop.xlane.xlu0 %3943
    %v3945 = vsel %vm3129, %v3932, 0.0
    %3946 = vadd.xlane.f32.xlu0 %v3945
    %v3947 = vpop.xlane.xlu0 %3946
    %v3948 = vsel %vm3129, %v3933, 0.0
    %3949 = vadd.xlane.f32.xlu0 %v3948
    %v3950 = vpop.xlane.xlu0 %3949
    %v3951 = vsel %vm3129, %v3934, 0.0
    %3952 = vadd.xlane.f32.xlu0 %v3951
    %v3953 = vpop.xlane.xlu0 %3952
    %v3954 = vsel %vm2578, %v3935, 0.0
    %3955 = vadd.xlane.f32.xlu0 %v3954
    %v3956 = vpop.xlane.xlu0 %3955
    %v3957 = vsel %vm3941, %v3936, 0.0
    %3958 = vadd.xlane.f32.xlu0 %v3957
    %v3959 = vpop.xlane.xlu0 %3958
    %v3960 = vsel %vm3129, %v3937, 0.0
    %3961 = vadd.xlane.f32.xlu0 %v3960
    %v3962 = vpop.xlane.xlu0 %3961
    %v3963 = vsel %vm3129, %v3938, 0.0
    %3964 = vadd.xlane.f32.xlu0 %v3963
    %v3965 = vpop.xlane.xlu0 %3964
    %v3966 = vsel %vm3129, %v3939, 0.0
    %3967 = vadd.xlane.f32.xlu0 %v3966
    %v3968 = vpop.xlane.xlu0 %3967
    %v3969 = vsel %vm2578, %v3940, 0.0
    %3970 = vadd.xlane.f32.xlu0 %v3969
    %v3971 = vpop.xlane.xlu0 %3970
    %v3982 = vrot.slane %v3944, 1
    %v3983 = vrot.slane %v3947, 1
    %v3984 = vsel %vm1429, %v3982, %v3983
    %v3985 = vrot.slane %v3950, 1
    %v3986 = vsel %vm1429, %v3983, %v3985
    %v3987 = vrot.slane %v3953, 1
    %v3988 = vsel %vm1429, %v3985, %v3987
    %v3989 = vrot.slane %v3956, 1
    %v3990 = vsel %vm1429, %v3987, %v3989
    %v3991 = vrot.slane %v3959, 1
    %v3992 = vrot.slane %v3962, 1
    %v3993 = vsel %vm1429, %v3991, %v3992
    %v3994 = vrot.slane %v3965, 1
    %v3995 = vsel %vm1429, %v3992, %v3994
    %v3996 = vrot.slane %v3968, 1
    %v3997 = vsel %vm1429, %v3994, %v3996
    %v3998 = vrot.slane %v3971, 1
    %v3999 = vsel %vm1429, %v3996, %v3998
    %v4008 = vadd.f32 %v3915, %v3984
    %v4009 = vadd.f32 %v3916, %v3986
    %v4010 = vadd.f32 %v3917, %v3988
    %v4011 = vadd.f32 %v3918, %v3990
    %v4012 = vadd.f32 %v3919, %v3993
    %v4013 = vadd.f32 %v3920, %v3995
    %v4014 = vadd.f32 %v3921, %v3997
    %v4015 = vadd.f32 %v3922, %v3999
    %s4016 = scalar_lea.vmem %s13, 2
    %v4017 = vld [vmem:[%s4016] sm:$0x1]
    %v4019 = vlaneseq
    %v4020 = vshrl.u32 %v4019, 7
    %v4021 = vsub.s32 0, %v4020
    %v4022 = vrot.slane %v4017, %v4021
    %v4024 = vmul.f32 %v3861, %v4022
    %v4025 = vmul.f32 %v3732, %v4022
    %v4026 = vmul.f32 %v3749, %v4022
    %v4027 = vmul.f32 %v3766, %v4022
    %v4028 = vmul.f32 %v3863, %v4022
    %v4029 = vmul.f32 %v3862, %v4022
    %v4030 = vmul.f32 %v3808, %v4022
    %v4031 = vmul.f32 %v3825, %v4022
    %v4032 = vmul.f32 %v3842, %v4022
    %v4033 = vmul.f32 %v3864, %v4022
    %vm4034 = vcmask 31746
    %v4035 = vsel %vm4034, %v4024, 0.0
    %4036 = vadd.xlane.f32.xlu0 %v4035
    %v4037 = vpop.xlane.xlu0 %4036
    %v4038 = vsel %vm3129, %v4025, 0.0
    %4039 = vadd.xlane.f32.xlu0 %v4038
    %v4040 = vpop.xlane.xlu0 %4039
    %v4041 = vsel %vm3129, %v4026, 0.0
    %4042 = vadd.xlane.f32.xlu0 %v4041
    %v4043 = vpop.xlane.xlu0 %4042
    %v4044 = vsel %vm3129, %v4027, 0.0
    %4045 = vadd.xlane.f32.xlu0 %v4044
    %v4046 = vpop.xlane.xlu0 %4045
    %vm4047 = vcmask 25600
    %v4048 = vsel %vm4047, %v4028, 0.0
    %4049 = vadd.xlane.f32.xlu0 %v4048
    %v4050 = vpop.xlane.xlu0 %4049
    %v4051 = vsel %vm4034, %v4029, 0.0
    %4052 = vadd.xlane.f32.xlu0 %v4051
    %v4053 = vpop.xlane.xlu0 %4052
    %v4054 = vsel %vm3129, %v4030, 0.0
    %4055 = vadd.xlane.f32.xlu0 %v4054
    %v4056 = vpop.xlane.xlu0 %4055
    %v4057 = vsel %vm3129, %v4031, 0.0
    %4058 = vadd.xlane.f32.xlu0 %v4057
    %v4059 = vpop.xlane.xlu0 %4058
    %v4060 = vsel %vm3129, %v4032, 0.0
    %4061 = vadd.xlane.f32.xlu0 %v4060
    %v4062 = vpop.xlane.xlu0 %4061
    %v4063 = vsel %vm4047, %v4033, 0.0
    %4064 = vadd.xlane.f32.xlu0 %v4063
    %v4065 = vpop.xlane.xlu0 %4064
    %v4076 = vrot.slane %v4037, 2
    %v4077 = vrot.slane %v4040, 2
    %v4078 = vsel %vm1013, %v4076, %v4077
    %v4079 = vrot.slane %v4043, 2
    %v4080 = vsel %vm1013, %v4077, %v4079
    %v4081 = vrot.slane %v4046, 2
    %v4082 = vsel %vm1013, %v4079, %v4081
    %v4083 = vrot.slane %v4050, 2
    %v4084 = vsel %vm1013, %v4081, %v4083
    %v4085 = vrot.slane %v4053, 2
    %v4086 = vrot.slane %v4056, 2
    %v4087 = vsel %vm1013, %v4085, %v4086
    %v4088 = vrot.slane %v4059, 2
    %v4089 = vsel %vm1013, %v4086, %v4088
    %v4090 = vrot.slane %v4062, 2
    %v4091 = vsel %vm1013, %v4088, %v4090
    %v4092 = vrot.slane %v4065, 2
    %v4093 = vsel %vm1013, %v4090, %v4092
    %v4102 = vadd.f32 %v4008, %v4078
    %v4103 = vadd.f32 %v4009, %v4080
    %v4104 = vadd.f32 %v4010, %v4082
    %v4105 = vadd.f32 %v4011, %v4084
    %v4106 = vadd.f32 %v4012, %v4087
    %v4107 = vadd.f32 %v4013, %v4089
    %v4108 = vadd.f32 %v4014, %v4091
    %v4109 = vadd.f32 %v4015, %v4093
    %s4110 = scalar_lea.vmem %s13, 3
    %v4111 = vld [vmem:[%s4110] sm:$0x1]
    %v4113 = vlaneseq
    %v4114 = vshrl.u32 %v4113, 7
    %v4115 = vsub.s32 0, %v4114
    %v4116 = vrot.slane %v4111, %v4115
    %v4118 = vmul.f32 %v3861, %v4116
    %v4119 = vmul.f32 %v3732, %v4116
    %v4120 = vmul.f32 %v3749, %v4116
    %v4121 = vmul.f32 %v3766, %v4116
    %v4122 = vmul.f32 %v3863, %v4116
    %v4123 = vmul.f32 %v3862, %v4116
    %v4124 = vmul.f32 %v3808, %v4116
    %v4125 = vmul.f32 %v3825, %v4116
    %v4126 = vmul.f32 %v3842, %v4116
    %v4127 = vmul.f32 %v3864, %v4116
    %vm4128 = vcmask 31747
    %v4129 = vsel %vm4128, %v4118, 0.0
    %4130 = vadd.xlane.f32.xlu0 %v4129
    %v4131 = vpop.xlane.xlu0 %4130
    %v4132 = vsel %vm3129, %v4119, 0.0
    %4133 = vadd.xlane.f32.xlu0 %v4132
    %v4134 = vpop.xlane.xlu0 %4133
    %v4135 = vsel %vm3129, %v4120, 0.0
    %4136 = vadd.xlane.f32.xlu0 %v4135
    %v4137 = vpop.xlane.xlu0 %4136
    %v4138 = vsel %vm3129, %v4121, 0.0
    %4139 = vadd.xlane.f32.xlu0 %v4138
    %v4140 = vpop.xlane.xlu0 %4139
    %vm4141 = vcmask 26624
    %v4142 = vsel %vm4141, %v4122, 0.0
    %4143 = vadd.xlane.f32.xlu0 %v4142
    %v4144 = vpop.xlane.xlu0 %4143
    %v4145 = vsel %vm4128, %v4123, 0.0
    %4146 = vadd.xlane.f32.xlu0 %v4145
    %v4147 = vpop.xlane.xlu0 %4146
    %v4148 = vsel %vm3129, %v4124, 0.0
    %4149 = vadd.xlane.f32.xlu0 %v4148
    %v4150 = vpop.xlane.xlu0 %4149
    %v4151 = vsel %vm3129, %v4125, 0.0
    %4152 = vadd.xlane.f32.xlu0 %v4151
    %v4153 = vpop.xlane.xlu0 %4152
    %v4154 = vsel %vm3129, %v4126, 0.0
    %4155 = vadd.xlane.f32.xlu0 %v4154
    %v4156 = vpop.xlane.xlu0 %4155
    %v4157 = vsel %vm4141, %v4127, 0.0
    %4158 = vadd.xlane.f32.xlu0 %v4157
    %v4159 = vpop.xlane.xlu0 %4158
    %vm4170 = vcmask 1044480
    %v4171 = vrot.slane %v4131, 3
    %v4172 = vrot.slane %v4134, 3
    %v4173 = vsel %vm4170, %v4171, %v4172
    %v4174 = vrot.slane %v4137, 3
    %v4175 = vsel %vm4170, %v4172, %v4174
    %v4176 = vrot.slane %v4140, 3
    %v4177 = vsel %vm4170, %v4174, %v4176
    %v4178 = vrot.slane %v4144, 3
    %v4179 = vsel %vm4170, %v4176, %v4178
    %v4180 = vrot.slane %v4147, 3
    %v4181 = vrot.slane %v4150, 3
    %v4182 = vsel %vm4170, %v4180, %v4181
    %v4183 = vrot.slane %v4153, 3
    %v4184 = vsel %vm4170, %v4181, %v4183
    %v4185 = vrot.slane %v4156, 3
    %v4186 = vsel %vm4170, %v4183, %v4185
    %v4187 = vrot.slane %v4159, 3
    %v4188 = vsel %vm4170, %v4185, %v4187
    %v4197 = vadd.f32 %v4102, %v4173
    %v4198 = vadd.f32 %v4103, %v4175
    %v4199 = vadd.f32 %v4104, %v4177
    %v4200 = vadd.f32 %v4105, %v4179
    %v4201 = vadd.f32 %v4106, %v4182
    %v4202 = vadd.f32 %v4107, %v4184
    %v4203 = vadd.f32 %v4108, %v4186
    %v4204 = vadd.f32 %v4109, %v4188
    %s4205 = scalar_lea.vmem %s13, 4
    %v4206 = vld [vmem:[%s4205] sm:$0x1]
    %v4208 = vlaneseq
    %v4209 = vshrl.u32 %v4208, 7
    %v4210 = vsub.s32 0, %v4209
    %v4211 = vrot.slane %v4206, %v4210
    %v4213 = vmul.f32 %v3861, %v4211
    %v4214 = vmul.f32 %v3732, %v4211
    %v4215 = vmul.f32 %v3749, %v4211
    %v4216 = vmul.f32 %v3766, %v4211
    %v4217 = vmul.f32 %v3863, %v4211
    %v4218 = vmul.f32 %v3862, %v4211
    %v4219 = vmul.f32 %v3808, %v4211
    %v4220 = vmul.f32 %v3825, %v4211
    %v4221 = vmul.f32 %v3842, %v4211
    %v4222 = vmul.f32 %v3864, %v4211
    %vm4223 = vcmask 31748
    %v4224 = vsel %vm4223, %v4213, 0.0
    %4225 = vadd.xlane.f32.xlu0 %v4224
    %v4226 = vpop.xlane.xlu0 %4225
    %v4227 = vsel %vm3129, %v4214, 0.0
    %4228 = vadd.xlane.f32.xlu0 %v4227
    %v4229 = vpop.xlane.xlu0 %4228
    %v4230 = vsel %vm3129, %v4215, 0.0
    %4231 = vadd.xlane.f32.xlu0 %v4230
    %v4232 = vpop.xlane.xlu0 %4231
    %v4233 = vsel %vm3129, %v4216, 0.0
    %4234 = vadd.xlane.f32.xlu0 %v4233
    %v4235 = vpop.xlane.xlu0 %4234
    %vm4236 = vcmask 27648
    %v4237 = vsel %vm4236, %v4217, 0.0
    %4238 = vadd.xlane.f32.xlu0 %v4237
    %v4239 = vpop.xlane.xlu0 %4238
    %v4240 = vsel %vm4223, %v4218, 0.0
    %4241 = vadd.xlane.f32.xlu0 %v4240
    %v4242 = vpop.xlane.xlu0 %4241
    %v4243 = vsel %vm3129, %v4219, 0.0
    %4244 = vadd.xlane.f32.xlu0 %v4243
    %v4245 = vpop.xlane.xlu0 %4244
    %v4246 = vsel %vm3129, %v4220, 0.0
    %4247 = vadd.xlane.f32.xlu0 %v4246
    %v4248 = vpop.xlane.xlu0 %4247
    %v4249 = vsel %vm3129, %v4221, 0.0
    %4250 = vadd.xlane.f32.xlu0 %v4249
    %v4251 = vpop.xlane.xlu0 %4250
    %v4252 = vsel %vm4236, %v4222, 0.0
    %4253 = vadd.xlane.f32.xlu0 %v4252
    %v4254 = vpop.xlane.xlu0 %4253
    %v4265 = vrot.slane %v4226, 4
    %v4266 = vrot.slane %v4229, 4
    %v4267 = vsel %vm259, %v4265, %v4266
    %v4268 = vrot.slane %v4232, 4
    %v4269 = vsel %vm259, %v4266, %v4268
    %v4270 = vrot.slane %v4235, 4
    %v4271 = vsel %vm259, %v4268, %v4270
    %v4272 = vrot.slane %v4239, 4
    %v4273 = vsel %vm259, %v4270, %v4272
    %v4274 = vrot.slane %v4242, 4
    %v4275 = vrot.slane %v4245, 4
    %v4276 = vsel %vm259, %v4274, %v4275
    %v4277 = vrot.slane %v4248, 4
    %v4278 = vsel %vm259, %v4275, %v4277
    %v4279 = vrot.slane %v4251, 4
    %v4280 = vsel %vm259, %v4277, %v4279
    %v4281 = vrot.slane %v4254, 4
    %v4282 = vsel %vm259, %v4279, %v4281
    %v4291 = vadd.f32 %v4197, %v4267
    %v4292 = vadd.f32 %v4198, %v4269
    %v4293 = vadd.f32 %v4199, %v4271
    %v4294 = vadd.f32 %v4200, %v4273
    %v4295 = vadd.f32 %v4201, %v4276
    %v4296 = vadd.f32 %v4202, %v4278
    %v4297 = vadd.f32 %v4203, %v4280
    %v4298 = vadd.f32 %v4204, %v4282
    %s4299 = scalar_lea.vmem %s13, 5
    %v4300 = vld [vmem:[%s4299] sm:$0x1]
    %v4302 = vlaneseq
    %v4303 = vshrl.u32 %v4302, 7
    %v4304 = vsub.s32 0, %v4303
    %v4305 = vrot.slane %v4300, %v4304
    %v4307 = vmul.f32 %v3861, %v4305
    %v4308 = vmul.f32 %v3732, %v4305
    %v4309 = vmul.f32 %v3749, %v4305
    %v4310 = vmul.f32 %v3766, %v4305
    %v4311 = vmul.f32 %v3863, %v4305
    %v4312 = vmul.f32 %v3862, %v4305
    %v4313 = vmul.f32 %v3808, %v4305
    %v4314 = vmul.f32 %v3825, %v4305
    %v4315 = vmul.f32 %v3842, %v4305
    %v4316 = vmul.f32 %v3864, %v4305
    %vm4317 = vcmask 31749
    %v4318 = vsel %vm4317, %v4307, 0.0
    %4319 = vadd.xlane.f32.xlu0 %v4318
    %v4320 = vpop.xlane.xlu0 %4319
    %v4321 = vsel %vm3129, %v4308, 0.0
    %4322 = vadd.xlane.f32.xlu0 %v4321
    %v4323 = vpop.xlane.xlu0 %4322
    %v4324 = vsel %vm3129, %v4309, 0.0
    %4325 = vadd.xlane.f32.xlu0 %v4324
    %v4326 = vpop.xlane.xlu0 %4325
    %v4327 = vsel %vm3129, %v4310, 0.0
    %4328 = vadd.xlane.f32.xlu0 %v4327
    %v4329 = vpop.xlane.xlu0 %4328
    %vm4330 = vcmask 28672
    %v4331 = vsel %vm4330, %v4311, 0.0
    %4332 = vadd.xlane.f32.xlu0 %v4331
    %v4333 = vpop.xlane.xlu0 %4332
    %v4334 = vsel %vm4317, %v4312, 0.0
    %4335 = vadd.xlane.f32.xlu0 %v4334
    %v4336 = vpop.xlane.xlu0 %4335
    %v4337 = vsel %vm3129, %v4313, 0.0
    %4338 = vadd.xlane.f32.xlu0 %v4337
    %v4339 = vpop.xlane.xlu0 %4338
    %v4340 = vsel %vm3129, %v4314, 0.0
    %4341 = vadd.xlane.f32.xlu0 %v4340
    %v4342 = vpop.xlane.xlu0 %4341
    %v4343 = vsel %vm3129, %v4315, 0.0
    %4344 = vadd.xlane.f32.xlu0 %v4343
    %v4345 = vpop.xlane.xlu0 %4344
    %v4346 = vsel %vm4330, %v4316, 0.0
    %4347 = vadd.xlane.f32.xlu0 %v4346
    %v4348 = vpop.xlane.xlu0 %4347
    %v4359 = vrot.slane %v4320, 5
    %v4360 = vrot.slane %v4323, 5
    %v4361 = vsel %vm256, %v4359, %v4360
    %v4362 = vrot.slane %v4326, 5
    %v4363 = vsel %vm256, %v4360, %v4362
    %v4364 = vrot.slane %v4329, 5
    %v4365 = vsel %vm256, %v4362, %v4364
    %v4366 = vrot.slane %v4333, 5
    %v4367 = vsel %vm256, %v4364, %v4366
    %v4368 = vrot.slane %v4336, 5
    %v4369 = vrot.slane %v4339, 5
    %v4370 = vsel %vm256, %v4368, %v4369
    %v4371 = vrot.slane %v4342, 5
    %v4372 = vsel %vm256, %v4369, %v4371
    %v4373 = vrot.slane %v4345, 5
    %v4374 = vsel %vm256, %v4371, %v4373
    %v4375 = vrot.slane %v4348, 5
    %v4376 = vsel %vm256, %v4373, %v4375
    %v4385 = vadd.f32 %v4291, %v4361
    %v4386 = vadd.f32 %v4292, %v4363
    %v4387 = vadd.f32 %v4293, %v4365
    %v4388 = vadd.f32 %v4294, %v4367
    %v4389 = vadd.f32 %v4295, %v4370
    %v4390 = vadd.f32 %v4296, %v4372
    %v4391 = vadd.f32 %v4297, %v4374
    %v4392 = vadd.f32 %v4298, %v4376
    %s4393 = scalar_lea.vmem %s13, 6
    %v4394 = vld [vmem:[%s4393] sm:$0x1]
    %v4396 = vlaneseq
    %v4397 = vshrl.u32 %v4396, 7
    %v4398 = vsub.s32 0, %v4397
    %v4399 = vrot.slane %v4394, %v4398
    %v4401 = vmul.f32 %v3861, %v4399
    %v4402 = vmul.f32 %v3732, %v4399
    %v4403 = vmul.f32 %v3749, %v4399
    %v4404 = vmul.f32 %v3766, %v4399
    %v4405 = vmul.f32 %v3863, %v4399
    %v4406 = vmul.f32 %v3862, %v4399
    %v4407 = vmul.f32 %v3808, %v4399
    %v4408 = vmul.f32 %v3825, %v4399
    %v4409 = vmul.f32 %v3842, %v4399
    %v4410 = vmul.f32 %v3864, %v4399
    %vm4411 = vcmask 31750
    %v4412 = vsel %vm4411, %v4401, 0.0
    %4413 = vadd.xlane.f32.xlu0 %v4412
    %v4414 = vpop.xlane.xlu0 %4413
    %v4415 = vsel %vm3129, %v4402, 0.0
    %4416 = vadd.xlane.f32.xlu0 %v4415
    %v4417 = vpop.xlane.xlu0 %4416
    %v4418 = vsel %vm3129, %v4403, 0.0
    %4419 = vadd.xlane.f32.xlu0 %v4418
    %v4420 = vpop.xlane.xlu0 %4419
    %v4421 = vsel %vm3129, %v4404, 0.0
    %4422 = vadd.xlane.f32.xlu0 %v4421
    %v4423 = vpop.xlane.xlu0 %4422
    %vm4424 = vcmask 29696
    %v4425 = vsel %vm4424, %v4405, 0.0
    %4426 = vadd.xlane.f32.xlu0 %v4425
    %v4427 = vpop.xlane.xlu0 %4426
    %v4428 = vsel %vm4411, %v4406, 0.0
    %4429 = vadd.xlane.f32.xlu0 %v4428
    %v4430 = vpop.xlane.xlu0 %4429
    %v4431 = vsel %vm3129, %v4407, 0.0
    %4432 = vadd.xlane.f32.xlu0 %v4431
    %v4433 = vpop.xlane.xlu0 %4432
    %v4434 = vsel %vm3129, %v4408, 0.0
    %4435 = vadd.xlane.f32.xlu0 %v4434
    %v4436 = vpop.xlane.xlu0 %4435
    %v4437 = vsel %vm3129, %v4409, 0.0
    %4438 = vadd.xlane.f32.xlu0 %v4437
    %v4439 = vpop.xlane.xlu0 %4438
    %v4440 = vsel %vm4424, %v4410, 0.0
    %4441 = vadd.xlane.f32.xlu0 %v4440
    %v4442 = vpop.xlane.xlu0 %4441
    %v4453 = vrot.slane %v4414, 6
    %v4454 = vrot.slane %v4417, 6
    %v4455 = vsel %vm253, %v4453, %v4454
    %v4456 = vrot.slane %v4420, 6
    %v4457 = vsel %vm253, %v4454, %v4456
    %v4458 = vrot.slane %v4423, 6
    %v4459 = vsel %vm253, %v4456, %v4458
    %v4460 = vrot.slane %v4427, 6
    %v4461 = vsel %vm253, %v4458, %v4460
    %v4462 = vrot.slane %v4430, 6
    %v4463 = vrot.slane %v4433, 6
    %v4464 = vsel %vm253, %v4462, %v4463
    %v4465 = vrot.slane %v4436, 6
    %v4466 = vsel %vm253, %v4463, %v4465
    %v4467 = vrot.slane %v4439, 6
    %v4468 = vsel %vm253, %v4465, %v4467
    %v4469 = vrot.slane %v4442, 6
    %v4470 = vsel %vm253, %v4467, %v4469
    %v4479 = vadd.f32 %v4385, %v4455
    %v4480 = vadd.f32 %v4386, %v4457
    %v4481 = vadd.f32 %v4387, %v4459
    %v4482 = vadd.f32 %v4388, %v4461
    %v4483 = vadd.f32 %v4389, %v4464
    %v4484 = vadd.f32 %v4390, %v4466
    %v4485 = vadd.f32 %v4391, %v4468
    %v4486 = vadd.f32 %v4392, %v4470
    %v4487 = vtanh.pop %v4479
    %v4488 = vtanh.pop %v4480
    %v4489 = vtanh.pop %v4481
    %v4490 = vtanh.pop %v4482
    %v4491 = vtanh.pop %v4483
    %v4492 = vtanh.pop %v4484
    %v4493 = vtanh.pop %v4485
    %v4494 = vtanh.pop %v4486
    %v4497 = vrot.slane %v4491, 7
    %vm4498 = vcmask 1041409
    %v4499 = vsel %vm4498, %v4497, %v4487
    %4507 = vset.pattern.permute.xlu0 0
    %4508 = vperm.xlu0 %4507, %v4487
    %v4509 = vpop.permute.xlu0 %4508
    %4510 = vset.pattern.permute.xlu0 0
    %4511 = vperm.xlu0 %4510, %v4488
    %v4512 = vpop.permute.xlu0 %4511
    %4513 = vset.pattern.permute.xlu0 0
    %4514 = vperm.xlu0 %4513, %v4489
    %v4515 = vpop.permute.xlu0 %4514
    %4516 = vset.pattern.permute.xlu0 0
    %4517 = vperm.xlu0 %4516, %v4490
    %v4518 = vpop.permute.xlu0 %4517
    %4519 = vset.pattern.permute.xlu0 0
    %4520 = vperm.xlu0 %4519, %v4491
    %v4521 = vpop.permute.xlu0 %4520
    %4522 = vset.pattern.permute.xlu0 0
    %4523 = vperm.xlu0 %4522, %v4492
    %v4524 = vpop.permute.xlu0 %4523
    %4525 = vset.pattern.permute.xlu0 0
    %4526 = vperm.xlu0 %4525, %v4493
    %v4527 = vpop.permute.xlu0 %4526
    %4528 = vset.pattern.permute.xlu0 0
    %4529 = vperm.xlu0 %4528, %v4494
    %v4530 = vpop.permute.xlu0 %4529
    %v4531 = vlaneseq
    %v4532 = vand.u32 %v4531, 127
    %v4533 = vadd.s32 %v4532, 4294967295
    %v4534 = vlaneseq
    %v4535 = vshrl.u32 %v4534, 7
    %v4536 = vsub.s32 %v4533, %v4535
    %v4537 = vrot.slane %v4509, %v4536
    %v4538 = vadd.s32 %v4532, 4294967287
    %v4539 = vlaneseq
    %v4540 = vshrl.u32 %v4539, 7
    %v4541 = vsub.s32 %v4538, %v4540
    %v4542 = vrot.slane %v4512, %v4541
    %vm4543 = vcmask 138312
    %v4544 = vsel %vm4543, %v4542, %v4537
    %v4545 = vadd.s32 %v4532, 4294967279
    %v4546 = vlaneseq
    %v4547 = vshrl.u32 %v4546, 7
    %v4548 = vsub.s32 %v4545, %v4547
    %v4549 = vrot.slane %v4515, %v4548
    %vm4550 = vcmask 203912
    %v4551 = vsel %vm4550, %v4549, %v4544
    %v4552 = vadd.s32 %v4532, 4294967271
    %v4553 = vlaneseq
    %v4554 = vshrl.u32 %v4553, 7
    %v4555 = vsub.s32 %v4552, %v4554
    %v4556 = vrot.slane %v4518, %v4555
    %vm4557 = vcmask 269512
    %v4558 = vsel %vm4557, %v4556, %v4551
    %v4559 = vlaneseq
    %v4560 = vshrl.u32 %v4559, 7
    %v4561 = vsub.s32 %v4533, %v4560
    %v4562 = vrot.slane %v4521, %v4561
    %v4563 = vlaneseq
    %v4564 = vshrl.u32 %v4563, 7
    %v4565 = vsub.s32 %v4538, %v4564
    %v4566 = vrot.slane %v4524, %v4565
    %v4567 = vsel %vm4543, %v4566, %v4562
    %v4568 = vlaneseq
    %v4569 = vshrl.u32 %v4568, 7
    %v4570 = vsub.s32 %v4545, %v4569
    %v4571 = vrot.slane %v4527, %v4570
    %v4572 = vsel %vm4550, %v4571, %v4567
    %v4573 = vlaneseq
    %v4574 = vshrl.u32 %v4573, 7
    %v4575 = vsub.s32 %v4552, %v4574
    %v4576 = vrot.slane %v4530, %v4575
    %v4577 = vsel %vm4557, %v4576, %v4572
    %v4578 = vsel %vm4498, %v4577, %v4558
    %vm4580 = vcmask 7168
    %v4581 = vsel %vm4580, %v4499, %v4578
    %v4582 = vadd.s32 %v4532, 1
    %v4583 = vlaneseq
    %v4584 = vshrl.u32 %v4583, 7
    %v4585 = vsub.s32 %v4582, %v4584
    %v4586 = vrot.slane %v4509, %v4585
    %v4587 = vadd.s32 %v4532, 4294967289
    %v4588 = vlaneseq
    %v4589 = vshrl.u32 %v4588, 7
    %v4590 = vsub.s32 %v4587, %v4589
    %v4591 = vrot.slane %v4512, %v4590
    %vm4592 = vcmask 121912
    %v4593 = vsel %vm4592, %v4591, %v4586
    %v4594 = vadd.s32 %v4532, 4294967281
    %v4595 = vlaneseq
    %v4596 = vshrl.u32 %v4595, 7
    %v4597 = vsub.s32 %v4594, %v4596
    %v4598 = vrot.slane %v4515, %v4597
    %vm4599 = vcmask 187512
    %v4600 = vsel %vm4599, %v4598, %v4593
    %v4601 = vadd.s32 %v4532, 4294967273
    %v4602 = vlaneseq
    %v4603 = vshrl.u32 %v4602, 7
    %v4604 = vsub.s32 %v4601, %v4603
    %v4605 = vrot.slane %v4518, %v4604
    %vm4606 = vcmask 253112
    %v4607 = vsel %vm4606, %v4605, %v4600
    %v4608 = vlaneseq
    %v4609 = vshrl.u32 %v4608, 7
    %v4610 = vsub.s32 %v4582, %v4609
    %v4611 = vrot.slane %v4521, %v4610
    %v4612 = vlaneseq
    %v4613 = vshrl.u32 %v4612, 7
    %v4614 = vsub.s32 %v4587, %v4613
    %v4615 = vrot.slane %v4524, %v4614
    %v4616 = vsel %vm4592, %v4615, %v4611
    %v4617 = vlaneseq
    %v4618 = vshrl.u32 %v4617, 7
    %v4619 = vsub.s32 %v4594, %v4618
    %v4620 = vrot.slane %v4527, %v4619
    %v4621 = vsel %vm4599, %v4620, %v4616
    %v4622 = vlaneseq
    %v4623 = vshrl.u32 %v4622, 7
    %v4624 = vsub.s32 %v4601, %v4623
    %v4625 = vrot.slane %v4530, %v4624
    %v4626 = vsel %vm4606, %v4625, %v4621
    %v4627 = vsel %vm3456, %v4626, %v4607
    %v4629 = vrot.slane %v4490, 6
    %v4630 = vrot.slane %v4494, 5
    %v4631 = vsel %vm3456, %v4630, %v4629
    %4632 = vrot.lane.b32.xlu0 %v4631, 31
    %v4633 = vpop.permute.xlu0 %4632
    %vm4635 = vcmask 252928
    %v4636 = vsel %vm4635, %v4627, %v4633
    %v4637 = vmul.f32 %v4581, 0.25
    %v4638 = vmul.f32 %v4487, 0.75
    %v4639 = vmul.f32 %v4488, 0.75
    %v4640 = vmul.f32 %v4489, 0.75
    %v4641 = vmul.f32 %v4490, 0.75
    %v4642 = vmul.f32 %v4491, 0.75
    %v4643 = vmul.f32 %v4492, 0.75
    %v4644 = vmul.f32 %v4493, 0.75
    %v4645 = vmul.f32 %v4494, 0.75
    %4654 = vset.pattern.permute.xlu0 0
    %4655 = vperm.xlu0 %4654, %v4638
    %v4656 = vpop.permute.xlu0 %4655
    %4657 = vset.pattern.permute.xlu0 0
    %4658 = vperm.xlu0 %4657, %v4639
    %v4659 = vpop.permute.xlu0 %4658
    %4660 = vset.pattern.permute.xlu0 0
    %4661 = vperm.xlu0 %4660, %v4640
    %v4662 = vpop.permute.xlu0 %4661
    %4663 = vset.pattern.permute.xlu0 0
    %4664 = vperm.xlu0 %4663, %v4641
    %v4665 = vpop.permute.xlu0 %4664
    %4666 = vset.pattern.permute.xlu0 0
    %4667 = vperm.xlu0 %4666, %v4642
    %v4668 = vpop.permute.xlu0 %4667
    %4669 = vset.pattern.permute.xlu0 0
    %4670 = vperm.xlu0 %4669, %v4643
    %v4671 = vpop.permute.xlu0 %4670
    %4672 = vset.pattern.permute.xlu0 0
    %4673 = vperm.xlu0 %4672, %v4644
    %v4674 = vpop.permute.xlu0 %4673
    %4675 = vset.pattern.permute.xlu0 0
    %4676 = vperm.xlu0 %4675, %v4645
    %v4677 = vpop.permute.xlu0 %4676
    %v4678 = vlaneseq
    %v4679 = vshrl.u32 %v4678, 7
    %v4680 = vsub.s32 %v4532, %v4679
    %v4681 = vrot.slane %v4656, %v4680
    %v4682 = vadd.s32 %v4532, 4294967288
    %v4683 = vlaneseq
    %v4684 = vshrl.u32 %v4683, 7
    %v4685 = vsub.s32 %v4682, %v4684
    %v4686 = vrot.slane %v4659, %v4685
    %vm4687 = vcmask 130112
    %v4688 = vsel %vm4687, %v4686, %v4681
    %v4689 = vadd.s32 %v4532, 4294967280
    %v4690 = vlaneseq
    %v4691 = vshrl.u32 %v4690, 7
    %v4692 = vsub.s32 %v4689, %v4691
    %v4693 = vrot.slane %v4662, %v4692
    %vm4694 = vcmask 195712
    %v4695 = vsel %vm4694, %v4693, %v4688
    %v4696 = vadd.s32 %v4532, 4294967272
    %v4697 = vlaneseq
    %v4698 = vshrl.u32 %v4697, 7
    %v4699 = vsub.s32 %v4696, %v4698
    %v4700 = vrot.slane %v4665, %v4699
    %vm4701 = vcmask 261312
    %v4702 = vsel %vm4701, %v4700, %v4695
    %v4703 = vlaneseq
    %v4704 = vshrl.u32 %v4703, 7
    %v4705 = vsub.s32 %v4532, %v4704
    %v4706 = vrot.slane %v4668, %v4705
    %v4707 = vlaneseq
    %v4708 = vshrl.u32 %v4707, 7
    %v4709 = vsub.s32 %v4682, %v4708
    %v4710 = vrot.slane %v4671, %v4709
    %v4711 = vsel %vm4687, %v4710, %v4706
    %v4712 = vlaneseq
    %v4713 = vshrl.u32 %v4712, 7
    %v4714 = vsub.s32 %v4689, %v4713
    %v4715 = vrot.slane %v4674, %v4714
    %v4716 = vsel %vm4694, %v4715, %v4711
    %v4717 = vlaneseq
    %v4718 = vshrl.u32 %v4717, 7
    %v4719 = vsub.s32 %v4696, %v4718
    %v4720 = vrot.slane %v4677, %v4719
    %v4721 = vsel %vm4701, %v4720, %v4716
    %v4722 = vsel %vm4498, %v4721, %v4702
    %v4724 = vadd.f32 %v4637, %v4722
    %v4727 = vunpack.c.l.s4 1966171168
    %v4728 = vunpack.c.0.s8 %v4727
    %v4729 = vlaneseq
    %v4730 = vshrl.u32 %v4729, 7
    %v4731 = vsub.s32 %v4728, %v4730
    %v4732 = vrot.slane %v4724, %v4731
    %v4733 = vcombine.high %v4732, %v4732
    %v4735 = vunpack.c.l.s4 1966171168
    %v4736 = vunpack.c.0.s8 %v4735
    %v4737 = vlaneseq
    %v4738 = vshrl.u32 %v4737, 7
    %v4739 = vsub.s32 %v4736, %v4738
    %v4740 = vrot.slane %v4732, %v4739
    %v4742 = vunpack.c.l.s4 1966171168
    %v4743 = vunpack.c.0.s8 %v4742
    %v4744 = vlaneseq
    %v4745 = vshrl.u32 %v4744, 7
    %v4746 = vsub.s32 %v4743, %v4745
    %v4747 = vrot.slane %v4733, %v4746
    %vm4750 = vcmask 253952
    %4751 = vst.msk [vmem:[#allocation14] sm:$0x1] %vm4750, %v4740
    %4752 = vst.msk [vmem:[#allocation14 + $0x2] sm:$0x1] %vm4750, %v4747
    %v4753 = vmul.f32 %v4636, 0.25
    %v4755 = vlaneseq
    %v4756 = vshrl.u32 %v4755, 7
    %v4757 = vsub.s32 1, %v4756
    %v4758 = vrot.slane %v4753, %v4757
    %4760 = vbcast.lane.b32.xlu0 %v4758, 256
    %v4761 = vpop.permute.xlu0 %4760
    %s4763 = sor.u32 256, 8
    %4764 = vbcast.lane.b32.xlu0 %v4758, %s4763
    %v4765 = vpop.permute.xlu0 %4764
    %s4767 = sor.u32 256, 16
    %4768 = vbcast.lane.b32.xlu0 %v4758, %s4767
    %v4769 = vpop.permute.xlu0 %4768
    %s4771 = sor.u32 256, 24
    %4772 = vbcast.lane.b32.xlu0 %v4758, %s4771
    %v4773 = vpop.permute.xlu0 %4772
    %v4774 = vlaneseq
    %v4775 = vshrl.u32 %v4774, 7
    %v4776 = vsub.s32 2, %v4775
    %v4777 = vrot.slane %v4753, %v4776
    %4779 = vbcast.lane.b32.xlu0 %v4777, 256
    %v4780 = vpop.permute.xlu0 %4779
    %s4782 = sor.u32 256, 8
    %4783 = vbcast.lane.b32.xlu0 %v4777, %s4782
    %v4784 = vpop.permute.xlu0 %4783
    %s4786 = sor.u32 256, 16
    %4787 = vbcast.lane.b32.xlu0 %v4777, %s4786
    %v4788 = vpop.permute.xlu0 %4787
    %s4790 = sor.u32 256, 24
    %4791 = vbcast.lane.b32.xlu0 %v4777, %s4790
    %v4792 = vpop.permute.xlu0 %4791
    %v4801 = vadd.f32 %v4638, %v4761
    %v4802 = vadd.f32 %v4639, %v4765
    %v4803 = vadd.f32 %v4640, %v4769
    %v4804 = vadd.f32 %v4641, %v4773
    %v4805 = vadd.f32 %v4642, %v4780
    %v4806 = vadd.f32 %v4643, %v4784
    %v4807 = vadd.f32 %v4644, %v4788
    %v4808 = vadd.f32 %v4645, %v4792
    %4817 = vset.pattern.permute.xlu0 0
    %4818 = vperm.xlu0 %4817, %v4801
    %v4819 = vpop.permute.xlu0 %4818
    %4820 = vset.pattern.permute.xlu0 0
    %4821 = vperm.xlu0 %4820, %v4802
    %v4822 = vpop.permute.xlu0 %4821
    %4823 = vset.pattern.permute.xlu0 0
    %4824 = vperm.xlu0 %4823, %v4803
    %v4825 = vpop.permute.xlu0 %4824
    %4826 = vset.pattern.permute.xlu0 0
    %4827 = vperm.xlu0 %4826, %v4804
    %v4828 = vpop.permute.xlu0 %4827
    %4829 = vset.pattern.permute.xlu0 0
    %4830 = vperm.xlu0 %4829, %v4805
    %v4831 = vpop.permute.xlu0 %4830
    %4832 = vset.pattern.permute.xlu0 0
    %4833 = vperm.xlu0 %4832, %v4806
    %v4834 = vpop.permute.xlu0 %4833
    %4835 = vset.pattern.permute.xlu0 0
    %4836 = vperm.xlu0 %4835, %v4807
    %v4837 = vpop.permute.xlu0 %4836
    %4838 = vset.pattern.permute.xlu0 0
    %4839 = vperm.xlu0 %4838, %v4808
    %v4840 = vpop.permute.xlu0 %4839
    %v4841 = vlaneseq
    %v4842 = vshrl.u32 %v4841, 7
    %v4843 = vsub.s32 %v4532, %v4842
    %v4844 = vrot.slane %v4819, %v4843
    %v4845 = vlaneseq
    %v4846 = vshrl.u32 %v4845, 7
    %v4847 = vsub.s32 %v4682, %v4846
    %v4848 = vrot.slane %v4822, %v4847
    %v4849 = vsel %vm4687, %v4848, %v4844
    %v4850 = vlaneseq
    %v4851 = vshrl.u32 %v4850, 7
    %v4852 = vsub.s32 %v4689, %v4851
    %v4853 = vrot.slane %v4825, %v4852
    %v4854 = vsel %vm4694, %v4853, %v4849
    %v4855 = vlaneseq
    %v4856 = vshrl.u32 %v4855, 7
    %v4857 = vsub.s32 %v4696, %v4856
    %v4858 = vrot.slane %v4828, %v4857
    %v4859 = vsel %vm4701, %v4858, %v4854
    %v4860 = vlaneseq
    %v4861 = vshrl.u32 %v4860, 7
    %v4862 = vsub.s32 %v4532, %v4861
    %v4863 = vrot.slane %v4831, %v4862
    %v4864 = vlaneseq
    %v4865 = vshrl.u32 %v4864, 7
    %v4866 = vsub.s32 %v4682, %v4865
    %v4867 = vrot.slane %v4834, %v4866
    %v4868 = vsel %vm4687, %v4867, %v4863
    %v4869 = vlaneseq
    %v4870 = vshrl.u32 %v4869, 7
    %v4871 = vsub.s32 %v4689, %v4870
    %v4872 = vrot.slane %v4837, %v4871
    %v4873 = vsel %vm4694, %v4872, %v4868
    %v4874 = vlaneseq
    %v4875 = vshrl.u32 %v4874, 7
    %v4876 = vsub.s32 %v4696, %v4875
    %v4877 = vrot.slane %v4840, %v4876
    %v4878 = vsel %vm4701, %v4877, %v4873
    %4881 = vst.msk [vmem:[#allocation14 + $0x1] sm:$0x1] %vm4750, %v4859
    %4882 = vst.msk [vmem:[#allocation14 + $0x3] sm:$0x1] %vm4750, %v4878
    // Predicated region
    $region82: #{tpu_custom_call.1} parent=1 // pred_check
      _
    $region83: #{tpu_custom_call.1} parent=1 // pred_check_branch
      %4884 = sbr.rel (0) target = $region85
    $region84: #{tpu_custom_call.1} parent=1 // pred_region
      %s4886 = ssub.s32 64, 64
      %4887 = vsyncadd [#allocation7], %s4886
      %s4888 = sshll.u32 [#allocation14], 4
      %s4889 = int_to_ptr.vmem [resolvable:$true] %s4888
      %4894 = dma.vmem_to_hbm [thread:$0]  %s4889, 64, %s15, [#allocation7], 32, 32, 2
    $region85: #{tpu_custom_call.1} parent=1 // pred_fallthru
      _
    // Predicated region
    $region86: #{tpu_custom_call.1} parent=1 // pred_check
      _
    $region87: #{tpu_custom_call.1} parent=1 // pred_check_branch
      %4896 = sbr.rel (0) target = $region89
    $region88: #{tpu_custom_call.1} parent=1 // pred_region
      %4897 = dma.done [#allocation7], 64
    $region89: #{tpu_custom_call.1} parent=1 // pred_fallthru
      _
    %4898 = vsyncpa [#allocation6], 1
    %4899 = vsyncpa [#allocation9], 1
    %4900 = vsyncpa [#allocation12], 1
    %4901 = vsyncpa [#allocation7], 1

</llo_original>
